<compile_context>
chip_gen: v6e
topology: v6e:2x2x1
jax: 0.10.0
libtpu: 0.0.40
codegen_flags: <defaults>
</compile_context>

<pallas_src>
import functools

import jax
import jax.numpy as jnp
from jax.experimental import pallas as pl
from jax.experimental.pallas import tpu as pltpu

WINDOW_SIZE = 512
# Original 6 linear layers (encoder 512->256->64->16, decoder 16->64->256->512).
DIMS = [WINDOW_SIZE, 256, 64, 16, 64, 256, WINDOW_SIZE]
# ReLU after layers 0,1 (encoder) and 3,4 (decoder); none after 2 and 5.
RELU_AFTER = (True, True, False, True, True, False)
# After folding layers 2 and 3 (no activation between them) into one 64x64 layer:
FUSED_RELU_AFTER = (True, True, True, True, False)


def autoencoder_kernel(x_ref,
                       w1, b1, w2, b2, w3, b3, w4, b4, w5, b5,
                       o_ref):
    """Whole fused forward pass on one batch tile; all weights resident in VMEM.

    bf16 input tile, bf16 weights, bf16 inter-layer activations; every matmul
    accumulates in f32 on the MXU, biases added in f32; bf16 output tile.
    """
    h = x_ref[...].astype(jnp.bfloat16)      # no-op when the caller streams bf16
    ws = (w1, w2, w3, w4, w5)
    bs = (b1, b2, b3, b4, b5)
    for i in range(5):
        acc = jnp.dot(h, ws[i][...], preferred_element_type=jnp.float32) + bs[i][...]
        if FUSED_RELU_AFTER[i]:
            acc = jnp.maximum(acc, 0.0)
        h = acc.astype(jnp.bfloat16) if i < 4 else acc
    o_ref[...] = h.astype(o_ref.dtype)


@functools.partial(jax.jit, static_argnames=("block_b",))
def autoencoder_forward(x, fused_params, block_b=512):
    """x: [B, 512] (bf16 recommended at this boundary to halve HBM traffic).

    fused_params: 5 x (w_bf16:[in,out], b_f32:[1,out]).  Output is bf16 (callers see
    ~1% relative error vs. an f32 reference -- same as the internal bf16 precision).
    """
    B, D = x.shape
    assert D == WINDOW_SIZE

    grid = (pl.cdiv(B, block_b),)   # partial last block allowed; padding rows are discarded

    in_specs = [pl.BlockSpec((block_b, WINDOW_SIZE), lambda i: (i, 0))]
    flat_params = []
    for (w, b) in fused_params:
        # Constant index_map -> weight/bias blocks stay resident; no per-step re-DMA.
        in_specs.append(pl.BlockSpec(w.shape, lambda i: (0, 0)))
        in_specs.append(pl.BlockSpec(b.shape, lambda i: (0, 0)))
        flat_params.extend([w, b])

    out_spec = pl.BlockSpec((block_b, WINDOW_SIZE), lambda i: (i, 0))

    return pl.pallas_call(
        autoencoder_kernel,
        out_shape=jax.ShapeDtypeStruct((B, WINDOW_SIZE), jnp.bfloat16),
        grid=grid,
        in_specs=in_specs,
        out_specs=out_spec,
        compiler_params=pltpu.CompilerParams(
            dimension_semantics=("parallel",),
            # Covers double-buffered 512-2048-row bf16 tiles + f32 temporaries on the
            # v5e 16 MiB scoped default; matches the v6e/v7x default.
            vmem_limit_bytes=32 * 1024 * 1024),
    )(x, *flat_params)


def pick_block_b(B, target=512):
    """Large fixed tile (multiple of 8 rows); remainder handled by the cdiv grid.

    Aims for >=2 grid steps so both v7x TensorCores get work and single-TC parts can
    prefetch the next tile; never falls back to tiny (<=8-row) tiles for awkward B.
    """
    if B >= 2 * target:
        return target
    half = (((B + 1) // 2) + 7) // 8 * 8      # ~B/2, rounded up to sublane granularity
    if 8 <= half < B:
        return half
    return B                                   # tiny batch: single full-array block


def init_params(key):
    """Deterministic PyTorch-style init: U(-1/sqrt(fan_in), 1/sqrt(fan_in)), f32."""
    params = []
    for i in range(6):
        fan_in, fan_out = DIMS[i], DIMS[i + 1]
        key, kw, kb = jax.random.split(key, 3)
        bound = 1.0 / jnp.sqrt(fan_in)
        w = jax.random.uniform(kw, (fan_in, fan_out), jnp.float32, -bound, bound)
        b = jax.random.uniform(kb, (1, fan_out), jnp.float32, -bound, bound)
        params.append((w, b))
    return params


def fuse_and_cast(params):
    """Fold the activation-free 64->16->64 pair into one 64x64 layer; weights -> bf16."""
    (w0, b0), (w1, b1), (w2, b2), (w3, b3), (w4, b4), (w5, b5) = params
    w23 = w2 @ w3                       # [64, 64]
    b23 = b2 @ w3 + b3                  # [1, 64]
    fused = [(w0, b0), (w1, b1), (w23, b23), (w4, b4), (w5, b5)]
    return [(w.astype(jnp.bfloat16), b.astype(jnp.float32)) for (w, b) in fused]


def reference_forward(x, params):
    """Unfused f32 reference (mirrors the PyTorch module exactly)."""
    h = x
    for i, (w, b) in enumerate(params):
        h = h @ w + b
        if RELU_AFTER[i]:
            h = jnp.maximum(h, 0.0)
    return h


if __name__ == "__main__":
    key = jax.random.PRNGKey(0)
    key, kx = jax.random.split(key)

    B = 1024  # -> 2 even grid steps at block_b=512: both v7x TCs busy, pipeline active
    x_f32 = jax.random.normal(kx, (B, WINDOW_SIZE), dtype=jnp.float32)

    params_f32 = init_params(key)
    fused_params = fuse_and_cast(params_f32)

    # bf16 at the kernel boundary: halves HBM streaming for this bandwidth-bound kernel.
    x_bf16 = x_f32.astype(jnp.bfloat16)

    block_b = pick_block_b(B)
    out = autoencoder_forward(x_bf16, fused_params, block_b=block_b)
    out = jax.block_until_ready(out)

    ref = reference_forward(x_f32, params_f32)
    assert out.shape == (B, WINDOW_SIZE), out.shape
    assert out.dtype == jnp.bfloat16, out.dtype
    # bf16 weights/activations/I-O with f32 accumulation vs. f32 reference: ~1% error.
    out_f32 = out.astype(jnp.float32)
    max_err = float(jnp.max(jnp.abs(out_f32 - ref)))
    assert jnp.allclose(out_f32, ref, atol=3e-2, rtol=3e-2), max_err

    print("KERNEL_OK")
</pallas_src>

<mosaic_0001>
module attributes {stable_mosaic.version = 11 : i64} {
  func.func @autoencoder_kernel(%arg0: i32, %arg1: memref<512x512xbf16, #tpu.memory_space<vmem>>, %arg2: memref<512x256xbf16, #tpu.memory_space<vmem>>, %arg3: memref<1x256xf32, #tpu.memory_space<vmem>>, %arg4: memref<256x64xbf16, #tpu.memory_space<vmem>>, %arg5: memref<1x64xf32, #tpu.memory_space<vmem>>, %arg6: memref<64x64xbf16, #tpu.memory_space<vmem>>, %arg7: memref<1x64xf32, #tpu.memory_space<vmem>>, %arg8: memref<64x256xbf16, #tpu.memory_space<vmem>>, %arg9: memref<1x256xf32, #tpu.memory_space<vmem>>, %arg10: memref<256x512xbf16, #tpu.memory_space<vmem>>, %arg11: memref<1x512xf32, #tpu.memory_space<vmem>>, %arg12: memref<512x512xbf16, #tpu.memory_space<vmem>>) attributes {dimension_semantics = [#tpu.dimension_semantics<parallel>], iteration_bounds = array<i64: 2>, scalar_prefetch = 0 : i64, scratch_operands = 0 : i64, tpu.core_type = #tpu.core_type<tc>, window_params = [{transform_indices = @transform_0, window_bounds = array<i64: 512, 512>}, {pipeline_mode = #tpu.pipeline_mode<synchronous>, transform_indices = @transform_1, window_bounds = array<i64: 512, 256>}, {pipeline_mode = #tpu.pipeline_mode<synchronous>, transform_indices = @transform_2, window_bounds = array<i64: 1, 256>}, {pipeline_mode = #tpu.pipeline_mode<synchronous>, transform_indices = @transform_3, window_bounds = array<i64: 256, 64>}, {pipeline_mode = #tpu.pipeline_mode<synchronous>, transform_indices = @transform_4, window_bounds = array<i64: 1, 64>}, {pipeline_mode = #tpu.pipeline_mode<synchronous>, transform_indices = @transform_5, window_bounds = array<i64: 64, 64>}, {pipeline_mode = #tpu.pipeline_mode<synchronous>, transform_indices = @transform_6, window_bounds = array<i64: 1, 64>}, {pipeline_mode = #tpu.pipeline_mode<synchronous>, transform_indices = @transform_7, window_bounds = array<i64: 64, 256>}, {pipeline_mode = #tpu.pipeline_mode<synchronous>, transform_indices = @transform_8, window_bounds = array<i64: 1, 256>}, {pipeline_mode = #tpu.pipeline_mode<synchronous>, transform_indices = @transform_9, window_bounds = array<i64: 256, 512>}, {pipeline_mode = #tpu.pipeline_mode<synchronous>, transform_indices = @transform_10, window_bounds = array<i64: 1, 512>}, {transform_indices = @transform_11, window_bounds = array<i64: 512, 512>}]} {
    %c0 = arith.constant 0 : index
    %c0_0 = arith.constant 0 : index
    %0 = vector.load %arg1[%c0, %c0_0] : memref<512x512xbf16, #tpu.memory_space<vmem>>, vector<512x512xbf16>
    %c0_1 = arith.constant 0 : index
    %c0_2 = arith.constant 0 : index
    %1 = vector.load %arg2[%c0_1, %c0_2] : memref<512x256xbf16, #tpu.memory_space<vmem>>, vector<512x256xbf16>
    %cst = arith.constant dense<0.000000e+00> : vector<512x256xf32>
    %2 = tpu.matmul %0, %1, %cst {dimension_numbers = #tpu.dot_dimension_numbers<[1], [0], [0], [1], [0, 0, 1, 1], [], []>} : vector<512x512xbf16>, vector<512x256xbf16>, vector<512x256xf32> -> vector<512x256xf32>
    %c0_3 = arith.constant 0 : index
    %c0_4 = arith.constant 0 : index
    %3 = vector.load %arg3[%c0_3, %c0_4] : memref<1x256xf32, #tpu.memory_space<vmem>>, vector<1x256xf32>
    %4 = vector.broadcast %3 : vector<1x256xf32> to vector<512x256xf32>
    %5 = arith.addf %2, %4 : vector<512x256xf32>
    %cst_5 = arith.constant 0.000000e+00 : f32
    %6 = vector.broadcast %cst_5 : f32 to vector<512x256xf32>
    %7 = arith.maximumf %5, %6 : vector<512x256xf32>
    %8 = arith.truncf %7 : vector<512x256xf32> to vector<512x256xbf16>
    %c0_6 = arith.constant 0 : index
    %c0_7 = arith.constant 0 : index
    %9 = vector.load %arg4[%c0_6, %c0_7] : memref<256x64xbf16, #tpu.memory_space<vmem>>, vector<256x64xbf16>
    %cst_8 = arith.constant dense<0.000000e+00> : vector<512x64xf32>
    %10 = tpu.matmul %8, %9, %cst_8 {dimension_numbers = #tpu.dot_dimension_numbers<[1], [0], [0], [1], [0, 0, 1, 1], [], []>} : vector<512x256xbf16>, vector<256x64xbf16>, vector<512x64xf32> -> vector<512x64xf32>
    %c0_9 = arith.constant 0 : index
    %c0_10 = arith.constant 0 : index
    %11 = vector.load %arg5[%c0_9, %c0_10] : memref<1x64xf32, #tpu.memory_space<vmem>>, vector<1x64xf32>
    %12 = vector.broadcast %11 : vector<1x64xf32> to vector<512x64xf32>
    %13 = arith.addf %10, %12 : vector<512x64xf32>
    %cst_11 = arith.constant 0.000000e+00 : f32
    %14 = vector.broadcast %cst_11 : f32 to vector<512x64xf32>
    %15 = arith.maximumf %13, %14 : vector<512x64xf32>
    %16 = arith.truncf %15 : vector<512x64xf32> to vector<512x64xbf16>
    %c0_12 = arith.constant 0 : index
    %c0_13 = arith.constant 0 : index
    %17 = vector.load %arg6[%c0_12, %c0_13] : memref<64x64xbf16, #tpu.memory_space<vmem>>, vector<64x64xbf16>
    %cst_14 = arith.constant dense<0.000000e+00> : vector<512x64xf32>
    %18 = tpu.matmul %16, %17, %cst_14 {dimension_numbers = #tpu.dot_dimension_numbers<[1], [0], [0], [1], [0, 0, 1, 1], [], []>} : vector<512x64xbf16>, vector<64x64xbf16>, vector<512x64xf32> -> vector<512x64xf32>
    %c0_15 = arith.constant 0 : index
    %c0_16 = arith.constant 0 : index
    %19 = vector.load %arg7[%c0_15, %c0_16] : memref<1x64xf32, #tpu.memory_space<vmem>>, vector<1x64xf32>
    %20 = vector.broadcast %19 : vector<1x64xf32> to vector<512x64xf32>
    %21 = arith.addf %18, %20 : vector<512x64xf32>
    %cst_17 = arith.constant 0.000000e+00 : f32
    %22 = vector.broadcast %cst_17 : f32 to vector<512x64xf32>
    %23 = arith.maximumf %21, %22 : vector<512x64xf32>
    %24 = arith.truncf %23 : vector<512x64xf32> to vector<512x64xbf16>
    %c0_18 = arith.constant 0 : index
    %c0_19 = arith.constant 0 : index
    %25 = vector.load %arg8[%c0_18, %c0_19] : memref<64x256xbf16, #tpu.memory_space<vmem>>, vector<64x256xbf16>
    %cst_20 = arith.constant dense<0.000000e+00> : vector<512x256xf32>
    %26 = tpu.matmul %24, %25, %cst_20 {dimension_numbers = #tpu.dot_dimension_numbers<[1], [0], [0], [1], [0, 0, 1, 1], [], []>} : vector<512x64xbf16>, vector<64x256xbf16>, vector<512x256xf32> -> vector<512x256xf32>
    %c0_21 = arith.constant 0 : index
    %c0_22 = arith.constant 0 : index
    %27 = vector.load %arg9[%c0_21, %c0_22] : memref<1x256xf32, #tpu.memory_space<vmem>>, vector<1x256xf32>
    %28 = vector.broadcast %27 : vector<1x256xf32> to vector<512x256xf32>
    %29 = arith.addf %26, %28 : vector<512x256xf32>
    %cst_23 = arith.constant 0.000000e+00 : f32
    %30 = vector.broadcast %cst_23 : f32 to vector<512x256xf32>
    %31 = arith.maximumf %29, %30 : vector<512x256xf32>
    %32 = arith.truncf %31 : vector<512x256xf32> to vector<512x256xbf16>
    %c0_24 = arith.constant 0 : index
    %c0_25 = arith.constant 0 : index
    %33 = vector.load %arg10[%c0_24, %c0_25] : memref<256x512xbf16, #tpu.memory_space<vmem>>, vector<256x512xbf16>
    %cst_26 = arith.constant dense<0.000000e+00> : vector<512x512xf32>
    %34 = tpu.matmul %32, %33, %cst_26 {dimension_numbers = #tpu.dot_dimension_numbers<[1], [0], [0], [1], [0, 0, 1, 1], [], []>} : vector<512x256xbf16>, vector<256x512xbf16>, vector<512x512xf32> -> vector<512x512xf32>
    %c0_27 = arith.constant 0 : index
    %c0_28 = arith.constant 0 : index
    %35 = vector.load %arg11[%c0_27, %c0_28] : memref<1x512xf32, #tpu.memory_space<vmem>>, vector<1x512xf32>
    %36 = vector.broadcast %35 : vector<1x512xf32> to vector<512x512xf32>
    %37 = arith.addf %34, %36 : vector<512x512xf32>
    %38 = arith.truncf %37 : vector<512x512xf32> to vector<512x512xbf16>
    %c0_29 = arith.constant 0 : index
    %c0_30 = arith.constant 0 : index
    %39 = vector.load %arg12[%c0_29, %c0_30] : memref<512x512xbf16, #tpu.memory_space<vmem>>, vector<512x512xbf16>
    tpu.vector_store %arg12[%c0_29, %c0_30], %38 {strides = array<i32>} : memref<512x512xbf16, #tpu.memory_space<vmem>>, vector<512x512xbf16>,
    return
  }
  func.func @transform_0(%arg0: i32) -> (i32, i32) {
    %c0_i32 = arith.constant 0 : i32
    %c0_i32_0 = arith.constant 0 : i32
    return %arg0, %c0_i32 : i32, i32
  }
  func.func @transform_1(%arg0: i32) -> (i32, i32) {
    %c0_i32 = arith.constant 0 : i32
    %c0_i32_0 = arith.constant 0 : i32
    %c0_i32_1 = arith.constant 0 : i32
    return %c0_i32, %c0_i32_0 : i32, i32
  }
  func.func @transform_2(%arg0: i32) -> (i32, i32) {
    %c0_i32 = arith.constant 0 : i32
    %c0_i32_0 = arith.constant 0 : i32
    %c0_i32_1 = arith.constant 0 : i32
    return %c0_i32, %c0_i32_0 : i32, i32
  }
  func.func @transform_3(%arg0: i32) -> (i32, i32) {
    %c0_i32 = arith.constant 0 : i32
    %c0_i32_0 = arith.constant 0 : i32
    %c0_i32_1 = arith.constant 0 : i32
    return %c0_i32, %c0_i32_0 : i32, i32
  }
  func.func @transform_4(%arg0: i32) -> (i32, i32) {
    %c0_i32 = arith.constant 0 : i32
    %c0_i32_0 = arith.constant 0 : i32
    %c0_i32_1 = arith.constant 0 : i32
    return %c0_i32, %c0_i32_0 : i32, i32
  }
  func.func @transform_5(%arg0: i32) -> (i32, i32) {
    %c0_i32 = arith.constant 0 : i32
    %c0_i32_0 = arith.constant 0 : i32
    %c0_i32_1 = arith.constant 0 : i32
    return %c0_i32, %c0_i32_0 : i32, i32
  }
  func.func @transform_6(%arg0: i32) -> (i32, i32) {
    %c0_i32 = arith.constant 0 : i32
    %c0_i32_0 = arith.constant 0 : i32
    %c0_i32_1 = arith.constant 0 : i32
    return %c0_i32, %c0_i32_0 : i32, i32
  }
  func.func @transform_7(%arg0: i32) -> (i32, i32) {
    %c0_i32 = arith.constant 0 : i32
    %c0_i32_0 = arith.constant 0 : i32
    %c0_i32_1 = arith.constant 0 : i32
    return %c0_i32, %c0_i32_0 : i32, i32
  }
  func.func @transform_8(%arg0: i32) -> (i32, i32) {
    %c0_i32 = arith.constant 0 : i32
    %c0_i32_0 = arith.constant 0 : i32
    %c0_i32_1 = arith.constant 0 : i32
    return %c0_i32, %c0_i32_0 : i32, i32
  }
  func.func @transform_9(%arg0: i32) -> (i32, i32) {
    %c0_i32 = arith.constant 0 : i32
    %c0_i32_0 = arith.constant 0 : i32
    %c0_i32_1 = arith.constant 0 : i32
    return %c0_i32, %c0_i32_0 : i32, i32
  }
  func.func @transform_10(%arg0: i32) -> (i32, i32) {
    %c0_i32 = arith.constant 0 : i32
    %c0_i32_0 = arith.constant 0 : i32
    %c0_i32_1 = arith.constant 0 : i32
    return %c0_i32, %c0_i32_0 : i32, i32
  }
  func.func @transform_11(%arg0: i32) -> (i32, i32) {
    %c0_i32 = arith.constant 0 : i32
    %c0_i32_0 = arith.constant 0 : i32
    return %arg0, %c0_i32 : i32, i32
  }
}

</mosaic_0001>

<llo_original>
// kernel: autoencoder_forward.1
$region0: #{autoencoder_forward.1}
  #allocation0 [shape = 'u32[]', space=smem, size = 0x4, offset = 0x4, fixed_abs, tag = 'smem constant byte address 0x4 - core index']
  #allocation1 [shape = 'u32[144,128]{1,0:T(1,128)}', space=vmem, size = 0x12000, scoped, tag = 'internal scratch']
  %s0 = inlined_call_operand.hbm [shape: bf16[1024,512], index: 0, kind: input, shape index: {}]
  %s1 = inlined_call_operand.hbm [shape: bf16[512,256], index: 1, kind: input, shape index: {}]
  %s2 = inlined_call_operand.vmem [shape: f32[1,256], index: 2, kind: input, shape index: {}]
  %s3 = inlined_call_operand.vmem [shape: bf16[256,64], index: 3, kind: input, shape index: {}]
  %s4 = inlined_call_operand.vmem [shape: f32[1,64], index: 4, kind: input, shape index: {}]
  %s5 = inlined_call_operand.vmem [shape: bf16[64,64], index: 5, kind: input, shape index: {}]
  %s6 = inlined_call_operand.vmem [shape: f32[1,64], index: 6, kind: input, shape index: {}]
  %s7 = inlined_call_operand.vmem [shape: bf16[64,256], index: 7, kind: input, shape index: {}]
  %s8 = inlined_call_operand.vmem [shape: f32[1,256], index: 8, kind: input, shape index: {}]
  %s9 = inlined_call_operand.hbm [shape: bf16[256,512], index: 9, kind: input, shape index: {}]
  %s10 = inlined_call_operand.vmem [shape: f32[1,512], index: 10, kind: input, shape index: {}]
  %s11 = inlined_call_operand.hbm [shape: bf16[1024,512], index: 11, kind: output, shape index: {}]
  %s12 = sld [smem:[#allocation0]]
  $region89: #{autoencoder_forward.1} parent=0
    _
  %s14 = ssub.s32 1, %s12
  %s15 = scalar_select 0, %s14, %s12
  $region1: #{autoencoder_forward.1} parent=0
    #allocation2 [shape = 'u8[1048576]{0}', space=vmem, size = 0x100000, scoped, tag = 'input window, operand 0']
    #allocation3 [shape = 's32[2]{0}', space=sflag, size = 0x8, scoped, tag = 'scoped memory for autoencoder_forward.1']
    #allocation4 [shape = 's32[2]{0}', space=sflag, size = 0x8, scoped, tag = 'scoped memory for autoencoder_forward.1']
    #allocation5 [shape = 'u8[262144]{0}', space=vmem, size = 0x40000, scoped, tag = 'input window, operand 1, single buffered']
    #allocation6 [shape = 's32[1]{0}', space=sflag, size = 0x4, scoped, tag = 'scoped memory for autoencoder_forward.1']
    #allocation7 [shape = 'u8[262144]{0}', space=vmem, size = 0x40000, scoped, tag = 'input window, operand 9, single buffered']
    #allocation8 [shape = 'u8[1048576]{0}', space=vmem, size = 0x100000, scoped, tag = 'output window, operand 0']
    %16 = vsyncpa [#allocation3], 0
    %s17 = scalar_lea.sflag [#allocation3], 1
    %18 = vsyncpa %s17, 0
    %19 = vsyncpa [#allocation6], 0
    %20 = vsyncpa [#allocation4], 0
    %s21 = scalar_lea.sflag [#allocation4], 1
    %22 = vsyncpa %s21, 0
    loop: start=0, step=1, limit=4
    $region2: #{autoencoder_forward.1} parent=1 // loop_pre_header
      _
    $region3: #{autoencoder_forward.1} parent=1 // loop_header
      %s24 = sphi 0, %s28
      %p25 = scmp.ge.s32.totalorder %s24, 4
      %s34 = sphi 0, %s36
      %s37 = sphi 0, %s34
      %s38 = sphi 0, %s37
      %s54 = sphi 0, %s38
      %s58 = sphi 0, %s58
      %s60 = sphi 0, %s58
      %s61 = sphi 0, %s60
      %s75 = sphi 0, %s61
      %s79 = sphi 0, %s79
      %s81 = sphi 0, %s79
      %s82 = sphi 0, %s81
      %s96 = sphi 0, %s82
      %s100 = sphi 0, %s100
      %s102 = sphi 0, %s100
      %s103 = sphi 0, %s102
      %s117 = sphi 0, %s103
      %s121 = sphi 0, %s121
      %s123 = sphi 0, %s121
      %s124 = sphi 0, %s123
      %s138 = sphi 0, %s124
      %s142 = sphi 0, %s142
      %s144 = sphi 0, %s142
      %s145 = sphi 0, %s144
      %s159 = sphi 0, %s145
      %s163 = sphi 0, %s163
      %s165 = sphi 0, %s163
      %s166 = sphi 0, %s165
      %s180 = sphi 0, %s166
      %s184 = sphi 0, %s184
      %s186 = sphi 0, %s184
      %s187 = sphi 0, %s186
      %s201 = sphi 0, %s187
      %s205 = sphi 0, %s205
      %s207 = sphi 0, %s205
      %s208 = sphi 0, %s207
      %s222 = sphi 0, %s208
      %s226 = sphi 0, %s226
      %s228 = sphi 0, %s226
      %s229 = sphi 0, %s228
      %s243 = sphi 0, %s229
      %s247 = sphi 0, %s247
      %s249 = sphi 0, %s247
      %s250 = sphi 0, %s249
      %s264 = sphi 0, %s250
      %s270 = sphi 0, %s272
      %s273 = sphi 0, %s270
      %s274 = sphi 0, %s273
      %s290 = sphi 0, %s274
    $region4: #{autoencoder_forward.1} parent=1 // loop_header_branch
      %27 = sbr.rel (%p25) target = $region8
    $region5: #{autoencoder_forward.1} parent=1 // loop_body
      %s29 = ssub.s32 %s24, 1
      %s30 = ssub.s32 %s24, 2
      %s31 = sadd.s32 %s24, 1
      %s32 = ssub.s32 %s24, %s31
      %p33 = scmp.eq.s32.totalorder %s32, 0
      %s35 = sadd.s32 %s34, 1
      %s36 = scalar_select %p33, %s34, %s35
      %p39 = pneg %p33
      %p40 = scmp.eq.s32.totalorder %s24, 1
      %p41 = por %p39, %p40
      %p42 = scmp.ne.s32.totalorder %s34, %s37
      %p43 = scmp.eq.s32.totalorder %s24, 0
      %p44 = por %p42, %p43
      %p45 = scmp.ne.s32.totalorder %s34, %s37
      %p46 = scmp.eq.s32.totalorder %s29, 1
      %p47 = por %p45, %p46
      %p48 = scmp.ne.s32.totalorder %s37, %s38
      %p49 = scmp.eq.s32.totalorder %s29, 0
      %p50 = por %p48, %p49
      %p51 = scmp.ne.s32.totalorder %s37, %s38
      %p52 = scmp.eq.s32.totalorder %s30, 1
      %p53 = por %p51, %p52
      %p55 = scmp.ne.s32.totalorder %s38, %s54
      %p56 = scmp.eq.s32.totalorder %s30, 0
      %p57 = por %p55, %p56
      %s59 = sadd.s32 %s58, 1
      %p62 = scmp.eq.s32.totalorder %s24, 1
      %p63 = scmp.ne.s32.totalorder %s58, %s60
      %p64 = scmp.eq.s32.totalorder %s24, 0
      %p65 = por %p63, %p64
      %p66 = scmp.ne.s32.totalorder %s58, %s60
      %p67 = scmp.eq.s32.totalorder %s29, 1
      %p68 = por %p66, %p67
      %p69 = scmp.ne.s32.totalorder %s60, %s61
      %p70 = scmp.eq.s32.totalorder %s29, 0
      %p71 = por %p69, %p70
      %p72 = scmp.ne.s32.totalorder %s60, %s61
      %p73 = scmp.eq.s32.totalorder %s30, 1
      %p74 = por %p72, %p73
      %p76 = scmp.ne.s32.totalorder %s61, %s75
      %p77 = scmp.eq.s32.totalorder %s30, 0
      %p78 = por %p76, %p77
      %s80 = sadd.s32 %s79, 1
      %p83 = scmp.eq.s32.totalorder %s24, 1
      %p84 = scmp.ne.s32.totalorder %s79, %s81
      %p85 = scmp.eq.s32.totalorder %s24, 0
      %p86 = por %p84, %p85
      %p87 = scmp.ne.s32.totalorder %s79, %s81
      %p88 = scmp.eq.s32.totalorder %s29, 1
      %p89 = por %p87, %p88
      %p90 = scmp.ne.s32.totalorder %s81, %s82
      %p91 = scmp.eq.s32.totalorder %s29, 0
      %p92 = por %p90, %p91
      %p93 = scmp.ne.s32.totalorder %s81, %s82
      %p94 = scmp.eq.s32.totalorder %s30, 1
      %p95 = por %p93, %p94
      %p97 = scmp.ne.s32.totalorder %s82, %s96
      %p98 = scmp.eq.s32.totalorder %s30, 0
      %p99 = por %p97, %p98
      %s101 = sadd.s32 %s100, 1
      %p104 = scmp.eq.s32.totalorder %s24, 1
      %p105 = scmp.ne.s32.totalorder %s100, %s102
      %p106 = scmp.eq.s32.totalorder %s24, 0
      %p107 = por %p105, %p106
      %p108 = scmp.ne.s32.totalorder %s100, %s102
      %p109 = scmp.eq.s32.totalorder %s29, 1
      %p110 = por %p108, %p109
      %p111 = scmp.ne.s32.totalorder %s102, %s103
      %p112 = scmp.eq.s32.totalorder %s29, 0
      %p113 = por %p111, %p112
      %p114 = scmp.ne.s32.totalorder %s102, %s103
      %p115 = scmp.eq.s32.totalorder %s30, 1
      %p116 = por %p114, %p115
      %p118 = scmp.ne.s32.totalorder %s103, %s117
      %p119 = scmp.eq.s32.totalorder %s30, 0
      %p120 = por %p118, %p119
      %s122 = sadd.s32 %s121, 1
      %p125 = scmp.eq.s32.totalorder %s24, 1
      %p126 = scmp.ne.s32.totalorder %s121, %s123
      %p127 = scmp.eq.s32.totalorder %s24, 0
      %p128 = por %p126, %p127
      %p129 = scmp.ne.s32.totalorder %s121, %s123
      %p130 = scmp.eq.s32.totalorder %s29, 1
      %p131 = por %p129, %p130
      %p132 = scmp.ne.s32.totalorder %s123, %s124
      %p133 = scmp.eq.s32.totalorder %s29, 0
      %p134 = por %p132, %p133
      %p135 = scmp.ne.s32.totalorder %s123, %s124
      %p136 = scmp.eq.s32.totalorder %s30, 1
      %p137 = por %p135, %p136
      %p139 = scmp.ne.s32.totalorder %s124, %s138
      %p140 = scmp.eq.s32.totalorder %s30, 0
      %p141 = por %p139, %p140
      %s143 = sadd.s32 %s142, 1
      %p146 = scmp.eq.s32.totalorder %s24, 1
      %p147 = scmp.ne.s32.totalorder %s142, %s144
      %p148 = scmp.eq.s32.totalorder %s24, 0
      %p149 = por %p147, %p148
      %p150 = scmp.ne.s32.totalorder %s142, %s144
      %p151 = scmp.eq.s32.totalorder %s29, 1
      %p152 = por %p150, %p151
      %p153 = scmp.ne.s32.totalorder %s144, %s145
      %p154 = scmp.eq.s32.totalorder %s29, 0
      %p155 = por %p153, %p154
      %p156 = scmp.ne.s32.totalorder %s144, %s145
      %p157 = scmp.eq.s32.totalorder %s30, 1
      %p158 = por %p156, %p157
      %p160 = scmp.ne.s32.totalorder %s145, %s159
      %p161 = scmp.eq.s32.totalorder %s30, 0
      %p162 = por %p160, %p161
      %s164 = sadd.s32 %s163, 1
      %p167 = scmp.eq.s32.totalorder %s24, 1
      %p168 = scmp.ne.s32.totalorder %s163, %s165
      %p169 = scmp.eq.s32.totalorder %s24, 0
      %p170 = por %p168, %p169
      %p171 = scmp.ne.s32.totalorder %s163, %s165
      %p172 = scmp.eq.s32.totalorder %s29, 1
      %p173 = por %p171, %p172
      %p174 = scmp.ne.s32.totalorder %s165, %s166
      %p175 = scmp.eq.s32.totalorder %s29, 0
      %p176 = por %p174, %p175
      %p177 = scmp.ne.s32.totalorder %s165, %s166
      %p178 = scmp.eq.s32.totalorder %s30, 1
      %p179 = por %p177, %p178
      %p181 = scmp.ne.s32.totalorder %s166, %s180
      %p182 = scmp.eq.s32.totalorder %s30, 0
      %p183 = por %p181, %p182
      %s185 = sadd.s32 %s184, 1
      %p188 = scmp.eq.s32.totalorder %s24, 1
      %p189 = scmp.ne.s32.totalorder %s184, %s186
      %p190 = scmp.eq.s32.totalorder %s24, 0
      %p191 = por %p189, %p190
      %p192 = scmp.ne.s32.totalorder %s184, %s186
      %p193 = scmp.eq.s32.totalorder %s29, 1
      %p194 = por %p192, %p193
      %p195 = scmp.ne.s32.totalorder %s186, %s187
      %p196 = scmp.eq.s32.totalorder %s29, 0
      %p197 = por %p195, %p196
      %p198 = scmp.ne.s32.totalorder %s186, %s187
      %p199 = scmp.eq.s32.totalorder %s30, 1
      %p200 = por %p198, %p199
      %p202 = scmp.ne.s32.totalorder %s187, %s201
      %p203 = scmp.eq.s32.totalorder %s30, 0
      %p204 = por %p202, %p203
      %s206 = sadd.s32 %s205, 1
      %p209 = scmp.eq.s32.totalorder %s24, 1
      %p210 = scmp.ne.s32.totalorder %s205, %s207
      %p211 = scmp.eq.s32.totalorder %s24, 0
      %p212 = por %p210, %p211
      %p213 = scmp.ne.s32.totalorder %s205, %s207
      %p214 = scmp.eq.s32.totalorder %s29, 1
      %p215 = por %p213, %p214
      %p216 = scmp.ne.s32.totalorder %s207, %s208
      %p217 = scmp.eq.s32.totalorder %s29, 0
      %p218 = por %p216, %p217
      %p219 = scmp.ne.s32.totalorder %s207, %s208
      %p220 = scmp.eq.s32.totalorder %s30, 1
      %p221 = por %p219, %p220
      %p223 = scmp.ne.s32.totalorder %s208, %s222
      %p224 = scmp.eq.s32.totalorder %s30, 0
      %p225 = por %p223, %p224
      %s227 = sadd.s32 %s226, 1
      %p230 = scmp.eq.s32.totalorder %s24, 1
      %p231 = scmp.ne.s32.totalorder %s226, %s228
      %p232 = scmp.eq.s32.totalorder %s24, 0
      %p233 = por %p231, %p232
      %p234 = scmp.ne.s32.totalorder %s226, %s228
      %p235 = scmp.eq.s32.totalorder %s29, 1
      %p236 = por %p234, %p235
      %p237 = scmp.ne.s32.totalorder %s228, %s229
      %p238 = scmp.eq.s32.totalorder %s29, 0
      %p239 = por %p237, %p238
      %p240 = scmp.ne.s32.totalorder %s228, %s229
      %p241 = scmp.eq.s32.totalorder %s30, 1
      %p242 = por %p240, %p241
      %p244 = scmp.ne.s32.totalorder %s229, %s243
      %p245 = scmp.eq.s32.totalorder %s30, 0
      %p246 = por %p244, %p245
      %s248 = sadd.s32 %s247, 1
      %p251 = scmp.eq.s32.totalorder %s24, 1
      %p252 = scmp.ne.s32.totalorder %s247, %s249
      %p253 = scmp.eq.s32.totalorder %s24, 0
      %p254 = por %p252, %p253
      %p255 = scmp.ne.s32.totalorder %s247, %s249
      %p256 = scmp.eq.s32.totalorder %s29, 1
      %p257 = por %p255, %p256
      %p258 = scmp.ne.s32.totalorder %s249, %s250
      %p259 = scmp.eq.s32.totalorder %s29, 0
      %p260 = por %p258, %p259
      %p261 = scmp.ne.s32.totalorder %s249, %s250
      %p262 = scmp.eq.s32.totalorder %s30, 1
      %p263 = por %p261, %p262
      %p265 = scmp.ne.s32.totalorder %s250, %s264
      %p266 = scmp.eq.s32.totalorder %s30, 0
      %p267 = por %p265, %p266
      %s268 = ssub.s32 %s24, %s31
      %p269 = scmp.eq.s32.totalorder %s268, 0
      %s271 = sadd.s32 %s270, 1
      %s272 = scalar_select %p269, %s270, %s271
      %p275 = pneg %p269
      %p276 = scmp.eq.s32.totalorder %s24, 1
      %p277 = por %p275, %p276
      %p278 = scmp.ne.s32.totalorder %s270, %s273
      %p279 = scmp.eq.s32.totalorder %s24, 0
      %p280 = por %p278, %p279
      %p281 = scmp.ne.s32.totalorder %s270, %s273
      %p282 = scmp.eq.s32.totalorder %s29, 1
      %p283 = por %p281, %p282
      %p284 = scmp.ne.s32.totalorder %s273, %s274
      %p285 = scmp.eq.s32.totalorder %s29, 0
      %p286 = por %p284, %p285
      %p287 = scmp.ne.s32.totalorder %s273, %s274
      %p288 = scmp.eq.s32.totalorder %s30, 1
      %p289 = por %p287, %p288
      %p291 = scmp.ne.s32.totalorder %s274, %s290
      %p292 = scmp.eq.s32.totalorder %s30, 0
      %p293 = por %p291, %p292
      %p294 = scmp.le.s32.totalorder 1, %s24
      %p295 = scmp.lt.s32.totalorder %s24, 3
      %p296 = pnand %p294, %p295
      %p297 = pneg %p296
      // Predicated region
      $region9: #{autoencoder_forward.1} parent=5 // pred_check
        _
      $region10: #{autoencoder_forward.1} parent=5 // pred_check_branch
        %299 = sbr.rel (%p296) target = $region12
      $region11: #{autoencoder_forward.1} parent=5 // pred_region
        %s300 = ssub.s32 %s24, 1
        // Predicated region
        $region13: #{autoencoder_forward.1} parent=11 // pred_check
          %p301 = pneg %p71
        $region14: #{autoencoder_forward.1} parent=11 // pred_check_branch
          %303 = sbr.rel (%p301) target = $region16
        $region15: #{autoencoder_forward.1} parent=11 // pred_region
          %s305 = ssub.s32 8192, 8192
          %306 = vsyncadd [#allocation6], %s305
          %s307 = sshll.u32 [#allocation5], 4
          %s308 = int_to_ptr.vmem [resolvable:$true] %s307
          %313 = dma.hbm_to_vmem [thread:$0]  %s1, 8192, %s308, [#allocation6], 128, 128, 8
        $region16: #{autoencoder_forward.1} parent=11 // pred_fallthru
          _
        // Predicated region
        $region17: #{autoencoder_forward.1} parent=11 // pred_check
          %p314 = pneg %p92
        $region18: #{autoencoder_forward.1} parent=11 // pred_check_branch
          %316 = sbr.rel (%p314) target = $region20
        $region19: #{autoencoder_forward.1} parent=11 // pred_region
          _
        $region20: #{autoencoder_forward.1} parent=11 // pred_fallthru
          _
        // Predicated region
        $region21: #{autoencoder_forward.1} parent=11 // pred_check
          %p317 = pneg %p113
        $region22: #{autoencoder_forward.1} parent=11 // pred_check_branch
          %319 = sbr.rel (%p317) target = $region24
        $region23: #{autoencoder_forward.1} parent=11 // pred_region
          _
        $region24: #{autoencoder_forward.1} parent=11 // pred_fallthru
          _
        // Predicated region
        $region25: #{autoencoder_forward.1} parent=11 // pred_check
          %p320 = pneg %p134
        $region26: #{autoencoder_forward.1} parent=11 // pred_check_branch
          %322 = sbr.rel (%p320) target = $region28
        $region27: #{autoencoder_forward.1} parent=11 // pred_region
          _
        $region28: #{autoencoder_forward.1} parent=11 // pred_fallthru
          _
        // Predicated region
        $region29: #{autoencoder_forward.1} parent=11 // pred_check
          %p323 = pneg %p155
        $region30: #{autoencoder_forward.1} parent=11 // pred_check_branch
          %325 = sbr.rel (%p323) target = $region32
        $region31: #{autoencoder_forward.1} parent=11 // pred_region
          _
        $region32: #{autoencoder_forward.1} parent=11 // pred_fallthru
          _
        // Predicated region
        $region33: #{autoencoder_forward.1} parent=11 // pred_check
          %p326 = pneg %p176
        $region34: #{autoencoder_forward.1} parent=11 // pred_check_branch
          %328 = sbr.rel (%p326) target = $region36
        $region35: #{autoencoder_forward.1} parent=11 // pred_region
          _
        $region36: #{autoencoder_forward.1} parent=11 // pred_fallthru
          _
        // Predicated region
        $region37: #{autoencoder_forward.1} parent=11 // pred_check
          %p329 = pneg %p197
        $region38: #{autoencoder_forward.1} parent=11 // pred_check_branch
          %331 = sbr.rel (%p329) target = $region40
        $region39: #{autoencoder_forward.1} parent=11 // pred_region
          _
        $region40: #{autoencoder_forward.1} parent=11 // pred_fallthru
          _
        // Predicated region
        $region41: #{autoencoder_forward.1} parent=11 // pred_check
          %p332 = pneg %p218
        $region42: #{autoencoder_forward.1} parent=11 // pred_check_branch
          %334 = sbr.rel (%p332) target = $region44
        $region43: #{autoencoder_forward.1} parent=11 // pred_region
          _
        $region44: #{autoencoder_forward.1} parent=11 // pred_fallthru
          _
        // Predicated region
        $region45: #{autoencoder_forward.1} parent=11 // pred_check
          %p335 = pneg %p239
        $region46: #{autoencoder_forward.1} parent=11 // pred_check_branch
          %337 = sbr.rel (%p335) target = $region48
        $region47: #{autoencoder_forward.1} parent=11 // pred_region
          %s339 = ssub.s32 8192, 8192
          %340 = vsyncadd [#allocation6], %s339
          %s341 = sshll.u32 [#allocation7], 4
          %s342 = int_to_ptr.vmem [resolvable:$true] %s341
          %347 = dma.hbm_to_vmem [thread:$0]  %s9, 8192, %s342, [#allocation6], 256, 256, 16
        $region48: #{autoencoder_forward.1} parent=11 // pred_fallthru
          _
        // Predicated region
        $region49: #{autoencoder_forward.1} parent=11 // pred_check
          %p348 = pneg %p260
        $region50: #{autoencoder_forward.1} parent=11 // pred_check_branch
          %350 = sbr.rel (%p348) target = $region52
        $region51: #{autoencoder_forward.1} parent=11 // pred_region
          _
        $region52: #{autoencoder_forward.1} parent=11 // pred_fallthru
          _
      $region12: #{autoencoder_forward.1} parent=5 // pred_fallthru
        _
      %p351 = scmp.lt.s32.totalorder %s24, 2
      // Predicated region
      $region53: #{autoencoder_forward.1} parent=5 // pred_check
        %p352 = pneg %p351
      $region54: #{autoencoder_forward.1} parent=5 // pred_check_branch
        %354 = sbr.rel (%p352) target = $region56
      $region55: #{autoencoder_forward.1} parent=5 // pred_region
        // Predicated region
        $region57: #{autoencoder_forward.1} parent=55 // pred_check
          %p355 = pneg %p44
        $region58: #{autoencoder_forward.1} parent=55 // pred_check_branch
          %357 = sbr.rel (%p355) target = $region60
        $region59: #{autoencoder_forward.1} parent=55 // pred_region
          %s358 = sand.u32 %s34, 1
          %s359 = scalar_lea.sflag [#allocation3], %s358
          %s360 = sand.u32 %s34, 1
          %s361 = smul.addr %s360, 1024
          %s362 = scalar_lea.vmem [#allocation2], %s361
          %s363 = smul.u32 64, %s24
          %s365 = ssub.s32 16384, 16384
          %366 = vsyncadd %s359, %s365
          %s367 = smul.addr %s363, 4
          %s368 = smul.addr %s367, 64
          %s369 = scalar_lea.hbm %s0, %s368
          %s370 = sshll.u32 %s362, 4
          %s371 = int_to_ptr.vmem [resolvable:$true] %s370
          %376 = dma.hbm_to_vmem [thread:$0]  %s369, 16384, %s371, %s359, 256, 256, 16
        $region60: #{autoencoder_forward.1} parent=55 // pred_fallthru
          _
      $region56: #{autoencoder_forward.1} parent=5 // pred_fallthru
        _
      %p377 = scmp.le.s32.totalorder 1, %s24
      %p378 = scmp.lt.s32.totalorder %s24, 3
      %p379 = pnand %p377, %p378
      %p380 = pneg %p379
      // Predicated region
      $region61: #{autoencoder_forward.1} parent=5 // pred_check
        _
      $region62: #{autoencoder_forward.1} parent=5 // pred_check_branch
        %382 = sbr.rel (%p379) target = $region64
      $region63: #{autoencoder_forward.1} parent=5 // pred_region
        %s383 = ssub.s32 %s24, 1
        %s384 = sand.u32 %s37, 1
        %s385 = scalar_lea.sflag [#allocation3], %s384
        %s386 = sand.u32 %s37, 1
        %s387 = smul.addr %s386, 1024
        %s388 = scalar_lea.vmem [#allocation2], %s387
        // Predicated region
        $region65: #{autoencoder_forward.1} parent=63 // pred_check
          %p389 = pneg %p50
        $region66: #{autoencoder_forward.1} parent=63 // pred_check_branch
          %391 = sbr.rel (%p389) target = $region68
        $region67: #{autoencoder_forward.1} parent=63 // pred_region
          %392 = dma.done %s385, 16384
        $region68: #{autoencoder_forward.1} parent=63 // pred_fallthru
          _
        // Predicated region
        $region69: #{autoencoder_forward.1} parent=63 // pred_check
          %p393 = pneg %p71
        $region70: #{autoencoder_forward.1} parent=63 // pred_check_branch
          %395 = sbr.rel (%p393) target = $region72
        $region71: #{autoencoder_forward.1} parent=63 // pred_region
          %396 = dma.done [#allocation6], 8192
        $region72: #{autoencoder_forward.1} parent=63 // pred_fallthru
          _
        // Predicated region
        $region73: #{autoencoder_forward.1} parent=63 // pred_check
          %p397 = pneg %p239
        $region74: #{autoencoder_forward.1} parent=63 // pred_check_branch
          %399 = sbr.rel (%p397) target = $region76
        $region75: #{autoencoder_forward.1} parent=63 // pred_region
          %400 = dma.done [#allocation6], 8192
        $region76: #{autoencoder_forward.1} parent=63 // pred_fallthru
          _
        %s401 = sand.u32 %s37, 1
        %s402 = scalar_lea.sflag [#allocation3], %s401
        %s403 = sand.u32 %s37, 1
        %s404 = smul.addr %s403, 1024
        %s405 = scalar_lea.vmem [#allocation2], %s404
        %p406 = pneg %p50
        %p407 = pneg %p47
        %p408 = pneg %p71
        %p409 = pneg %p68
        %p410 = pneg %p92
        %p411 = pneg %p89
        %p412 = pneg %p113
        %p413 = pneg %p110
        %p414 = pneg %p134
        %p415 = pneg %p131
        %p416 = pneg %p155
        %p417 = pneg %p152
        %p418 = pneg %p176
        %p419 = pneg %p173
        %p420 = pneg %p197
        %p421 = pneg %p194
        %p422 = pneg %p218
        %p423 = pneg %p215
        %p424 = pneg %p239
        %p425 = pneg %p236
        %p426 = pneg %p260
        %p427 = pneg %p257
        %p428 = pneg %p286
        %p429 = pneg %p283
        %s430 = sand.u32 %s273, 1
        %s431 = scalar_lea.sflag [#allocation4], %s430
        %s432 = sand.u32 %s273, 1
        %s433 = smul.addr %s432, 1024
        %s434 = scalar_lea.vmem [#allocation8], %s433
        %s435 = smul.u32 64, %s29
        %s436 = smul.u32 64, %s29
        %v438 = vld [vmem:[%s388] sm:$0xff]
        %v439 = vld [vmem:[%s388 + $0x8] sm:$0xff]
        %v440 = vld [vmem:[%s388 + $0x10] sm:$0xff]
        %v441 = vld [vmem:[%s388 + $0x18] sm:$0xff]
        %v442 = vld [vmem:[%s388 + $0x20] sm:$0xff]
        %v443 = vld [vmem:[%s388 + $0x28] sm:$0xff]
        %v444 = vld [vmem:[%s388 + $0x30] sm:$0xff]
        %v445 = vld [vmem:[%s388 + $0x38] sm:$0xff]
        %v446 = vld [vmem:[%s388 + $0x40] sm:$0xff]
        %v447 = vld [vmem:[%s388 + $0x48] sm:$0xff]
        %v448 = vld [vmem:[%s388 + $0x50] sm:$0xff]
        %v449 = vld [vmem:[%s388 + $0x58] sm:$0xff]
        %v450 = vld [vmem:[%s388 + $0x60] sm:$0xff]
        %v451 = vld [vmem:[%s388 + $0x68] sm:$0xff]
        %v452 = vld [vmem:[%s388 + $0x70] sm:$0xff]
        %v453 = vld [vmem:[%s388 + $0x78] sm:$0xff]
        %v454 = vld [vmem:[%s388 + $0x80] sm:$0xff]
        %v455 = vld [vmem:[%s388 + $0x88] sm:$0xff]
        %v456 = vld [vmem:[%s388 + $0x90] sm:$0xff]
        %v457 = vld [vmem:[%s388 + $0x98] sm:$0xff]
        %v458 = vld [vmem:[%s388 + $0xa0] sm:$0xff]
        %v459 = vld [vmem:[%s388 + $0xa8] sm:$0xff]
        %v460 = vld [vmem:[%s388 + $0xb0] sm:$0xff]
        %v461 = vld [vmem:[%s388 + $0xb8] sm:$0xff]
        %v462 = vld [vmem:[%s388 + $0xc0] sm:$0xff]
        %v463 = vld [vmem:[%s388 + $0xc8] sm:$0xff]
        %v464 = vld [vmem:[%s388 + $0xd0] sm:$0xff]
        %v465 = vld [vmem:[%s388 + $0xd8] sm:$0xff]
        %v466 = vld [vmem:[%s388 + $0xe0] sm:$0xff]
        %v467 = vld [vmem:[%s388 + $0xe8] sm:$0xff]
        %v468 = vld [vmem:[%s388 + $0xf0] sm:$0xff]
        %v469 = vld [vmem:[%s388 + $0xf8] sm:$0xff]
        %v470 = vld [vmem:[%s388 + $0x100] sm:$0xff]
        %v471 = vld [vmem:[%s388 + $0x108] sm:$0xff]
        %v472 = vld [vmem:[%s388 + $0x110] sm:$0xff]
        %v473 = vld [vmem:[%s388 + $0x118] sm:$0xff]
        %v474 = vld [vmem:[%s388 + $0x120] sm:$0xff]
        %v475 = vld [vmem:[%s388 + $0x128] sm:$0xff]
        %v476 = vld [vmem:[%s388 + $0x130] sm:$0xff]
        %v477 = vld [vmem:[%s388 + $0x138] sm:$0xff]
        %v478 = vld [vmem:[%s388 + $0x140] sm:$0xff]
        %v479 = vld [vmem:[%s388 + $0x148] sm:$0xff]
        %v480 = vld [vmem:[%s388 + $0x150] sm:$0xff]
        %v481 = vld [vmem:[%s388 + $0x158] sm:$0xff]
        %v482 = vld [vmem:[%s388 + $0x160] sm:$0xff]
        %v483 = vld [vmem:[%s388 + $0x168] sm:$0xff]
        %v484 = vld [vmem:[%s388 + $0x170] sm:$0xff]
        %v485 = vld [vmem:[%s388 + $0x178] sm:$0xff]
        %v486 = vld [vmem:[%s388 + $0x180] sm:$0xff]
        %v487 = vld [vmem:[%s388 + $0x188] sm:$0xff]
        %v488 = vld [vmem:[%s388 + $0x190] sm:$0xff]
        %v489 = vld [vmem:[%s388 + $0x198] sm:$0xff]
        %v490 = vld [vmem:[%s388 + $0x1a0] sm:$0xff]
        %v491 = vld [vmem:[%s388 + $0x1a8] sm:$0xff]
        %v492 = vld [vmem:[%s388 + $0x1b0] sm:$0xff]
        %v493 = vld [vmem:[%s388 + $0x1b8] sm:$0xff]
        %v494 = vld [vmem:[%s388 + $0x1c0] sm:$0xff]
        %v495 = vld [vmem:[%s388 + $0x1c8] sm:$0xff]
        %v496 = vld [vmem:[%s388 + $0x1d0] sm:$0xff]
        %v497 = vld [vmem:[%s388 + $0x1d8] sm:$0xff]
        %v498 = vld [vmem:[%s388 + $0x1e0] sm:$0xff]
        %v499 = vld [vmem:[%s388 + $0x1e8] sm:$0xff]
        %v500 = vld [vmem:[%s388 + $0x1f0] sm:$0xff]
        %v501 = vld [vmem:[%s388 + $0x1f8] sm:$0xff]
        %v502 = vld [vmem:[%s388 + $0x200] sm:$0xff]
        %v503 = vld [vmem:[%s388 + $0x208] sm:$0xff]
        %v504 = vld [vmem:[%s388 + $0x210] sm:$0xff]
        %v505 = vld [vmem:[%s388 + $0x218] sm:$0xff]
        %v506 = vld [vmem:[%s388 + $0x220] sm:$0xff]
        %v507 = vld [vmem:[%s388 + $0x228] sm:$0xff]
        %v508 = vld [vmem:[%s388 + $0x230] sm:$0xff]
        %v509 = vld [vmem:[%s388 + $0x238] sm:$0xff]
        %v510 = vld [vmem:[%s388 + $0x240] sm:$0xff]
        %v511 = vld [vmem:[%s388 + $0x248] sm:$0xff]
        %v512 = vld [vmem:[%s388 + $0x250] sm:$0xff]
        %v513 = vld [vmem:[%s388 + $0x258] sm:$0xff]
        %v514 = vld [vmem:[%s388 + $0x260] sm:$0xff]
        %v515 = vld [vmem:[%s388 + $0x268] sm:$0xff]
        %v516 = vld [vmem:[%s388 + $0x270] sm:$0xff]
        %v517 = vld [vmem:[%s388 + $0x278] sm:$0xff]
        %v518 = vld [vmem:[%s388 + $0x280] sm:$0xff]
        %v519 = vld [vmem:[%s388 + $0x288] sm:$0xff]
        %v520 = vld [vmem:[%s388 + $0x290] sm:$0xff]
        %v521 = vld [vmem:[%s388 + $0x298] sm:$0xff]
        %v522 = vld [vmem:[%s388 + $0x2a0] sm:$0xff]
        %v523 = vld [vmem:[%s388 + $0x2a8] sm:$0xff]
        %v524 = vld [vmem:[%s388 + $0x2b0] sm:$0xff]
        %v525 = vld [vmem:[%s388 + $0x2b8] sm:$0xff]
        %v526 = vld [vmem:[%s388 + $0x2c0] sm:$0xff]
        %v527 = vld [vmem:[%s388 + $0x2c8] sm:$0xff]
        %v528 = vld [vmem:[%s388 + $0x2d0] sm:$0xff]
        %v529 = vld [vmem:[%s388 + $0x2d8] sm:$0xff]
        %v530 = vld [vmem:[%s388 + $0x2e0] sm:$0xff]
        %v531 = vld [vmem:[%s388 + $0x2e8] sm:$0xff]
        %v532 = vld [vmem:[%s388 + $0x2f0] sm:$0xff]
        %v533 = vld [vmem:[%s388 + $0x2f8] sm:$0xff]
        %v534 = vld [vmem:[%s388 + $0x300] sm:$0xff]
        %v535 = vld [vmem:[%s388 + $0x308] sm:$0xff]
        %v536 = vld [vmem:[%s388 + $0x310] sm:$0xff]
        %v537 = vld [vmem:[%s388 + $0x318] sm:$0xff]
        %v538 = vld [vmem:[%s388 + $0x320] sm:$0xff]
        %v539 = vld [vmem:[%s388 + $0x328] sm:$0xff]
        %v540 = vld [vmem:[%s388 + $0x330] sm:$0xff]
        %v541 = vld [vmem:[%s388 + $0x338] sm:$0xff]
        %v542 = vld [vmem:[%s388 + $0x340] sm:$0xff]
        %v543 = vld [vmem:[%s388 + $0x348] sm:$0xff]
        %v544 = vld [vmem:[%s388 + $0x350] sm:$0xff]
        %v545 = vld [vmem:[%s388 + $0x358] sm:$0xff]
        %v546 = vld [vmem:[%s388 + $0x360] sm:$0xff]
        %v547 = vld [vmem:[%s388 + $0x368] sm:$0xff]
        %v548 = vld [vmem:[%s388 + $0x370] sm:$0xff]
        %v549 = vld [vmem:[%s388 + $0x378] sm:$0xff]
        %v550 = vld [vmem:[%s388 + $0x380] sm:$0xff]
        %v551 = vld [vmem:[%s388 + $0x388] sm:$0xff]
        %v552 = vld [vmem:[%s388 + $0x390] sm:$0xff]
        %v553 = vld [vmem:[%s388 + $0x398] sm:$0xff]
        %v554 = vld [vmem:[%s388 + $0x3a0] sm:$0xff]
        %v555 = vld [vmem:[%s388 + $0x3a8] sm:$0xff]
        %v556 = vld [vmem:[%s388 + $0x3b0] sm:$0xff]
        %v557 = vld [vmem:[%s388 + $0x3b8] sm:$0xff]
        %v558 = vld [vmem:[%s388 + $0x3c0] sm:$0xff]
        %v559 = vld [vmem:[%s388 + $0x3c8] sm:$0xff]
        %v560 = vld [vmem:[%s388 + $0x3d0] sm:$0xff]
        %v561 = vld [vmem:[%s388 + $0x3d8] sm:$0xff]
        %v562 = vld [vmem:[%s388 + $0x3e0] sm:$0xff]
        %v563 = vld [vmem:[%s388 + $0x3e8] sm:$0xff]
        %v564 = vld [vmem:[%s388 + $0x3f0] sm:$0xff]
        %v565 = vld [vmem:[%s388 + $0x3f8] sm:$0xff]
        %v566 = vld [vmem:[#allocation5] sm:$0xff]
        %v567 = vld [vmem:[#allocation5 + $0x8] sm:$0xff]
        %v568 = vld [vmem:[#allocation5 + $0x10] sm:$0xff]
        %v569 = vld [vmem:[#allocation5 + $0x18] sm:$0xff]
        %v570 = vld [vmem:[#allocation5 + $0x20] sm:$0xff]
        %v571 = vld [vmem:[#allocation5 + $0x28] sm:$0xff]
        %v572 = vld [vmem:[#allocation5 + $0x30] sm:$0xff]
        %v573 = vld [vmem:[#allocation5 + $0x38] sm:$0xff]
        %v574 = vld [vmem:[#allocation5 + $0x40] sm:$0xff]
        %v575 = vld [vmem:[#allocation5 + $0x48] sm:$0xff]
        %v576 = vld [vmem:[#allocation5 + $0x50] sm:$0xff]
        %v577 = vld [vmem:[#allocation5 + $0x58] sm:$0xff]
        %v578 = vld [vmem:[#allocation5 + $0x60] sm:$0xff]
        %v579 = vld [vmem:[#allocation5 + $0x68] sm:$0xff]
        %v580 = vld [vmem:[#allocation5 + $0x70] sm:$0xff]
        %v581 = vld [vmem:[#allocation5 + $0x78] sm:$0xff]
        %v582 = vld [vmem:[#allocation5 + $0x80] sm:$0xff]
        %v583 = vld [vmem:[#allocation5 + $0x88] sm:$0xff]
        %v584 = vld [vmem:[#allocation5 + $0x90] sm:$0xff]
        %v585 = vld [vmem:[#allocation5 + $0x98] sm:$0xff]
        %v586 = vld [vmem:[#allocation5 + $0xa0] sm:$0xff]
        %v587 = vld [vmem:[#allocation5 + $0xa8] sm:$0xff]
        %v588 = vld [vmem:[#allocation5 + $0xb0] sm:$0xff]
        %v589 = vld [vmem:[#allocation5 + $0xb8] sm:$0xff]
        %v590 = vld [vmem:[#allocation5 + $0xc0] sm:$0xff]
        %v591 = vld [vmem:[#allocation5 + $0xc8] sm:$0xff]
        %v592 = vld [vmem:[#allocation5 + $0xd0] sm:$0xff]
        %v593 = vld [vmem:[#allocation5 + $0xd8] sm:$0xff]
        %v594 = vld [vmem:[#allocation5 + $0xe0] sm:$0xff]
        %v595 = vld [vmem:[#allocation5 + $0xe8] sm:$0xff]
        %v596 = vld [vmem:[#allocation5 + $0xf0] sm:$0xff]
        %v597 = vld [vmem:[#allocation5 + $0xf8] sm:$0xff]
        %v598 = vld [vmem:[#allocation5 + $0x100] sm:$0xff]
        %v599 = vld [vmem:[#allocation5 + $0x108] sm:$0xff]
        %v600 = vld [vmem:[#allocation5 + $0x110] sm:$0xff]
        %v601 = vld [vmem:[#allocation5 + $0x118] sm:$0xff]
        %v602 = vld [vmem:[#allocation5 + $0x120] sm:$0xff]
        %v603 = vld [vmem:[#allocation5 + $0x128] sm:$0xff]
        %v604 = vld [vmem:[#allocation5 + $0x130] sm:$0xff]
        %v605 = vld [vmem:[#allocation5 + $0x138] sm:$0xff]
        %v606 = vld [vmem:[#allocation5 + $0x140] sm:$0xff]
        %v607 = vld [vmem:[#allocation5 + $0x148] sm:$0xff]
        %v608 = vld [vmem:[#allocation5 + $0x150] sm:$0xff]
        %v609 = vld [vmem:[#allocation5 + $0x158] sm:$0xff]
        %v610 = vld [vmem:[#allocation5 + $0x160] sm:$0xff]
        %v611 = vld [vmem:[#allocation5 + $0x168] sm:$0xff]
        %v612 = vld [vmem:[#allocation5 + $0x170] sm:$0xff]
        %v613 = vld [vmem:[#allocation5 + $0x178] sm:$0xff]
        %v614 = vld [vmem:[#allocation5 + $0x180] sm:$0xff]
        %v615 = vld [vmem:[#allocation5 + $0x188] sm:$0xff]
        %v616 = vld [vmem:[#allocation5 + $0x190] sm:$0xff]
        %v617 = vld [vmem:[#allocation5 + $0x198] sm:$0xff]
        %v618 = vld [vmem:[#allocation5 + $0x1a0] sm:$0xff]
        %v619 = vld [vmem:[#allocation5 + $0x1a8] sm:$0xff]
        %v620 = vld [vmem:[#allocation5 + $0x1b0] sm:$0xff]
        %v621 = vld [vmem:[#allocation5 + $0x1b8] sm:$0xff]
        %v622 = vld [vmem:[#allocation5 + $0x1c0] sm:$0xff]
        %v623 = vld [vmem:[#allocation5 + $0x1c8] sm:$0xff]
        %v624 = vld [vmem:[#allocation5 + $0x1d0] sm:$0xff]
        %v625 = vld [vmem:[#allocation5 + $0x1d8] sm:$0xff]
        %v626 = vld [vmem:[#allocation5 + $0x1e0] sm:$0xff]
        %v627 = vld [vmem:[#allocation5 + $0x1e8] sm:$0xff]
        %v628 = vld [vmem:[#allocation5 + $0x1f0] sm:$0xff]
        %v629 = vld [vmem:[#allocation5 + $0x1f8] sm:$0xff]
        %v630 = vld [vmem:[%s2] sm:$0x3]
        %v632 = vlaneseq
        %v633 = vshrl.u32 %v632, 7
        %v634 = vsub.s32 0, %v633
        %v635 = vrot.slane %v630, %v634
        %v636 = vlaneseq
        %v637 = vshrl.u32 %v636, 7
        %v638 = vsub.s32 1, %v637
        %v639 = vrot.slane %v630, %v638
        %v770 = vunpack.c.l.b16 %v438
        %v771 = vunpack.c.h.b16 %v438
        %v772 = vunpack.c.l.b16 %v439
        %v773 = vunpack.c.h.b16 %v439
        %v774 = vunpack.c.l.b16 %v440
        %v775 = vunpack.c.h.b16 %v440
        %v776 = vunpack.c.l.b16 %v441
        %v777 = vunpack.c.h.b16 %v441
        %v778 = vunpack.c.l.b16 %v442
        %v779 = vunpack.c.h.b16 %v442
        %v780 = vunpack.c.l.b16 %v443
        %v781 = vunpack.c.h.b16 %v443
        %v782 = vunpack.c.l.b16 %v444
        %v783 = vunpack.c.h.b16 %v444
        %v784 = vunpack.c.l.b16 %v445
        %v785 = vunpack.c.h.b16 %v445
        %v786 = vunpack.c.l.b16 %v446
        %v787 = vunpack.c.h.b16 %v446
        %v788 = vunpack.c.l.b16 %v447
        %v789 = vunpack.c.h.b16 %v447
        %v790 = vunpack.c.l.b16 %v448
        %v791 = vunpack.c.h.b16 %v448
        %v792 = vunpack.c.l.b16 %v449
        %v793 = vunpack.c.h.b16 %v449
        %v794 = vunpack.c.l.b16 %v450
        %v795 = vunpack.c.h.b16 %v450
        %v796 = vunpack.c.l.b16 %v451
        %v797 = vunpack.c.h.b16 %v451
        %v798 = vunpack.c.l.b16 %v452
        %v799 = vunpack.c.h.b16 %v452
        %v800 = vunpack.c.l.b16 %v453
        %v801 = vunpack.c.h.b16 %v453
        %v802 = vunpack.c.l.b16 %v454
        %v803 = vunpack.c.h.b16 %v454
        %v804 = vunpack.c.l.b16 %v455
        %v805 = vunpack.c.h.b16 %v455
        %v806 = vunpack.c.l.b16 %v456
        %v807 = vunpack.c.h.b16 %v456
        %v808 = vunpack.c.l.b16 %v457
        %v809 = vunpack.c.h.b16 %v457
        %v810 = vunpack.c.l.b16 %v458
        %v811 = vunpack.c.h.b16 %v458
        %v812 = vunpack.c.l.b16 %v459
        %v813 = vunpack.c.h.b16 %v459
        %v814 = vunpack.c.l.b16 %v460
        %v815 = vunpack.c.h.b16 %v460
        %v816 = vunpack.c.l.b16 %v461
        %v817 = vunpack.c.h.b16 %v461
        %v818 = vunpack.c.l.b16 %v462
        %v819 = vunpack.c.h.b16 %v462
        %v820 = vunpack.c.l.b16 %v463
        %v821 = vunpack.c.h.b16 %v463
        %v822 = vunpack.c.l.b16 %v464
        %v823 = vunpack.c.h.b16 %v464
        %v824 = vunpack.c.l.b16 %v465
        %v825 = vunpack.c.h.b16 %v465
        %v826 = vunpack.c.l.b16 %v466
        %v827 = vunpack.c.h.b16 %v466
        %v828 = vunpack.c.l.b16 %v467
        %v829 = vunpack.c.h.b16 %v467
        %v830 = vunpack.c.l.b16 %v468
        %v831 = vunpack.c.h.b16 %v468
        %v832 = vunpack.c.l.b16 %v469
        %v833 = vunpack.c.h.b16 %v469
        %v834 = vunpack.c.l.b16 %v470
        %v835 = vunpack.c.h.b16 %v470
        %v836 = vunpack.c.l.b16 %v471
        %v837 = vunpack.c.h.b16 %v471
        %v838 = vunpack.c.l.b16 %v472
        %v839 = vunpack.c.h.b16 %v472
        %v840 = vunpack.c.l.b16 %v473
        %v841 = vunpack.c.h.b16 %v473
        %v842 = vunpack.c.l.b16 %v474
        %v843 = vunpack.c.h.b16 %v474
        %v844 = vunpack.c.l.b16 %v475
        %v845 = vunpack.c.h.b16 %v475
        %v846 = vunpack.c.l.b16 %v476
        %v847 = vunpack.c.h.b16 %v476
        %v848 = vunpack.c.l.b16 %v477
        %v849 = vunpack.c.h.b16 %v477
        %v850 = vunpack.c.l.b16 %v478
        %v851 = vunpack.c.h.b16 %v478
        %v852 = vunpack.c.l.b16 %v479
        %v853 = vunpack.c.h.b16 %v479
        %v854 = vunpack.c.l.b16 %v480
        %v855 = vunpack.c.h.b16 %v480
        %v856 = vunpack.c.l.b16 %v481
        %v857 = vunpack.c.h.b16 %v481
        %v858 = vunpack.c.l.b16 %v482
        %v859 = vunpack.c.h.b16 %v482
        %v860 = vunpack.c.l.b16 %v483
        %v861 = vunpack.c.h.b16 %v483
        %v862 = vunpack.c.l.b16 %v484
        %v863 = vunpack.c.h.b16 %v484
        %v864 = vunpack.c.l.b16 %v485
        %v865 = vunpack.c.h.b16 %v485
        %v866 = vunpack.c.l.b16 %v486
        %v867 = vunpack.c.h.b16 %v486
        %v868 = vunpack.c.l.b16 %v487
        %v869 = vunpack.c.h.b16 %v487
        %v870 = vunpack.c.l.b16 %v488
        %v871 = vunpack.c.h.b16 %v488
        %v872 = vunpack.c.l.b16 %v489
        %v873 = vunpack.c.h.b16 %v489
        %v874 = vunpack.c.l.b16 %v490
        %v875 = vunpack.c.h.b16 %v490
        %v876 = vunpack.c.l.b16 %v491
        %v877 = vunpack.c.h.b16 %v491
        %v878 = vunpack.c.l.b16 %v492
        %v879 = vunpack.c.h.b16 %v492
        %v880 = vunpack.c.l.b16 %v493
        %v881 = vunpack.c.h.b16 %v493
        %v882 = vunpack.c.l.b16 %v494
        %v883 = vunpack.c.h.b16 %v494
        %v884 = vunpack.c.l.b16 %v495
        %v885 = vunpack.c.h.b16 %v495
        %v886 = vunpack.c.l.b16 %v496
        %v887 = vunpack.c.h.b16 %v496
        %v888 = vunpack.c.l.b16 %v497
        %v889 = vunpack.c.h.b16 %v497
        %v890 = vunpack.c.l.b16 %v498
        %v891 = vunpack.c.h.b16 %v498
        %v892 = vunpack.c.l.b16 %v499
        %v893 = vunpack.c.h.b16 %v499
        %v894 = vunpack.c.l.b16 %v500
        %v895 = vunpack.c.h.b16 %v500
        %v896 = vunpack.c.l.b16 %v501
        %v897 = vunpack.c.h.b16 %v501
        %v898 = vunpack.c.l.b16 %v502
        %v899 = vunpack.c.h.b16 %v502
        %v900 = vunpack.c.l.b16 %v503
        %v901 = vunpack.c.h.b16 %v503
        %v902 = vunpack.c.l.b16 %v504
        %v903 = vunpack.c.h.b16 %v504
        %v904 = vunpack.c.l.b16 %v505
        %v905 = vunpack.c.h.b16 %v505
        %v906 = vunpack.c.l.b16 %v506
        %v907 = vunpack.c.h.b16 %v506
        %v908 = vunpack.c.l.b16 %v507
        %v909 = vunpack.c.h.b16 %v507
        %v910 = vunpack.c.l.b16 %v508
        %v911 = vunpack.c.h.b16 %v508
        %v912 = vunpack.c.l.b16 %v509
        %v913 = vunpack.c.h.b16 %v509
        %v914 = vunpack.c.l.b16 %v510
        %v915 = vunpack.c.h.b16 %v510
        %v916 = vunpack.c.l.b16 %v511
        %v917 = vunpack.c.h.b16 %v511
        %v918 = vunpack.c.l.b16 %v512
        %v919 = vunpack.c.h.b16 %v512
        %v920 = vunpack.c.l.b16 %v513
        %v921 = vunpack.c.h.b16 %v513
        %v922 = vunpack.c.l.b16 %v514
        %v923 = vunpack.c.h.b16 %v514
        %v924 = vunpack.c.l.b16 %v515
        %v925 = vunpack.c.h.b16 %v515
        %v926 = vunpack.c.l.b16 %v516
        %v927 = vunpack.c.h.b16 %v516
        %v928 = vunpack.c.l.b16 %v517
        %v929 = vunpack.c.h.b16 %v517
        %v930 = vunpack.c.l.b16 %v518
        %v931 = vunpack.c.h.b16 %v518
        %v932 = vunpack.c.l.b16 %v519
        %v933 = vunpack.c.h.b16 %v519
        %v934 = vunpack.c.l.b16 %v520
        %v935 = vunpack.c.h.b16 %v520
        %v936 = vunpack.c.l.b16 %v521
        %v937 = vunpack.c.h.b16 %v521
        %v938 = vunpack.c.l.b16 %v522
        %v939 = vunpack.c.h.b16 %v522
        %v940 = vunpack.c.l.b16 %v523
        %v941 = vunpack.c.h.b16 %v523
        %v942 = vunpack.c.l.b16 %v524
        %v943 = vunpack.c.h.b16 %v524
        %v944 = vunpack.c.l.b16 %v525
        %v945 = vunpack.c.h.b16 %v525
        %v946 = vunpack.c.l.b16 %v526
        %v947 = vunpack.c.h.b16 %v526
        %v948 = vunpack.c.l.b16 %v527
        %v949 = vunpack.c.h.b16 %v527
        %v950 = vunpack.c.l.b16 %v528
        %v951 = vunpack.c.h.b16 %v528
        %v952 = vunpack.c.l.b16 %v529
        %v953 = vunpack.c.h.b16 %v529
        %v954 = vunpack.c.l.b16 %v530
        %v955 = vunpack.c.h.b16 %v530
        %v956 = vunpack.c.l.b16 %v531
        %v957 = vunpack.c.h.b16 %v531
        %v958 = vunpack.c.l.b16 %v532
        %v959 = vunpack.c.h.b16 %v532
        %v960 = vunpack.c.l.b16 %v533
        %v961 = vunpack.c.h.b16 %v533
        %v962 = vunpack.c.l.b16 %v534
        %v963 = vunpack.c.h.b16 %v534
        %v964 = vunpack.c.l.b16 %v535
        %v965 = vunpack.c.h.b16 %v535
        %v966 = vunpack.c.l.b16 %v536
        %v967 = vunpack.c.h.b16 %v536
        %v968 = vunpack.c.l.b16 %v537
        %v969 = vunpack.c.h.b16 %v537
        %v970 = vunpack.c.l.b16 %v538
        %v971 = vunpack.c.h.b16 %v538
        %v972 = vunpack.c.l.b16 %v539
        %v973 = vunpack.c.h.b16 %v539
        %v974 = vunpack.c.l.b16 %v540
        %v975 = vunpack.c.h.b16 %v540
        %v976 = vunpack.c.l.b16 %v541
        %v977 = vunpack.c.h.b16 %v541
        %v978 = vunpack.c.l.b16 %v542
        %v979 = vunpack.c.h.b16 %v542
        %v980 = vunpack.c.l.b16 %v543
        %v981 = vunpack.c.h.b16 %v543
        %v982 = vunpack.c.l.b16 %v544
        %v983 = vunpack.c.h.b16 %v544
        %v984 = vunpack.c.l.b16 %v545
        %v985 = vunpack.c.h.b16 %v545
        %v986 = vunpack.c.l.b16 %v546
        %v987 = vunpack.c.h.b16 %v546
        %v988 = vunpack.c.l.b16 %v547
        %v989 = vunpack.c.h.b16 %v547
        %v990 = vunpack.c.l.b16 %v548
        %v991 = vunpack.c.h.b16 %v548
        %v992 = vunpack.c.l.b16 %v549
        %v993 = vunpack.c.h.b16 %v549
        %v994 = vunpack.c.l.b16 %v550
        %v995 = vunpack.c.h.b16 %v550
        %v996 = vunpack.c.l.b16 %v551
        %v997 = vunpack.c.h.b16 %v551
        %v998 = vunpack.c.l.b16 %v552
        %v999 = vunpack.c.h.b16 %v552
        %v1000 = vunpack.c.l.b16 %v553
        %v1001 = vunpack.c.h.b16 %v553
        %v1002 = vunpack.c.l.b16 %v554
        %v1003 = vunpack.c.h.b16 %v554
        %v1004 = vunpack.c.l.b16 %v555
        %v1005 = vunpack.c.h.b16 %v555
        %v1006 = vunpack.c.l.b16 %v556
        %v1007 = vunpack.c.h.b16 %v556
        %v1008 = vunpack.c.l.b16 %v557
        %v1009 = vunpack.c.h.b16 %v557
        %v1010 = vunpack.c.l.b16 %v558
        %v1011 = vunpack.c.h.b16 %v558
        %v1012 = vunpack.c.l.b16 %v559
        %v1013 = vunpack.c.h.b16 %v559
        %v1014 = vunpack.c.l.b16 %v560
        %v1015 = vunpack.c.h.b16 %v560
        %v1016 = vunpack.c.l.b16 %v561
        %v1017 = vunpack.c.h.b16 %v561
        %v1018 = vunpack.c.l.b16 %v562
        %v1019 = vunpack.c.h.b16 %v562
        %v1020 = vunpack.c.l.b16 %v563
        %v1021 = vunpack.c.h.b16 %v563
        %v1022 = vunpack.c.l.b16 %v564
        %v1023 = vunpack.c.h.b16 %v564
        %v1024 = vunpack.c.l.b16 %v565
        %v1025 = vunpack.c.h.b16 %v565
        %v1026 = vpack.c.b16 %v774, %v770
        %v1027 = vpack.c.b16 %v775, %v771
        %v1028 = vpack.c.b16 %v776, %v772
        %v1029 = vpack.c.b16 %v777, %v773
        %v1030 = vpack.c.b16 %v782, %v778
        %v1031 = vpack.c.b16 %v783, %v779
        %v1032 = vpack.c.b16 %v784, %v780
        %v1033 = vpack.c.b16 %v785, %v781
        %v1034 = vpack.c.b16 %v790, %v786
        %v1035 = vpack.c.b16 %v791, %v787
        %v1036 = vpack.c.b16 %v792, %v788
        %v1037 = vpack.c.b16 %v793, %v789
        %v1038 = vpack.c.b16 %v798, %v794
        %v1039 = vpack.c.b16 %v799, %v795
        %v1040 = vpack.c.b16 %v800, %v796
        %v1041 = vpack.c.b16 %v801, %v797
        %v1042 = vpack.c.b16 %v806, %v802
        %v1043 = vpack.c.b16 %v807, %v803
        %v1044 = vpack.c.b16 %v808, %v804
        %v1045 = vpack.c.b16 %v809, %v805
        %v1046 = vpack.c.b16 %v814, %v810
        %v1047 = vpack.c.b16 %v815, %v811
        %v1048 = vpack.c.b16 %v816, %v812
        %v1049 = vpack.c.b16 %v817, %v813
        %v1050 = vpack.c.b16 %v822, %v818
        %v1051 = vpack.c.b16 %v823, %v819
        %v1052 = vpack.c.b16 %v824, %v820
        %v1053 = vpack.c.b16 %v825, %v821
        %v1054 = vpack.c.b16 %v830, %v826
        %v1055 = vpack.c.b16 %v831, %v827
        %v1056 = vpack.c.b16 %v832, %v828
        %v1057 = vpack.c.b16 %v833, %v829
        %v1058 = vpack.c.b16 %v838, %v834
        %v1059 = vpack.c.b16 %v839, %v835
        %v1060 = vpack.c.b16 %v840, %v836
        %v1061 = vpack.c.b16 %v841, %v837
        %v1062 = vpack.c.b16 %v846, %v842
        %v1063 = vpack.c.b16 %v847, %v843
        %v1064 = vpack.c.b16 %v848, %v844
        %v1065 = vpack.c.b16 %v849, %v845
        %v1066 = vpack.c.b16 %v854, %v850
        %v1067 = vpack.c.b16 %v855, %v851
        %v1068 = vpack.c.b16 %v856, %v852
        %v1069 = vpack.c.b16 %v857, %v853
        %v1070 = vpack.c.b16 %v862, %v858
        %v1071 = vpack.c.b16 %v863, %v859
        %v1072 = vpack.c.b16 %v864, %v860
        %v1073 = vpack.c.b16 %v865, %v861
        %v1074 = vpack.c.b16 %v870, %v866
        %v1075 = vpack.c.b16 %v871, %v867
        %v1076 = vpack.c.b16 %v872, %v868
        %v1077 = vpack.c.b16 %v873, %v869
        %v1078 = vpack.c.b16 %v878, %v874
        %v1079 = vpack.c.b16 %v879, %v875
        %v1080 = vpack.c.b16 %v880, %v876
        %v1081 = vpack.c.b16 %v881, %v877
        %v1082 = vpack.c.b16 %v886, %v882
        %v1083 = vpack.c.b16 %v887, %v883
        %v1084 = vpack.c.b16 %v888, %v884
        %v1085 = vpack.c.b16 %v889, %v885
        %v1086 = vpack.c.b16 %v894, %v890
        %v1087 = vpack.c.b16 %v895, %v891
        %v1088 = vpack.c.b16 %v896, %v892
        %v1089 = vpack.c.b16 %v897, %v893
        %v1090 = vpack.c.b16 %v902, %v898
        %v1091 = vpack.c.b16 %v903, %v899
        %v1092 = vpack.c.b16 %v904, %v900
        %v1093 = vpack.c.b16 %v905, %v901
        %v1094 = vpack.c.b16 %v910, %v906
        %v1095 = vpack.c.b16 %v911, %v907
        %v1096 = vpack.c.b16 %v912, %v908
        %v1097 = vpack.c.b16 %v913, %v909
        %v1098 = vpack.c.b16 %v918, %v914
        %v1099 = vpack.c.b16 %v919, %v915
        %v1100 = vpack.c.b16 %v920, %v916
        %v1101 = vpack.c.b16 %v921, %v917
        %v1102 = vpack.c.b16 %v926, %v922
        %v1103 = vpack.c.b16 %v927, %v923
        %v1104 = vpack.c.b16 %v928, %v924
        %v1105 = vpack.c.b16 %v929, %v925
        %v1106 = vpack.c.b16 %v934, %v930
        %v1107 = vpack.c.b16 %v935, %v931
        %v1108 = vpack.c.b16 %v936, %v932
        %v1109 = vpack.c.b16 %v937, %v933
        %v1110 = vpack.c.b16 %v942, %v938
        %v1111 = vpack.c.b16 %v943, %v939
        %v1112 = vpack.c.b16 %v944, %v940
        %v1113 = vpack.c.b16 %v945, %v941
        %v1114 = vpack.c.b16 %v950, %v946
        %v1115 = vpack.c.b16 %v951, %v947
        %v1116 = vpack.c.b16 %v952, %v948
        %v1117 = vpack.c.b16 %v953, %v949
        %v1118 = vpack.c.b16 %v958, %v954
        %v1119 = vpack.c.b16 %v959, %v955
        %v1120 = vpack.c.b16 %v960, %v956
        %v1121 = vpack.c.b16 %v961, %v957
        %v1122 = vpack.c.b16 %v966, %v962
        %v1123 = vpack.c.b16 %v967, %v963
        %v1124 = vpack.c.b16 %v968, %v964
        %v1125 = vpack.c.b16 %v969, %v965
        %v1126 = vpack.c.b16 %v974, %v970
        %v1127 = vpack.c.b16 %v975, %v971
        %v1128 = vpack.c.b16 %v976, %v972
        %v1129 = vpack.c.b16 %v977, %v973
        %v1130 = vpack.c.b16 %v982, %v978
        %v1131 = vpack.c.b16 %v983, %v979
        %v1132 = vpack.c.b16 %v984, %v980
        %v1133 = vpack.c.b16 %v985, %v981
        %v1134 = vpack.c.b16 %v990, %v986
        %v1135 = vpack.c.b16 %v991, %v987
        %v1136 = vpack.c.b16 %v992, %v988
        %v1137 = vpack.c.b16 %v993, %v989
        %v1138 = vpack.c.b16 %v998, %v994
        %v1139 = vpack.c.b16 %v999, %v995
        %v1140 = vpack.c.b16 %v1000, %v996
        %v1141 = vpack.c.b16 %v1001, %v997
        %v1142 = vpack.c.b16 %v1006, %v1002
        %v1143 = vpack.c.b16 %v1007, %v1003
        %v1144 = vpack.c.b16 %v1008, %v1004
        %v1145 = vpack.c.b16 %v1009, %v1005
        %v1146 = vpack.c.b16 %v1014, %v1010
        %v1147 = vpack.c.b16 %v1015, %v1011
        %v1148 = vpack.c.b16 %v1016, %v1012
        %v1149 = vpack.c.b16 %v1017, %v1013
        %v1150 = vpack.c.b16 %v1022, %v1018
        %v1151 = vpack.c.b16 %v1023, %v1019
        %v1152 = vpack.c.b16 %v1024, %v1020
        %v1153 = vpack.c.b16 %v1025, %v1021
        %v1346 = vunpack.c.l.b16 %v566
        %v1347 = vunpack.c.h.b16 %v566
        %v1348 = vunpack.c.l.b16 %v567
        %v1349 = vunpack.c.h.b16 %v567
        %v1350 = vunpack.c.l.b16 %v568
        %v1351 = vunpack.c.h.b16 %v568
        %v1352 = vunpack.c.l.b16 %v569
        %v1353 = vunpack.c.h.b16 %v569
        %v1354 = vunpack.c.l.b16 %v570
        %v1355 = vunpack.c.h.b16 %v570
        %v1356 = vunpack.c.l.b16 %v571
        %v1357 = vunpack.c.h.b16 %v571
        %v1358 = vunpack.c.l.b16 %v572
        %v1359 = vunpack.c.h.b16 %v572
        %v1360 = vunpack.c.l.b16 %v573
        %v1361 = vunpack.c.h.b16 %v573
        %v1362 = vunpack.c.l.b16 %v574
        %v1363 = vunpack.c.h.b16 %v574
        %v1364 = vunpack.c.l.b16 %v575
        %v1365 = vunpack.c.h.b16 %v575
        %v1366 = vunpack.c.l.b16 %v576
        %v1367 = vunpack.c.h.b16 %v576
        %v1368 = vunpack.c.l.b16 %v577
        %v1369 = vunpack.c.h.b16 %v577
        %v1370 = vunpack.c.l.b16 %v578
        %v1371 = vunpack.c.h.b16 %v578
        %v1372 = vunpack.c.l.b16 %v579
        %v1373 = vunpack.c.h.b16 %v579
        %v1374 = vunpack.c.l.b16 %v580
        %v1375 = vunpack.c.h.b16 %v580
        %v1376 = vunpack.c.l.b16 %v581
        %v1377 = vunpack.c.h.b16 %v581
        %v1378 = vunpack.c.l.b16 %v582
        %v1379 = vunpack.c.h.b16 %v582
        %v1380 = vunpack.c.l.b16 %v583
        %v1381 = vunpack.c.h.b16 %v583
        %v1382 = vunpack.c.l.b16 %v584
        %v1383 = vunpack.c.h.b16 %v584
        %v1384 = vunpack.c.l.b16 %v585
        %v1385 = vunpack.c.h.b16 %v585
        %v1386 = vunpack.c.l.b16 %v586
        %v1387 = vunpack.c.h.b16 %v586
        %v1388 = vunpack.c.l.b16 %v587
        %v1389 = vunpack.c.h.b16 %v587
        %v1390 = vunpack.c.l.b16 %v588
        %v1391 = vunpack.c.h.b16 %v588
        %v1392 = vunpack.c.l.b16 %v589
        %v1393 = vunpack.c.h.b16 %v589
        %v1394 = vunpack.c.l.b16 %v590
        %v1395 = vunpack.c.h.b16 %v590
        %v1396 = vunpack.c.l.b16 %v591
        %v1397 = vunpack.c.h.b16 %v591
        %v1398 = vunpack.c.l.b16 %v592
        %v1399 = vunpack.c.h.b16 %v592
        %v1400 = vunpack.c.l.b16 %v593
        %v1401 = vunpack.c.h.b16 %v593
        %v1402 = vunpack.c.l.b16 %v594
        %v1403 = vunpack.c.h.b16 %v594
        %v1404 = vunpack.c.l.b16 %v595
        %v1405 = vunpack.c.h.b16 %v595
        %v1406 = vunpack.c.l.b16 %v596
        %v1407 = vunpack.c.h.b16 %v596
        %v1408 = vunpack.c.l.b16 %v597
        %v1409 = vunpack.c.h.b16 %v597
        %v1410 = vunpack.c.l.b16 %v598
        %v1411 = vunpack.c.h.b16 %v598
        %v1412 = vunpack.c.l.b16 %v599
        %v1413 = vunpack.c.h.b16 %v599
        %v1414 = vunpack.c.l.b16 %v600
        %v1415 = vunpack.c.h.b16 %v600
        %v1416 = vunpack.c.l.b16 %v601
        %v1417 = vunpack.c.h.b16 %v601
        %v1418 = vunpack.c.l.b16 %v602
        %v1419 = vunpack.c.h.b16 %v602
        %v1420 = vunpack.c.l.b16 %v603
        %v1421 = vunpack.c.h.b16 %v603
        %v1422 = vunpack.c.l.b16 %v604
        %v1423 = vunpack.c.h.b16 %v604
        %v1424 = vunpack.c.l.b16 %v605
        %v1425 = vunpack.c.h.b16 %v605
        %v1426 = vunpack.c.l.b16 %v606
        %v1427 = vunpack.c.h.b16 %v606
        %v1428 = vunpack.c.l.b16 %v607
        %v1429 = vunpack.c.h.b16 %v607
        %v1430 = vunpack.c.l.b16 %v608
        %v1431 = vunpack.c.h.b16 %v608
        %v1432 = vunpack.c.l.b16 %v609
        %v1433 = vunpack.c.h.b16 %v609
        %v1434 = vunpack.c.l.b16 %v610
        %v1435 = vunpack.c.h.b16 %v610
        %v1436 = vunpack.c.l.b16 %v611
        %v1437 = vunpack.c.h.b16 %v611
        %v1438 = vunpack.c.l.b16 %v612
        %v1439 = vunpack.c.h.b16 %v612
        %v1440 = vunpack.c.l.b16 %v613
        %v1441 = vunpack.c.h.b16 %v613
        %v1442 = vunpack.c.l.b16 %v614
        %v1443 = vunpack.c.h.b16 %v614
        %v1444 = vunpack.c.l.b16 %v615
        %v1445 = vunpack.c.h.b16 %v615
        %v1446 = vunpack.c.l.b16 %v616
        %v1447 = vunpack.c.h.b16 %v616
        %v1448 = vunpack.c.l.b16 %v617
        %v1449 = vunpack.c.h.b16 %v617
        %v1450 = vunpack.c.l.b16 %v618
        %v1451 = vunpack.c.h.b16 %v618
        %v1452 = vunpack.c.l.b16 %v619
        %v1453 = vunpack.c.h.b16 %v619
        %v1454 = vunpack.c.l.b16 %v620
        %v1455 = vunpack.c.h.b16 %v620
        %v1456 = vunpack.c.l.b16 %v621
        %v1457 = vunpack.c.h.b16 %v621
        %v1458 = vunpack.c.l.b16 %v622
        %v1459 = vunpack.c.h.b16 %v622
        %v1460 = vunpack.c.l.b16 %v623
        %v1461 = vunpack.c.h.b16 %v623
        %v1462 = vunpack.c.l.b16 %v624
        %v1463 = vunpack.c.h.b16 %v624
        %v1464 = vunpack.c.l.b16 %v625
        %v1465 = vunpack.c.h.b16 %v625
        %v1466 = vunpack.c.l.b16 %v626
        %v1467 = vunpack.c.h.b16 %v626
        %v1468 = vunpack.c.l.b16 %v627
        %v1469 = vunpack.c.h.b16 %v627
        %v1470 = vunpack.c.l.b16 %v628
        %v1471 = vunpack.c.h.b16 %v628
        %v1472 = vunpack.c.l.b16 %v629
        %v1473 = vunpack.c.h.b16 %v629
        %v1474 = vpack.c.b16 %v1348, %v1346
        %v1475 = vpack.c.b16 %v1349, %v1347
        %v1476 = vpack.c.b16 %v1352, %v1350
        %v1477 = vpack.c.b16 %v1353, %v1351
        %v1478 = vpack.c.b16 %v1356, %v1354
        %v1479 = vpack.c.b16 %v1357, %v1355
        %v1480 = vpack.c.b16 %v1360, %v1358
        %v1481 = vpack.c.b16 %v1361, %v1359
        %v1482 = vpack.c.b16 %v1364, %v1362
        %v1483 = vpack.c.b16 %v1365, %v1363
        %v1484 = vpack.c.b16 %v1368, %v1366
        %v1485 = vpack.c.b16 %v1369, %v1367
        %v1486 = vpack.c.b16 %v1372, %v1370
        %v1487 = vpack.c.b16 %v1373, %v1371
        %v1488 = vpack.c.b16 %v1376, %v1374
        %v1489 = vpack.c.b16 %v1377, %v1375
        %v1490 = vpack.c.b16 %v1380, %v1378
        %v1491 = vpack.c.b16 %v1381, %v1379
        %v1492 = vpack.c.b16 %v1384, %v1382
        %v1493 = vpack.c.b16 %v1385, %v1383
        %v1494 = vpack.c.b16 %v1388, %v1386
        %v1495 = vpack.c.b16 %v1389, %v1387
        %v1496 = vpack.c.b16 %v1392, %v1390
        %v1497 = vpack.c.b16 %v1393, %v1391
        %v1498 = vpack.c.b16 %v1396, %v1394
        %v1499 = vpack.c.b16 %v1397, %v1395
        %v1500 = vpack.c.b16 %v1400, %v1398
        %v1501 = vpack.c.b16 %v1401, %v1399
        %v1502 = vpack.c.b16 %v1404, %v1402
        %v1503 = vpack.c.b16 %v1405, %v1403
        %v1504 = vpack.c.b16 %v1408, %v1406
        %v1505 = vpack.c.b16 %v1409, %v1407
        %v1506 = vpack.c.b16 %v1412, %v1410
        %v1507 = vpack.c.b16 %v1413, %v1411
        %v1508 = vpack.c.b16 %v1416, %v1414
        %v1509 = vpack.c.b16 %v1417, %v1415
        %v1510 = vpack.c.b16 %v1420, %v1418
        %v1511 = vpack.c.b16 %v1421, %v1419
        %v1512 = vpack.c.b16 %v1424, %v1422
        %v1513 = vpack.c.b16 %v1425, %v1423
        %v1514 = vpack.c.b16 %v1428, %v1426
        %v1515 = vpack.c.b16 %v1429, %v1427
        %v1516 = vpack.c.b16 %v1432, %v1430
        %v1517 = vpack.c.b16 %v1433, %v1431
        %v1518 = vpack.c.b16 %v1436, %v1434
        %v1519 = vpack.c.b16 %v1437, %v1435
        %v1520 = vpack.c.b16 %v1440, %v1438
        %v1521 = vpack.c.b16 %v1441, %v1439
        %v1522 = vpack.c.b16 %v1444, %v1442
        %v1523 = vpack.c.b16 %v1445, %v1443
        %v1524 = vpack.c.b16 %v1448, %v1446
        %v1525 = vpack.c.b16 %v1449, %v1447
        %v1526 = vpack.c.b16 %v1452, %v1450
        %v1527 = vpack.c.b16 %v1453, %v1451
        %v1528 = vpack.c.b16 %v1456, %v1454
        %v1529 = vpack.c.b16 %v1457, %v1455
        %v1530 = vpack.c.b16 %v1460, %v1458
        %v1531 = vpack.c.b16 %v1461, %v1459
        %v1532 = vpack.c.b16 %v1464, %v1462
        %v1533 = vpack.c.b16 %v1465, %v1463
        %v1534 = vpack.c.b16 %v1468, %v1466
        %v1535 = vpack.c.b16 %v1469, %v1467
        %v1536 = vpack.c.b16 %v1472, %v1470
        %v1537 = vpack.c.b16 %v1473, %v1471
        %1602 = vmatprep.subr.bf16.mxu0 %v1489
        %1603 = vmatpush1.bf16.msra.mxu0 %v1488
        %1604 = vmatprep.subr.bf16.mxu0 %v1487
        %1605 = vmatpush1.bf16.msra.mxu0 %v1486
        %1606 = vmatprep.subr.bf16.mxu0 %v1485
        %1607 = vmatpush1.bf16.msra.mxu0 %v1484
        %1608 = vmatprep.subr.bf16.mxu0 %v1483
        %1609 = vmatpush1.bf16.msra.mxu0 %v1482
        %1610 = vmatprep.subr.bf16.mxu0 %v1481
        %1611 = vmatpush1.bf16.msra.mxu0 %v1480
        %1612 = vmatprep.subr.bf16.mxu0 %v1479
        %1613 = vmatpush1.bf16.msra.mxu0 %v1478
        %1614 = vmatprep.subr.bf16.mxu0 %v1477
        %1615 = vmatpush1.bf16.msra.mxu0 %v1476
        %1616 = vmatprep.subr.bf16.mxu0 %v1475
        %1617 = vmatpush1.bf16.msra.mxu0 %v1474
        %1618 = vmatprep.subr.bf16.mxu0 %v1505
        %1619 = vmatpush2.bf16.msra.mxu0 %v1504
        %1620 = vmatprep.subr.bf16.mxu0 %v1503
        %1621 = vmatpush2.bf16.msra.mxu0 %v1502
        %1622 = vmatprep.subr.bf16.mxu0 %v1501
        %1623 = vmatpush2.bf16.msra.mxu0 %v1500
        %1624 = vmatprep.subr.bf16.mxu0 %v1499
        %1625 = vmatpush2.bf16.msra.mxu0 %v1498
        %1626 = vmatprep.subr.bf16.mxu0 %v1497
        %1627 = vmatpush2.bf16.msra.mxu0 %v1496
        %1628 = vmatprep.subr.bf16.mxu0 %v1495
        %1629 = vmatpush2.bf16.msra.mxu0 %v1494
        %1630 = vmatprep.subr.bf16.mxu0 %v1493
        %1631 = vmatpush2.bf16.msra.mxu0 %v1492
        %1632 = vmatprep.subr.bf16.mxu0 %v1491
        %1633 = vmatpush2.bf16.msra.mxu0 %v1490
        %1634 = vmatprep.mubr.bf16.mxu0 %v1027
        %1635 = vmatmul.mubr.bf16.gmra.mxu0 %v1026
        %v1636 = vpop.f32.mrf.mxu0
        %v1637 = vadd.f32 %v635, %v1636
        %v1638 = vpop.f32.mrf.mxu0
        %v1639 = vadd.f32 %v639, %v1638
        %v1640 = vpop.f32.mrf.mxu0
        %v1641 = vadd.f32 %v635, %v1640
        %v1642 = vpop.f32.mrf.mxu0
        %v1643 = vadd.f32 %v639, %v1642
        %1644 = vmatprep.mubr.bf16.mxu0 %v1031
        %1645 = vmatmul.mubr.bf16.gmra.mxu0 %v1030
        %v1646 = vpop.f32.mrf.mxu0
        %v1647 = vadd.f32 %v635, %v1646
        %v1648 = vpop.f32.mrf.mxu0
        %v1649 = vadd.f32 %v639, %v1648
        %v1650 = vpop.f32.mrf.mxu0
        %v1651 = vadd.f32 %v635, %v1650
        %v1652 = vpop.f32.mrf.mxu0
        %v1653 = vadd.f32 %v639, %v1652
        %1654 = vmatprep.mubr.bf16.mxu0 %v1035
        %1655 = vmatmul.mubr.bf16.gmra.mxu0 %v1034
        %v1656 = vpop.f32.mrf.mxu0
        %v1657 = vadd.f32 %v635, %v1656
        %v1658 = vpop.f32.mrf.mxu0
        %v1659 = vadd.f32 %v639, %v1658
        %v1660 = vpop.f32.mrf.mxu0
        %v1661 = vadd.f32 %v635, %v1660
        %v1662 = vpop.f32.mrf.mxu0
        %v1663 = vadd.f32 %v639, %v1662
        %1664 = vmatprep.mubr.bf16.mxu0 %v1039
        %1665 = vmatmul.mubr.bf16.gmra.mxu0 %v1038
        %v1666 = vpop.f32.mrf.mxu0
        %v1667 = vadd.f32 %v635, %v1666
        %v1668 = vpop.f32.mrf.mxu0
        %v1669 = vadd.f32 %v639, %v1668
        %v1670 = vpop.f32.mrf.mxu0
        %v1671 = vadd.f32 %v635, %v1670
        %v1672 = vpop.f32.mrf.mxu0
        %v1673 = vadd.f32 %v639, %v1672
        %1674 = vmatprep.mubr.bf16.mxu0 %v1043
        %1675 = vmatmul.mubr.bf16.gmra.mxu0 %v1042
        %v1676 = vpop.f32.mrf.mxu0
        %v1677 = vadd.f32 %v635, %v1676
        %v1678 = vpop.f32.mrf.mxu0
        %v1679 = vadd.f32 %v639, %v1678
        %v1680 = vpop.f32.mrf.mxu0
        %v1681 = vadd.f32 %v635, %v1680
        %v1682 = vpop.f32.mrf.mxu0
        %v1683 = vadd.f32 %v639, %v1682
        %1684 = vmatprep.mubr.bf16.mxu0 %v1047
        %1685 = vmatmul.mubr.bf16.gmra.mxu0 %v1046
        %v1686 = vpop.f32.mrf.mxu0
        %v1687 = vadd.f32 %v635, %v1686
        %v1688 = vpop.f32.mrf.mxu0
        %v1689 = vadd.f32 %v639, %v1688
        %v1690 = vpop.f32.mrf.mxu0
        %v1691 = vadd.f32 %v635, %v1690
        %v1692 = vpop.f32.mrf.mxu0
        %v1693 = vadd.f32 %v639, %v1692
        %1694 = vmatprep.mubr.bf16.mxu0 %v1051
        %1695 = vmatmul.mubr.bf16.gmra.mxu0 %v1050
        %v1696 = vpop.f32.mrf.mxu0
        %v1697 = vadd.f32 %v635, %v1696
        %v1698 = vpop.f32.mrf.mxu0
        %v1699 = vadd.f32 %v639, %v1698
        %v1700 = vpop.f32.mrf.mxu0
        %v1701 = vadd.f32 %v635, %v1700
        %v1702 = vpop.f32.mrf.mxu0
        %v1703 = vadd.f32 %v639, %v1702
        %1704 = vmatprep.mubr.bf16.mxu0 %v1055
        %1705 = vmatmul.mubr.bf16.gmra.mxu0 %v1054
        %v1706 = vpop.f32.mrf.mxu0
        %v1707 = vadd.f32 %v635, %v1706
        %v1708 = vpop.f32.mrf.mxu0
        %v1709 = vadd.f32 %v639, %v1708
        %v1710 = vpop.f32.mrf.mxu0
        %v1711 = vadd.f32 %v635, %v1710
        %v1712 = vpop.f32.mrf.mxu0
        %v1713 = vadd.f32 %v639, %v1712
        %1714 = vmatprep.mubr.bf16.mxu0 %v1059
        %1715 = vmatmul.mubr.bf16.gmra.mxu0 %v1058
        %v1716 = vpop.f32.mrf.mxu0
        %v1717 = vadd.f32 %v635, %v1716
        %v1718 = vpop.f32.mrf.mxu0
        %v1719 = vadd.f32 %v639, %v1718
        %v1720 = vpop.f32.mrf.mxu0
        %v1721 = vadd.f32 %v635, %v1720
        %v1722 = vpop.f32.mrf.mxu0
        %v1723 = vadd.f32 %v639, %v1722
        %1724 = vmatprep.mubr.bf16.mxu0 %v1063
        %1725 = vmatmul.mubr.bf16.gmra.mxu0 %v1062
        %v1726 = vpop.f32.mrf.mxu0
        %v1727 = vadd.f32 %v635, %v1726
        %v1728 = vpop.f32.mrf.mxu0
        %v1729 = vadd.f32 %v639, %v1728
        %v1730 = vpop.f32.mrf.mxu0
        %v1731 = vadd.f32 %v635, %v1730
        %v1732 = vpop.f32.mrf.mxu0
        %v1733 = vadd.f32 %v639, %v1732
        %1734 = vmatprep.mubr.bf16.mxu0 %v1067
        %1735 = vmatmul.mubr.bf16.gmra.mxu0 %v1066
        %v1736 = vpop.f32.mrf.mxu0
        %v1737 = vadd.f32 %v635, %v1736
        %v1738 = vpop.f32.mrf.mxu0
        %v1739 = vadd.f32 %v639, %v1738
        %v1740 = vpop.f32.mrf.mxu0
        %v1741 = vadd.f32 %v635, %v1740
        %v1742 = vpop.f32.mrf.mxu0
        %v1743 = vadd.f32 %v639, %v1742
        %1744 = vmatprep.mubr.bf16.mxu0 %v1071
        %1745 = vmatmul.mubr.bf16.gmra.mxu0 %v1070
        %v1746 = vpop.f32.mrf.mxu0
        %v1747 = vadd.f32 %v635, %v1746
        %v1748 = vpop.f32.mrf.mxu0
        %v1749 = vadd.f32 %v639, %v1748
        %v1750 = vpop.f32.mrf.mxu0
        %v1751 = vadd.f32 %v635, %v1750
        %v1752 = vpop.f32.mrf.mxu0
        %v1753 = vadd.f32 %v639, %v1752
        %1754 = vmatprep.mubr.bf16.mxu0 %v1075
        %1755 = vmatmul.mubr.bf16.gmra.mxu0 %v1074
        %v1756 = vpop.f32.mrf.mxu0
        %v1757 = vadd.f32 %v635, %v1756
        %v1758 = vpop.f32.mrf.mxu0
        %v1759 = vadd.f32 %v639, %v1758
        %v1760 = vpop.f32.mrf.mxu0
        %v1761 = vadd.f32 %v635, %v1760
        %v1762 = vpop.f32.mrf.mxu0
        %v1763 = vadd.f32 %v639, %v1762
        %1764 = vmatprep.mubr.bf16.mxu0 %v1079
        %1765 = vmatmul.mubr.bf16.gmra.mxu0 %v1078
        %v1766 = vpop.f32.mrf.mxu0
        %v1767 = vadd.f32 %v635, %v1766
        %v1768 = vpop.f32.mrf.mxu0
        %v1769 = vadd.f32 %v639, %v1768
        %v1770 = vpop.f32.mrf.mxu0
        %v1771 = vadd.f32 %v635, %v1770
        %v1772 = vpop.f32.mrf.mxu0
        %v1773 = vadd.f32 %v639, %v1772
        %1774 = vmatprep.mubr.bf16.mxu0 %v1083
        %1775 = vmatmul.mubr.bf16.gmra.mxu0 %v1082
        %v1776 = vpop.f32.mrf.mxu0
        %v1777 = vadd.f32 %v635, %v1776
        %v1778 = vpop.f32.mrf.mxu0
        %v1779 = vadd.f32 %v639, %v1778
        %v1780 = vpop.f32.mrf.mxu0
        %v1781 = vadd.f32 %v635, %v1780
        %v1782 = vpop.f32.mrf.mxu0
        %v1783 = vadd.f32 %v639, %v1782
        %1784 = vmatprep.mubr.bf16.mxu0 %v1087
        %1785 = vmatmul.mubr.bf16.gmra.mxu0 %v1086
        %v1786 = vpop.f32.mrf.mxu0
        %v1787 = vadd.f32 %v635, %v1786
        %v1788 = vpop.f32.mrf.mxu0
        %v1789 = vadd.f32 %v639, %v1788
        %v1790 = vpop.f32.mrf.mxu0
        %v1791 = vadd.f32 %v635, %v1790
        %v1792 = vpop.f32.mrf.mxu0
        %v1793 = vadd.f32 %v639, %v1792
        %1794 = vmatprep.mubr.bf16.mxu0 %v1091
        %1795 = vmatmul.mubr.bf16.gmra.mxu0 %v1090
        %v1796 = vpop.f32.mrf.mxu0
        %v1797 = vadd.f32 %v635, %v1796
        %v1798 = vpop.f32.mrf.mxu0
        %v1799 = vadd.f32 %v639, %v1798
        %v1800 = vpop.f32.mrf.mxu0
        %v1801 = vadd.f32 %v635, %v1800
        %v1802 = vpop.f32.mrf.mxu0
        %v1803 = vadd.f32 %v639, %v1802
        %1804 = vmatprep.mubr.bf16.mxu0 %v1095
        %1805 = vmatmul.mubr.bf16.gmra.mxu0 %v1094
        %v1806 = vpop.f32.mrf.mxu0
        %v1807 = vadd.f32 %v635, %v1806
        %v1808 = vpop.f32.mrf.mxu0
        %v1809 = vadd.f32 %v639, %v1808
        %v1810 = vpop.f32.mrf.mxu0
        %v1811 = vadd.f32 %v635, %v1810
        %v1812 = vpop.f32.mrf.mxu0
        %v1813 = vadd.f32 %v639, %v1812
        %1814 = vmatprep.mubr.bf16.mxu0 %v1099
        %1815 = vmatmul.mubr.bf16.gmra.mxu0 %v1098
        %v1816 = vpop.f32.mrf.mxu0
        %v1817 = vadd.f32 %v635, %v1816
        %v1818 = vpop.f32.mrf.mxu0
        %v1819 = vadd.f32 %v639, %v1818
        %v1820 = vpop.f32.mrf.mxu0
        %v1821 = vadd.f32 %v635, %v1820
        %v1822 = vpop.f32.mrf.mxu0
        %v1823 = vadd.f32 %v639, %v1822
        %1824 = vmatprep.mubr.bf16.mxu0 %v1103
        %1825 = vmatmul.mubr.bf16.gmra.mxu0 %v1102
        %v1826 = vpop.f32.mrf.mxu0
        %v1827 = vadd.f32 %v635, %v1826
        %v1828 = vpop.f32.mrf.mxu0
        %v1829 = vadd.f32 %v639, %v1828
        %v1830 = vpop.f32.mrf.mxu0
        %v1831 = vadd.f32 %v635, %v1830
        %v1832 = vpop.f32.mrf.mxu0
        %v1833 = vadd.f32 %v639, %v1832
        %1834 = vmatprep.mubr.bf16.mxu0 %v1107
        %1835 = vmatmul.mubr.bf16.gmra.mxu0 %v1106
        %v1836 = vpop.f32.mrf.mxu0
        %v1837 = vadd.f32 %v635, %v1836
        %v1838 = vpop.f32.mrf.mxu0
        %v1839 = vadd.f32 %v639, %v1838
        %v1840 = vpop.f32.mrf.mxu0
        %v1841 = vadd.f32 %v635, %v1840
        %v1842 = vpop.f32.mrf.mxu0
        %v1843 = vadd.f32 %v639, %v1842
        %1844 = vmatprep.mubr.bf16.mxu0 %v1111
        %1845 = vmatmul.mubr.bf16.gmra.mxu0 %v1110
        %v1846 = vpop.f32.mrf.mxu0
        %v1847 = vadd.f32 %v635, %v1846
        %v1848 = vpop.f32.mrf.mxu0
        %v1849 = vadd.f32 %v639, %v1848
        %v1850 = vpop.f32.mrf.mxu0
        %v1851 = vadd.f32 %v635, %v1850
        %v1852 = vpop.f32.mrf.mxu0
        %v1853 = vadd.f32 %v639, %v1852
        %1854 = vmatprep.mubr.bf16.mxu0 %v1115
        %1855 = vmatmul.mubr.bf16.gmra.mxu0 %v1114
        %v1856 = vpop.f32.mrf.mxu0
        %v1857 = vadd.f32 %v635, %v1856
        %v1858 = vpop.f32.mrf.mxu0
        %v1859 = vadd.f32 %v639, %v1858
        %v1860 = vpop.f32.mrf.mxu0
        %v1861 = vadd.f32 %v635, %v1860
        %v1862 = vpop.f32.mrf.mxu0
        %v1863 = vadd.f32 %v639, %v1862
        %1864 = vmatprep.mubr.bf16.mxu0 %v1119
        %1865 = vmatmul.mubr.bf16.gmra.mxu0 %v1118
        %v1866 = vpop.f32.mrf.mxu0
        %v1867 = vadd.f32 %v635, %v1866
        %v1868 = vpop.f32.mrf.mxu0
        %v1869 = vadd.f32 %v639, %v1868
        %v1870 = vpop.f32.mrf.mxu0
        %v1871 = vadd.f32 %v635, %v1870
        %v1872 = vpop.f32.mrf.mxu0
        %v1873 = vadd.f32 %v639, %v1872
        %1874 = vmatprep.mubr.bf16.mxu0 %v1123
        %1875 = vmatmul.mubr.bf16.gmra.mxu0 %v1122
        %v1876 = vpop.f32.mrf.mxu0
        %v1877 = vadd.f32 %v635, %v1876
        %v1878 = vpop.f32.mrf.mxu0
        %v1879 = vadd.f32 %v639, %v1878
        %v1880 = vpop.f32.mrf.mxu0
        %v1881 = vadd.f32 %v635, %v1880
        %v1882 = vpop.f32.mrf.mxu0
        %v1883 = vadd.f32 %v639, %v1882
        %1884 = vmatprep.mubr.bf16.mxu0 %v1127
        %1885 = vmatmul.mubr.bf16.gmra.mxu0 %v1126
        %v1886 = vpop.f32.mrf.mxu0
        %v1887 = vadd.f32 %v635, %v1886
        %v1888 = vpop.f32.mrf.mxu0
        %v1889 = vadd.f32 %v639, %v1888
        %v1890 = vpop.f32.mrf.mxu0
        %v1891 = vadd.f32 %v635, %v1890
        %v1892 = vpop.f32.mrf.mxu0
        %v1893 = vadd.f32 %v639, %v1892
        %1894 = vmatprep.mubr.bf16.mxu0 %v1131
        %1895 = vmatmul.mubr.bf16.gmra.mxu0 %v1130
        %v1896 = vpop.f32.mrf.mxu0
        %v1897 = vadd.f32 %v635, %v1896
        %v1898 = vpop.f32.mrf.mxu0
        %v1899 = vadd.f32 %v639, %v1898
        %v1900 = vpop.f32.mrf.mxu0
        %v1901 = vadd.f32 %v635, %v1900
        %v1902 = vpop.f32.mrf.mxu0
        %v1903 = vadd.f32 %v639, %v1902
        %1904 = vmatprep.mubr.bf16.mxu0 %v1135
        %1905 = vmatmul.mubr.bf16.gmra.mxu0 %v1134
        %v1906 = vpop.f32.mrf.mxu0
        %v1907 = vadd.f32 %v635, %v1906
        %v1908 = vpop.f32.mrf.mxu0
        %v1909 = vadd.f32 %v639, %v1908
        %v1910 = vpop.f32.mrf.mxu0
        %v1911 = vadd.f32 %v635, %v1910
        %v1912 = vpop.f32.mrf.mxu0
        %v1913 = vadd.f32 %v639, %v1912
        %1914 = vmatprep.mubr.bf16.mxu0 %v1139
        %1915 = vmatmul.mubr.bf16.gmra.mxu0 %v1138
        %v1916 = vpop.f32.mrf.mxu0
        %v1917 = vadd.f32 %v635, %v1916
        %v1918 = vpop.f32.mrf.mxu0
        %v1919 = vadd.f32 %v639, %v1918
        %v1920 = vpop.f32.mrf.mxu0
        %v1921 = vadd.f32 %v635, %v1920
        %v1922 = vpop.f32.mrf.mxu0
        %v1923 = vadd.f32 %v639, %v1922
        %1924 = vmatprep.mubr.bf16.mxu0 %v1143
        %1925 = vmatmul.mubr.bf16.gmra.mxu0 %v1142
        %v1926 = vpop.f32.mrf.mxu0
        %v1927 = vadd.f32 %v635, %v1926
        %v1928 = vpop.f32.mrf.mxu0
        %v1929 = vadd.f32 %v639, %v1928
        %v1930 = vpop.f32.mrf.mxu0
        %v1931 = vadd.f32 %v635, %v1930
        %v1932 = vpop.f32.mrf.mxu0
        %v1933 = vadd.f32 %v639, %v1932
        %1934 = vmatprep.mubr.bf16.mxu0 %v1147
        %1935 = vmatmul.mubr.bf16.gmra.mxu0 %v1146
        %v1936 = vpop.f32.mrf.mxu0
        %v1937 = vadd.f32 %v635, %v1936
        %v1938 = vpop.f32.mrf.mxu0
        %v1939 = vadd.f32 %v639, %v1938
        %v1940 = vpop.f32.mrf.mxu0
        %v1941 = vadd.f32 %v635, %v1940
        %v1942 = vpop.f32.mrf.mxu0
        %v1943 = vadd.f32 %v639, %v1942
        %1944 = vmatprep.mubr.bf16.mxu0 %v1151
        %1945 = vmatmul.mubr.bf16.gmra.mxu0 %v1150
        %v1946 = vpop.f32.mrf.mxu0
        %v1947 = vadd.f32 %v635, %v1946
        %v1948 = vpop.f32.mrf.mxu0
        %v1949 = vadd.f32 %v639, %v1948
        %v1950 = vpop.f32.mrf.mxu0
        %v1951 = vadd.f32 %v635, %v1950
        %v1952 = vpop.f32.mrf.mxu0
        %v1953 = vadd.f32 %v639, %v1952
        %1954 = vdwg.mxu0
        %1955 = vmatprep.subr.bf16.mxu0 %v1521
        %1956 = vmatpush1.bf16.msra.mxu0 %v1520
        %1957 = vmatprep.subr.bf16.mxu0 %v1519
        %1958 = vmatpush1.bf16.msra.mxu0 %v1518
        %1959 = vmatprep.subr.bf16.mxu0 %v1517
        %1960 = vmatpush1.bf16.msra.mxu0 %v1516
        %1961 = vmatprep.subr.bf16.mxu0 %v1515
        %1962 = vmatpush1.bf16.msra.mxu0 %v1514
        %1963 = vmatprep.subr.bf16.mxu0 %v1513
        %1964 = vmatpush1.bf16.msra.mxu0 %v1512
        %1965 = vmatprep.subr.bf16.mxu0 %v1511
        %1966 = vmatpush1.bf16.msra.mxu0 %v1510
        %1967 = vmatprep.subr.bf16.mxu0 %v1509
        %1968 = vmatpush1.bf16.msra.mxu0 %v1508
        %1969 = vmatprep.subr.bf16.mxu0 %v1507
        %1970 = vmatpush1.bf16.msra.mxu0 %v1506
        %1971 = vmatprep.subr.bf16.mxu0 %v1537
        %1972 = vmatpush2.bf16.msra.mxu0 %v1536
        %1973 = vmatprep.subr.bf16.mxu0 %v1535
        %1974 = vmatpush2.bf16.msra.mxu0 %v1534
        %1975 = vmatprep.subr.bf16.mxu0 %v1533
        %1976 = vmatpush2.bf16.msra.mxu0 %v1532
        %1977 = vmatprep.subr.bf16.mxu0 %v1531
        %1978 = vmatpush2.bf16.msra.mxu0 %v1530
        %1979 = vmatprep.subr.bf16.mxu0 %v1529
        %1980 = vmatpush2.bf16.msra.mxu0 %v1528
        %1981 = vmatprep.subr.bf16.mxu0 %v1527
        %1982 = vmatpush2.bf16.msra.mxu0 %v1526
        %1983 = vmatprep.subr.bf16.mxu0 %v1525
        %1984 = vmatpush2.bf16.msra.mxu0 %v1524
        %1985 = vmatprep.subr.bf16.mxu0 %v1523
        %1986 = vmatpush2.bf16.msra.mxu0 %v1522
        %1987 = vmatprep.mubr.bf16.mxu0 %v1029
        %1988 = vmatmul.mubr.bf16.gmra.mxu0 %v1028
        %v1989 = vpop.f32.mrf.mxu0
        %v1990 = vadd.f32 %v1637, %v1989
        %v1991 = vpop.f32.mrf.mxu0
        %v1992 = vadd.f32 %v1639, %v1991
        %v1993 = vpop.f32.mrf.mxu0
        %v1994 = vadd.f32 %v1641, %v1993
        %v1995 = vpop.f32.mrf.mxu0
        %v1996 = vadd.f32 %v1643, %v1995
        %1997 = vmatprep.mubr.bf16.mxu0 %v1033
        %1998 = vmatmul.mubr.bf16.gmra.mxu0 %v1032
        %v1999 = vpop.f32.mrf.mxu0
        %v2000 = vadd.f32 %v1647, %v1999
        %v2001 = vpop.f32.mrf.mxu0
        %v2002 = vadd.f32 %v1649, %v2001
        %v2003 = vpop.f32.mrf.mxu0
        %v2004 = vadd.f32 %v1651, %v2003
        %v2005 = vpop.f32.mrf.mxu0
        %v2006 = vadd.f32 %v1653, %v2005
        %2007 = vmatprep.mubr.bf16.mxu0 %v1037
        %2008 = vmatmul.mubr.bf16.gmra.mxu0 %v1036
        %v2009 = vpop.f32.mrf.mxu0
        %v2010 = vadd.f32 %v1657, %v2009
        %v2011 = vpop.f32.mrf.mxu0
        %v2012 = vadd.f32 %v1659, %v2011
        %v2013 = vpop.f32.mrf.mxu0
        %v2014 = vadd.f32 %v1661, %v2013
        %v2015 = vpop.f32.mrf.mxu0
        %v2016 = vadd.f32 %v1663, %v2015
        %2017 = vmatprep.mubr.bf16.mxu0 %v1041
        %2018 = vmatmul.mubr.bf16.gmra.mxu0 %v1040
        %v2019 = vpop.f32.mrf.mxu0
        %v2020 = vadd.f32 %v1667, %v2019
        %v2021 = vpop.f32.mrf.mxu0
        %v2022 = vadd.f32 %v1669, %v2021
        %v2023 = vpop.f32.mrf.mxu0
        %v2024 = vadd.f32 %v1671, %v2023
        %v2025 = vpop.f32.mrf.mxu0
        %v2026 = vadd.f32 %v1673, %v2025
        %2027 = vmatprep.mubr.bf16.mxu0 %v1045
        %2028 = vmatmul.mubr.bf16.gmra.mxu0 %v1044
        %v2029 = vpop.f32.mrf.mxu0
        %v2030 = vadd.f32 %v1677, %v2029
        %v2031 = vpop.f32.mrf.mxu0
        %v2032 = vadd.f32 %v1679, %v2031
        %v2033 = vpop.f32.mrf.mxu0
        %v2034 = vadd.f32 %v1681, %v2033
        %v2035 = vpop.f32.mrf.mxu0
        %v2036 = vadd.f32 %v1683, %v2035
        %2037 = vmatprep.mubr.bf16.mxu0 %v1049
        %2038 = vmatmul.mubr.bf16.gmra.mxu0 %v1048
        %v2039 = vpop.f32.mrf.mxu0
        %v2040 = vadd.f32 %v1687, %v2039
        %v2041 = vpop.f32.mrf.mxu0
        %v2042 = vadd.f32 %v1689, %v2041
        %v2043 = vpop.f32.mrf.mxu0
        %v2044 = vadd.f32 %v1691, %v2043
        %v2045 = vpop.f32.mrf.mxu0
        %v2046 = vadd.f32 %v1693, %v2045
        %2047 = vmatprep.mubr.bf16.mxu0 %v1053
        %2048 = vmatmul.mubr.bf16.gmra.mxu0 %v1052
        %v2049 = vpop.f32.mrf.mxu0
        %v2050 = vadd.f32 %v1697, %v2049
        %v2051 = vpop.f32.mrf.mxu0
        %v2052 = vadd.f32 %v1699, %v2051
        %v2053 = vpop.f32.mrf.mxu0
        %v2054 = vadd.f32 %v1701, %v2053
        %v2055 = vpop.f32.mrf.mxu0
        %v2056 = vadd.f32 %v1703, %v2055
        %2057 = vmatprep.mubr.bf16.mxu0 %v1057
        %2058 = vmatmul.mubr.bf16.gmra.mxu0 %v1056
        %v2059 = vpop.f32.mrf.mxu0
        %v2060 = vadd.f32 %v1707, %v2059
        %v2061 = vpop.f32.mrf.mxu0
        %v2062 = vadd.f32 %v1709, %v2061
        %v2063 = vpop.f32.mrf.mxu0
        %v2064 = vadd.f32 %v1711, %v2063
        %v2065 = vpop.f32.mrf.mxu0
        %v2066 = vadd.f32 %v1713, %v2065
        %2067 = vmatprep.mubr.bf16.mxu0 %v1061
        %2068 = vmatmul.mubr.bf16.gmra.mxu0 %v1060
        %v2069 = vpop.f32.mrf.mxu0
        %v2070 = vadd.f32 %v1717, %v2069
        %v2071 = vpop.f32.mrf.mxu0
        %v2072 = vadd.f32 %v1719, %v2071
        %v2073 = vpop.f32.mrf.mxu0
        %v2074 = vadd.f32 %v1721, %v2073
        %v2075 = vpop.f32.mrf.mxu0
        %v2076 = vadd.f32 %v1723, %v2075
        %2077 = vmatprep.mubr.bf16.mxu0 %v1065
        %2078 = vmatmul.mubr.bf16.gmra.mxu0 %v1064
        %v2079 = vpop.f32.mrf.mxu0
        %v2080 = vadd.f32 %v1727, %v2079
        %v2081 = vpop.f32.mrf.mxu0
        %v2082 = vadd.f32 %v1729, %v2081
        %v2083 = vpop.f32.mrf.mxu0
        %v2084 = vadd.f32 %v1731, %v2083
        %v2085 = vpop.f32.mrf.mxu0
        %v2086 = vadd.f32 %v1733, %v2085
        %2087 = vmatprep.mubr.bf16.mxu0 %v1069
        %2088 = vmatmul.mubr.bf16.gmra.mxu0 %v1068
        %v2089 = vpop.f32.mrf.mxu0
        %v2090 = vadd.f32 %v1737, %v2089
        %v2091 = vpop.f32.mrf.mxu0
        %v2092 = vadd.f32 %v1739, %v2091
        %v2093 = vpop.f32.mrf.mxu0
        %v2094 = vadd.f32 %v1741, %v2093
        %v2095 = vpop.f32.mrf.mxu0
        %v2096 = vadd.f32 %v1743, %v2095
        %2097 = vmatprep.mubr.bf16.mxu0 %v1073
        %2098 = vmatmul.mubr.bf16.gmra.mxu0 %v1072
        %v2099 = vpop.f32.mrf.mxu0
        %v2100 = vadd.f32 %v1747, %v2099
        %v2101 = vpop.f32.mrf.mxu0
        %v2102 = vadd.f32 %v1749, %v2101
        %v2103 = vpop.f32.mrf.mxu0
        %v2104 = vadd.f32 %v1751, %v2103
        %v2105 = vpop.f32.mrf.mxu0
        %v2106 = vadd.f32 %v1753, %v2105
        %2107 = vmatprep.mubr.bf16.mxu0 %v1077
        %2108 = vmatmul.mubr.bf16.gmra.mxu0 %v1076
        %v2109 = vpop.f32.mrf.mxu0
        %v2110 = vadd.f32 %v1757, %v2109
        %v2111 = vpop.f32.mrf.mxu0
        %v2112 = vadd.f32 %v1759, %v2111
        %v2113 = vpop.f32.mrf.mxu0
        %v2114 = vadd.f32 %v1761, %v2113
        %v2115 = vpop.f32.mrf.mxu0
        %v2116 = vadd.f32 %v1763, %v2115
        %2117 = vmatprep.mubr.bf16.mxu0 %v1081
        %2118 = vmatmul.mubr.bf16.gmra.mxu0 %v1080
        %v2119 = vpop.f32.mrf.mxu0
        %v2120 = vadd.f32 %v1767, %v2119
        %v2121 = vpop.f32.mrf.mxu0
        %v2122 = vadd.f32 %v1769, %v2121
        %v2123 = vpop.f32.mrf.mxu0
        %v2124 = vadd.f32 %v1771, %v2123
        %v2125 = vpop.f32.mrf.mxu0
        %v2126 = vadd.f32 %v1773, %v2125
        %2127 = vmatprep.mubr.bf16.mxu0 %v1085
        %2128 = vmatmul.mubr.bf16.gmra.mxu0 %v1084
        %v2129 = vpop.f32.mrf.mxu0
        %v2130 = vadd.f32 %v1777, %v2129
        %v2131 = vpop.f32.mrf.mxu0
        %v2132 = vadd.f32 %v1779, %v2131
        %v2133 = vpop.f32.mrf.mxu0
        %v2134 = vadd.f32 %v1781, %v2133
        %v2135 = vpop.f32.mrf.mxu0
        %v2136 = vadd.f32 %v1783, %v2135
        %2137 = vmatprep.mubr.bf16.mxu0 %v1089
        %2138 = vmatmul.mubr.bf16.gmra.mxu0 %v1088
        %v2139 = vpop.f32.mrf.mxu0
        %v2140 = vadd.f32 %v1787, %v2139
        %v2141 = vpop.f32.mrf.mxu0
        %v2142 = vadd.f32 %v1789, %v2141
        %v2143 = vpop.f32.mrf.mxu0
        %v2144 = vadd.f32 %v1791, %v2143
        %v2145 = vpop.f32.mrf.mxu0
        %v2146 = vadd.f32 %v1793, %v2145
        %2147 = vmatprep.mubr.bf16.mxu0 %v1093
        %2148 = vmatmul.mubr.bf16.gmra.mxu0 %v1092
        %v2149 = vpop.f32.mrf.mxu0
        %v2150 = vadd.f32 %v1797, %v2149
        %v2151 = vpop.f32.mrf.mxu0
        %v2152 = vadd.f32 %v1799, %v2151
        %v2153 = vpop.f32.mrf.mxu0
        %v2154 = vadd.f32 %v1801, %v2153
        %v2155 = vpop.f32.mrf.mxu0
        %v2156 = vadd.f32 %v1803, %v2155
        %2157 = vmatprep.mubr.bf16.mxu0 %v1097
        %2158 = vmatmul.mubr.bf16.gmra.mxu0 %v1096
        %v2159 = vpop.f32.mrf.mxu0
        %v2160 = vadd.f32 %v1807, %v2159
        %v2161 = vpop.f32.mrf.mxu0
        %v2162 = vadd.f32 %v1809, %v2161
        %v2163 = vpop.f32.mrf.mxu0
        %v2164 = vadd.f32 %v1811, %v2163
        %v2165 = vpop.f32.mrf.mxu0
        %v2166 = vadd.f32 %v1813, %v2165
        %2167 = vmatprep.mubr.bf16.mxu0 %v1101
        %2168 = vmatmul.mubr.bf16.gmra.mxu0 %v1100
        %v2169 = vpop.f32.mrf.mxu0
        %v2170 = vadd.f32 %v1817, %v2169
        %v2171 = vpop.f32.mrf.mxu0
        %v2172 = vadd.f32 %v1819, %v2171
        %v2173 = vpop.f32.mrf.mxu0
        %v2174 = vadd.f32 %v1821, %v2173
        %v2175 = vpop.f32.mrf.mxu0
        %v2176 = vadd.f32 %v1823, %v2175
        %2177 = vmatprep.mubr.bf16.mxu0 %v1105
        %2178 = vmatmul.mubr.bf16.gmra.mxu0 %v1104
        %v2179 = vpop.f32.mrf.mxu0
        %v2180 = vadd.f32 %v1827, %v2179
        %v2181 = vpop.f32.mrf.mxu0
        %v2182 = vadd.f32 %v1829, %v2181
        %v2183 = vpop.f32.mrf.mxu0
        %v2184 = vadd.f32 %v1831, %v2183
        %v2185 = vpop.f32.mrf.mxu0
        %v2186 = vadd.f32 %v1833, %v2185
        %2187 = vmatprep.mubr.bf16.mxu0 %v1109
        %2188 = vmatmul.mubr.bf16.gmra.mxu0 %v1108
        %v2189 = vpop.f32.mrf.mxu0
        %v2190 = vadd.f32 %v1837, %v2189
        %v2191 = vpop.f32.mrf.mxu0
        %v2192 = vadd.f32 %v1839, %v2191
        %v2193 = vpop.f32.mrf.mxu0
        %v2194 = vadd.f32 %v1841, %v2193
        %v2195 = vpop.f32.mrf.mxu0
        %v2196 = vadd.f32 %v1843, %v2195
        %2197 = vmatprep.mubr.bf16.mxu0 %v1113
        %2198 = vmatmul.mubr.bf16.gmra.mxu0 %v1112
        %v2199 = vpop.f32.mrf.mxu0
        %v2200 = vadd.f32 %v1847, %v2199
        %v2201 = vpop.f32.mrf.mxu0
        %v2202 = vadd.f32 %v1849, %v2201
        %v2203 = vpop.f32.mrf.mxu0
        %v2204 = vadd.f32 %v1851, %v2203
        %v2205 = vpop.f32.mrf.mxu0
        %v2206 = vadd.f32 %v1853, %v2205
        %2207 = vmatprep.mubr.bf16.mxu0 %v1117
        %2208 = vmatmul.mubr.bf16.gmra.mxu0 %v1116
        %v2209 = vpop.f32.mrf.mxu0
        %v2210 = vadd.f32 %v1857, %v2209
        %v2211 = vpop.f32.mrf.mxu0
        %v2212 = vadd.f32 %v1859, %v2211
        %v2213 = vpop.f32.mrf.mxu0
        %v2214 = vadd.f32 %v1861, %v2213
        %v2215 = vpop.f32.mrf.mxu0
        %v2216 = vadd.f32 %v1863, %v2215
        %2217 = vmatprep.mubr.bf16.mxu0 %v1121
        %2218 = vmatmul.mubr.bf16.gmra.mxu0 %v1120
        %v2219 = vpop.f32.mrf.mxu0
        %v2220 = vadd.f32 %v1867, %v2219
        %v2221 = vpop.f32.mrf.mxu0
        %v2222 = vadd.f32 %v1869, %v2221
        %v2223 = vpop.f32.mrf.mxu0
        %v2224 = vadd.f32 %v1871, %v2223
        %v2225 = vpop.f32.mrf.mxu0
        %v2226 = vadd.f32 %v1873, %v2225
        %2227 = vmatprep.mubr.bf16.mxu0 %v1125
        %2228 = vmatmul.mubr.bf16.gmra.mxu0 %v1124
        %v2229 = vpop.f32.mrf.mxu0
        %v2230 = vadd.f32 %v1877, %v2229
        %v2231 = vpop.f32.mrf.mxu0
        %v2232 = vadd.f32 %v1879, %v2231
        %v2233 = vpop.f32.mrf.mxu0
        %v2234 = vadd.f32 %v1881, %v2233
        %v2235 = vpop.f32.mrf.mxu0
        %v2236 = vadd.f32 %v1883, %v2235
        %2237 = vmatprep.mubr.bf16.mxu0 %v1129
        %2238 = vmatmul.mubr.bf16.gmra.mxu0 %v1128
        %v2239 = vpop.f32.mrf.mxu0
        %v2240 = vadd.f32 %v1887, %v2239
        %v2241 = vpop.f32.mrf.mxu0
        %v2242 = vadd.f32 %v1889, %v2241
        %v2243 = vpop.f32.mrf.mxu0
        %v2244 = vadd.f32 %v1891, %v2243
        %v2245 = vpop.f32.mrf.mxu0
        %v2246 = vadd.f32 %v1893, %v2245
        %2247 = vmatprep.mubr.bf16.mxu0 %v1133
        %2248 = vmatmul.mubr.bf16.gmra.mxu0 %v1132
        %v2249 = vpop.f32.mrf.mxu0
        %v2250 = vadd.f32 %v1897, %v2249
        %v2251 = vpop.f32.mrf.mxu0
        %v2252 = vadd.f32 %v1899, %v2251
        %v2253 = vpop.f32.mrf.mxu0
        %v2254 = vadd.f32 %v1901, %v2253
        %v2255 = vpop.f32.mrf.mxu0
        %v2256 = vadd.f32 %v1903, %v2255
        %2257 = vmatprep.mubr.bf16.mxu0 %v1137
        %2258 = vmatmul.mubr.bf16.gmra.mxu0 %v1136
        %v2259 = vpop.f32.mrf.mxu0
        %v2260 = vadd.f32 %v1907, %v2259
        %v2261 = vpop.f32.mrf.mxu0
        %v2262 = vadd.f32 %v1909, %v2261
        %v2263 = vpop.f32.mrf.mxu0
        %v2264 = vadd.f32 %v1911, %v2263
        %v2265 = vpop.f32.mrf.mxu0
        %v2266 = vadd.f32 %v1913, %v2265
        %2267 = vmatprep.mubr.bf16.mxu0 %v1141
        %2268 = vmatmul.mubr.bf16.gmra.mxu0 %v1140
        %v2269 = vpop.f32.mrf.mxu0
        %v2270 = vadd.f32 %v1917, %v2269
        %v2271 = vpop.f32.mrf.mxu0
        %v2272 = vadd.f32 %v1919, %v2271
        %v2273 = vpop.f32.mrf.mxu0
        %v2274 = vadd.f32 %v1921, %v2273
        %v2275 = vpop.f32.mrf.mxu0
        %v2276 = vadd.f32 %v1923, %v2275
        %2277 = vmatprep.mubr.bf16.mxu0 %v1145
        %2278 = vmatmul.mubr.bf16.gmra.mxu0 %v1144
        %v2279 = vpop.f32.mrf.mxu0
        %v2280 = vadd.f32 %v1927, %v2279
        %v2281 = vpop.f32.mrf.mxu0
        %v2282 = vadd.f32 %v1929, %v2281
        %v2283 = vpop.f32.mrf.mxu0
        %v2284 = vadd.f32 %v1931, %v2283
        %v2285 = vpop.f32.mrf.mxu0
        %v2286 = vadd.f32 %v1933, %v2285
        %2287 = vmatprep.mubr.bf16.mxu0 %v1149
        %2288 = vmatmul.mubr.bf16.gmra.mxu0 %v1148
        %v2289 = vpop.f32.mrf.mxu0
        %v2290 = vadd.f32 %v1937, %v2289
        %v2291 = vpop.f32.mrf.mxu0
        %v2292 = vadd.f32 %v1939, %v2291
        %v2293 = vpop.f32.mrf.mxu0
        %v2294 = vadd.f32 %v1941, %v2293
        %v2295 = vpop.f32.mrf.mxu0
        %v2296 = vadd.f32 %v1943, %v2295
        %2297 = vmatprep.mubr.bf16.mxu0 %v1153
        %2298 = vmatmul.mubr.bf16.gmra.mxu0 %v1152
        %v2299 = vpop.f32.mrf.mxu0
        %v2300 = vadd.f32 %v1947, %v2299
        %v2301 = vpop.f32.mrf.mxu0
        %v2302 = vadd.f32 %v1949, %v2301
        %v2303 = vpop.f32.mrf.mxu0
        %v2304 = vadd.f32 %v1951, %v2303
        %v2305 = vpop.f32.mrf.mxu0
        %v2306 = vadd.f32 %v1953, %v2305
        %2307 = vdwg.mxu0
        %v2308 = vmax.f32 %v1990, 0.0
        %v2309 = vmax.f32 %v1992, 0.0
        %v2310 = vmax.f32 %v1994, 0.0
        %v2311 = vmax.f32 %v1996, 0.0
        %v2312 = vmax.f32 %v2000, 0.0
        %v2313 = vmax.f32 %v2002, 0.0
        %v2314 = vmax.f32 %v2004, 0.0
        %v2315 = vmax.f32 %v2006, 0.0
        %v2316 = vmax.f32 %v2010, 0.0
        %v2317 = vmax.f32 %v2012, 0.0
        %v2318 = vmax.f32 %v2014, 0.0
        %v2319 = vmax.f32 %v2016, 0.0
        %v2320 = vmax.f32 %v2020, 0.0
        %v2321 = vmax.f32 %v2022, 0.0
        %v2322 = vmax.f32 %v2024, 0.0
        %v2323 = vmax.f32 %v2026, 0.0
        %v2324 = vmax.f32 %v2030, 0.0
        %v2325 = vmax.f32 %v2032, 0.0
        %v2326 = vmax.f32 %v2034, 0.0
        %v2327 = vmax.f32 %v2036, 0.0
        %v2328 = vmax.f32 %v2040, 0.0
        %v2329 = vmax.f32 %v2042, 0.0
        %v2330 = vmax.f32 %v2044, 0.0
        %v2331 = vmax.f32 %v2046, 0.0
        %v2332 = vmax.f32 %v2050, 0.0
        %v2333 = vmax.f32 %v2052, 0.0
        %v2334 = vmax.f32 %v2054, 0.0
        %v2335 = vmax.f32 %v2056, 0.0
        %v2336 = vmax.f32 %v2060, 0.0
        %v2337 = vmax.f32 %v2062, 0.0
        %v2338 = vmax.f32 %v2064, 0.0
        %v2339 = vmax.f32 %v2066, 0.0
        %v2340 = vmax.f32 %v2070, 0.0
        %v2341 = vmax.f32 %v2072, 0.0
        %v2342 = vmax.f32 %v2074, 0.0
        %v2343 = vmax.f32 %v2076, 0.0
        %v2344 = vmax.f32 %v2080, 0.0
        %v2345 = vmax.f32 %v2082, 0.0
        %v2346 = vmax.f32 %v2084, 0.0
        %v2347 = vmax.f32 %v2086, 0.0
        %v2348 = vmax.f32 %v2090, 0.0
        %v2349 = vmax.f32 %v2092, 0.0
        %v2350 = vmax.f32 %v2094, 0.0
        %v2351 = vmax.f32 %v2096, 0.0
        %v2352 = vmax.f32 %v2100, 0.0
        %v2353 = vmax.f32 %v2102, 0.0
        %v2354 = vmax.f32 %v2104, 0.0
        %v2355 = vmax.f32 %v2106, 0.0
        %v2356 = vmax.f32 %v2110, 0.0
        %v2357 = vmax.f32 %v2112, 0.0
        %v2358 = vmax.f32 %v2114, 0.0
        %v2359 = vmax.f32 %v2116, 0.0
        %v2360 = vmax.f32 %v2120, 0.0
        %v2361 = vmax.f32 %v2122, 0.0
        %v2362 = vmax.f32 %v2124, 0.0
        %v2363 = vmax.f32 %v2126, 0.0
        %v2364 = vmax.f32 %v2130, 0.0
        %v2365 = vmax.f32 %v2132, 0.0
        %v2366 = vmax.f32 %v2134, 0.0
        %v2367 = vmax.f32 %v2136, 0.0
        %v2368 = vmax.f32 %v2140, 0.0
        %v2369 = vmax.f32 %v2142, 0.0
        %v2370 = vmax.f32 %v2144, 0.0
        %v2371 = vmax.f32 %v2146, 0.0
        %v2372 = vmax.f32 %v2150, 0.0
        %v2373 = vmax.f32 %v2152, 0.0
        %v2374 = vmax.f32 %v2154, 0.0
        %v2375 = vmax.f32 %v2156, 0.0
        %v2376 = vmax.f32 %v2160, 0.0
        %v2377 = vmax.f32 %v2162, 0.0
        %v2378 = vmax.f32 %v2164, 0.0
        %v2379 = vmax.f32 %v2166, 0.0
        %v2380 = vmax.f32 %v2170, 0.0
        %v2381 = vmax.f32 %v2172, 0.0
        %v2382 = vmax.f32 %v2174, 0.0
        %v2383 = vmax.f32 %v2176, 0.0
        %v2384 = vmax.f32 %v2180, 0.0
        %v2385 = vmax.f32 %v2182, 0.0
        %v2386 = vmax.f32 %v2184, 0.0
        %v2387 = vmax.f32 %v2186, 0.0
        %v2388 = vmax.f32 %v2190, 0.0
        %v2389 = vmax.f32 %v2192, 0.0
        %v2390 = vmax.f32 %v2194, 0.0
        %v2391 = vmax.f32 %v2196, 0.0
        %v2392 = vmax.f32 %v2200, 0.0
        %v2393 = vmax.f32 %v2202, 0.0
        %v2394 = vmax.f32 %v2204, 0.0
        %v2395 = vmax.f32 %v2206, 0.0
        %v2396 = vmax.f32 %v2210, 0.0
        %v2397 = vmax.f32 %v2212, 0.0
        %v2398 = vmax.f32 %v2214, 0.0
        %v2399 = vmax.f32 %v2216, 0.0
        %v2400 = vmax.f32 %v2220, 0.0
        %v2401 = vmax.f32 %v2222, 0.0
        %v2402 = vmax.f32 %v2224, 0.0
        %v2403 = vmax.f32 %v2226, 0.0
        %v2404 = vmax.f32 %v2230, 0.0
        %v2405 = vmax.f32 %v2232, 0.0
        %v2406 = vmax.f32 %v2234, 0.0
        %v2407 = vmax.f32 %v2236, 0.0
        %v2408 = vmax.f32 %v2240, 0.0
        %v2409 = vmax.f32 %v2242, 0.0
        %v2410 = vmax.f32 %v2244, 0.0
        %v2411 = vmax.f32 %v2246, 0.0
        %v2412 = vmax.f32 %v2250, 0.0
        %v2413 = vmax.f32 %v2252, 0.0
        %v2414 = vmax.f32 %v2254, 0.0
        %v2415 = vmax.f32 %v2256, 0.0
        %v2416 = vmax.f32 %v2260, 0.0
        %v2417 = vmax.f32 %v2262, 0.0
        %v2418 = vmax.f32 %v2264, 0.0
        %v2419 = vmax.f32 %v2266, 0.0
        %v2420 = vmax.f32 %v2270, 0.0
        %v2421 = vmax.f32 %v2272, 0.0
        %v2422 = vmax.f32 %v2274, 0.0
        %v2423 = vmax.f32 %v2276, 0.0
        %v2424 = vmax.f32 %v2280, 0.0
        %v2425 = vmax.f32 %v2282, 0.0
        %v2426 = vmax.f32 %v2284, 0.0
        %v2427 = vmax.f32 %v2286, 0.0
        %v2428 = vmax.f32 %v2290, 0.0
        %v2429 = vmax.f32 %v2292, 0.0
        %v2430 = vmax.f32 %v2294, 0.0
        %v2431 = vmax.f32 %v2296, 0.0
        %v2432 = vmax.f32 %v2300, 0.0
        %v2433 = vmax.f32 %v2302, 0.0
        %v2434 = vmax.f32 %v2304, 0.0
        %v2435 = vmax.f32 %v2306, 0.0
        %v2436 = vpack.c.bf16 %v2310, %v2308
        %v2437 = vpack.c.bf16 %v2311, %v2309
        %v2438 = vpack.c.bf16 %v2314, %v2312
        %v2439 = vpack.c.bf16 %v2315, %v2313
        %v2440 = vpack.c.bf16 %v2318, %v2316
        %v2441 = vpack.c.bf16 %v2319, %v2317
        %v2442 = vpack.c.bf16 %v2322, %v2320
        %v2443 = vpack.c.bf16 %v2323, %v2321
        %v2444 = vpack.c.bf16 %v2326, %v2324
        %v2445 = vpack.c.bf16 %v2327, %v2325
        %v2446 = vpack.c.bf16 %v2330, %v2328
        %v2447 = vpack.c.bf16 %v2331, %v2329
        %v2448 = vpack.c.bf16 %v2334, %v2332
        %v2449 = vpack.c.bf16 %v2335, %v2333
        %v2450 = vpack.c.bf16 %v2338, %v2336
        %v2451 = vpack.c.bf16 %v2339, %v2337
        %v2452 = vpack.c.bf16 %v2342, %v2340
        %v2453 = vpack.c.bf16 %v2343, %v2341
        %v2454 = vpack.c.bf16 %v2346, %v2344
        %v2455 = vpack.c.bf16 %v2347, %v2345
        %v2456 = vpack.c.bf16 %v2350, %v2348
        %v2457 = vpack.c.bf16 %v2351, %v2349
        %v2458 = vpack.c.bf16 %v2354, %v2352
        %v2459 = vpack.c.bf16 %v2355, %v2353
        %v2460 = vpack.c.bf16 %v2358, %v2356
        %v2461 = vpack.c.bf16 %v2359, %v2357
        %v2462 = vpack.c.bf16 %v2362, %v2360
        %v2463 = vpack.c.bf16 %v2363, %v2361
        %v2464 = vpack.c.bf16 %v2366, %v2364
        %v2465 = vpack.c.bf16 %v2367, %v2365
        %v2466 = vpack.c.bf16 %v2370, %v2368
        %v2467 = vpack.c.bf16 %v2371, %v2369
        %v2468 = vpack.c.bf16 %v2374, %v2372
        %v2469 = vpack.c.bf16 %v2375, %v2373
        %v2470 = vpack.c.bf16 %v2378, %v2376
        %v2471 = vpack.c.bf16 %v2379, %v2377
        %v2472 = vpack.c.bf16 %v2382, %v2380
        %v2473 = vpack.c.bf16 %v2383, %v2381
        %v2474 = vpack.c.bf16 %v2386, %v2384
        %v2475 = vpack.c.bf16 %v2387, %v2385
        %v2476 = vpack.c.bf16 %v2390, %v2388
        %v2477 = vpack.c.bf16 %v2391, %v2389
        %v2478 = vpack.c.bf16 %v2394, %v2392
        %v2479 = vpack.c.bf16 %v2395, %v2393
        %v2480 = vpack.c.bf16 %v2398, %v2396
        %v2481 = vpack.c.bf16 %v2399, %v2397
        %v2482 = vpack.c.bf16 %v2402, %v2400
        %v2483 = vpack.c.bf16 %v2403, %v2401
        %v2484 = vpack.c.bf16 %v2406, %v2404
        %v2485 = vpack.c.bf16 %v2407, %v2405
        %v2486 = vpack.c.bf16 %v2410, %v2408
        %v2487 = vpack.c.bf16 %v2411, %v2409
        %v2488 = vpack.c.bf16 %v2414, %v2412
        %v2489 = vpack.c.bf16 %v2415, %v2413
        %v2490 = vpack.c.bf16 %v2418, %v2416
        %v2491 = vpack.c.bf16 %v2419, %v2417
        %v2492 = vpack.c.bf16 %v2422, %v2420
        %v2493 = vpack.c.bf16 %v2423, %v2421
        %v2494 = vpack.c.bf16 %v2426, %v2424
        %v2495 = vpack.c.bf16 %v2427, %v2425
        %v2496 = vpack.c.bf16 %v2430, %v2428
        %v2497 = vpack.c.bf16 %v2431, %v2429
        %v2498 = vpack.c.bf16 %v2434, %v2432
        %v2499 = vpack.c.bf16 %v2435, %v2433
        %v2500 = vld [vmem:[%s3] sm:$0xf]
        %v2501 = vld [vmem:[%s3 + $0x4] sm:$0xf]
        %v2502 = vld [vmem:[%s3 + $0x8] sm:$0xf]
        %v2503 = vld [vmem:[%s3 + $0xc] sm:$0xf]
        %v2504 = vld [vmem:[%s3 + $0x10] sm:$0xf]
        %v2505 = vld [vmem:[%s3 + $0x14] sm:$0xf]
        %v2506 = vld [vmem:[%s3 + $0x18] sm:$0xf]
        %v2507 = vld [vmem:[%s3 + $0x1c] sm:$0xf]
        %v2508 = vld [vmem:[%s3 + $0x20] sm:$0xf]
        %v2509 = vld [vmem:[%s3 + $0x24] sm:$0xf]
        %v2510 = vld [vmem:[%s3 + $0x28] sm:$0xf]
        %v2511 = vld [vmem:[%s3 + $0x2c] sm:$0xf]
        %v2512 = vld [vmem:[%s3 + $0x30] sm:$0xf]
        %v2513 = vld [vmem:[%s3 + $0x34] sm:$0xf]
        %v2514 = vld [vmem:[%s3 + $0x38] sm:$0xf]
        %v2515 = vld [vmem:[%s3 + $0x3c] sm:$0xf]
        %v2516 = vld [vmem:[%s3 + $0x40] sm:$0xf]
        %v2517 = vld [vmem:[%s3 + $0x44] sm:$0xf]
        %v2518 = vld [vmem:[%s3 + $0x48] sm:$0xf]
        %v2519 = vld [vmem:[%s3 + $0x4c] sm:$0xf]
        %v2520 = vld [vmem:[%s3 + $0x50] sm:$0xf]
        %v2521 = vld [vmem:[%s3 + $0x54] sm:$0xf]
        %v2522 = vld [vmem:[%s3 + $0x58] sm:$0xf]
        %v2523 = vld [vmem:[%s3 + $0x5c] sm:$0xf]
        %v2524 = vld [vmem:[%s3 + $0x60] sm:$0xf]
        %v2525 = vld [vmem:[%s3 + $0x64] sm:$0xf]
        %v2526 = vld [vmem:[%s3 + $0x68] sm:$0xf]
        %v2527 = vld [vmem:[%s3 + $0x6c] sm:$0xf]
        %v2528 = vld [vmem:[%s3 + $0x70] sm:$0xf]
        %v2529 = vld [vmem:[%s3 + $0x74] sm:$0xf]
        %v2530 = vld [vmem:[%s3 + $0x78] sm:$0xf]
        %v2531 = vld [vmem:[%s3 + $0x7c] sm:$0xf]
        %v2532 = vld [vmem:[%s4] sm:$0x1]
        %v2534 = vlaneseq
        %v2535 = vshrl.u32 %v2534, 7
        %v2536 = vsub.s32 0, %v2535
        %v2537 = vrot.slane %v2532, %v2536
        %v2571 = vunpack.c.l.b16 %v2500
        %v2572 = vunpack.c.l.b16 %v2501
        %v2573 = vunpack.c.l.b16 %v2502
        %v2574 = vunpack.c.l.b16 %v2503
        %v2575 = vunpack.c.l.b16 %v2504
        %v2576 = vunpack.c.l.b16 %v2505
        %v2577 = vunpack.c.l.b16 %v2506
        %v2578 = vunpack.c.l.b16 %v2507
        %v2579 = vunpack.c.l.b16 %v2508
        %v2580 = vunpack.c.l.b16 %v2509
        %v2581 = vunpack.c.l.b16 %v2510
        %v2582 = vunpack.c.l.b16 %v2511
        %v2583 = vunpack.c.l.b16 %v2512
        %v2584 = vunpack.c.l.b16 %v2513
        %v2585 = vunpack.c.l.b16 %v2514
        %v2586 = vunpack.c.l.b16 %v2515
        %v2587 = vunpack.c.l.b16 %v2516
        %v2588 = vunpack.c.l.b16 %v2517
        %v2589 = vunpack.c.l.b16 %v2518
        %v2590 = vunpack.c.l.b16 %v2519
        %v2591 = vunpack.c.l.b16 %v2520
        %v2592 = vunpack.c.l.b16 %v2521
        %v2593 = vunpack.c.l.b16 %v2522
        %v2594 = vunpack.c.l.b16 %v2523
        %v2595 = vunpack.c.l.b16 %v2524
        %v2596 = vunpack.c.l.b16 %v2525
        %v2597 = vunpack.c.l.b16 %v2526
        %v2598 = vunpack.c.l.b16 %v2527
        %v2599 = vunpack.c.l.b16 %v2528
        %v2600 = vunpack.c.l.b16 %v2529
        %v2601 = vunpack.c.l.b16 %v2530
        %v2602 = vunpack.c.l.b16 %v2531
        %v2603 = vpack.c.b16 %v2572, %v2571
        %v2604 = vpack.c.b16 %v2574, %v2573
        %v2605 = vpack.c.b16 %v2576, %v2575
        %v2606 = vpack.c.b16 %v2578, %v2577
        %v2607 = vpack.c.b16 %v2580, %v2579
        %v2608 = vpack.c.b16 %v2582, %v2581
        %v2609 = vpack.c.b16 %v2584, %v2583
        %v2610 = vpack.c.b16 %v2586, %v2585
        %v2611 = vpack.c.b16 %v2588, %v2587
        %v2612 = vpack.c.b16 %v2590, %v2589
        %v2613 = vpack.c.b16 %v2592, %v2591
        %v2614 = vpack.c.b16 %v2594, %v2593
        %v2615 = vpack.c.b16 %v2596, %v2595
        %v2616 = vpack.c.b16 %v2598, %v2597
        %v2617 = vpack.c.b16 %v2600, %v2599
        %v2618 = vpack.c.b16 %v2602, %v2601
        %2635 = vmatprep.subr.bf16.mxu0 0
        %2636 = vmatpush1.bf16.msra.mxu0 %v2610
        %2637 = vmatprep.subr.bf16.mxu0 0
        %2638 = vmatpush1.bf16.msra.mxu0 %v2609
        %2639 = vmatprep.subr.bf16.mxu0 0
        %2640 = vmatpush1.bf16.msra.mxu0 %v2608
        %2641 = vmatprep.subr.bf16.mxu0 0
        %2642 = vmatpush1.bf16.msra.mxu0 %v2607
        %2643 = vmatprep.subr.bf16.mxu0 0
        %2644 = vmatpush1.bf16.msra.mxu0 %v2606
        %2645 = vmatprep.subr.bf16.mxu0 0
        %2646 = vmatpush1.bf16.msra.mxu0 %v2605
        %2647 = vmatprep.subr.bf16.mxu0 0
        %2648 = vmatpush1.bf16.msra.mxu0 %v2604
        %2649 = vmatprep.subr.bf16.mxu0 0
        %2650 = vmatpush1.bf16.msra.mxu0 %v2603
        %2651 = vmatprep.subr.bf16.mxu0 0
        %2652 = vmatpush2.bf16.msra.mxu0 %v2618
        %2653 = vmatprep.subr.bf16.mxu0 0
        %2654 = vmatpush2.bf16.msra.mxu0 %v2617
        %2655 = vmatprep.subr.bf16.mxu0 0
        %2656 = vmatpush2.bf16.msra.mxu0 %v2616
        %2657 = vmatprep.subr.bf16.mxu0 0
        %2658 = vmatpush2.bf16.msra.mxu0 %v2615
        %2659 = vmatprep.subr.bf16.mxu0 0
        %2660 = vmatpush2.bf16.msra.mxu0 %v2614
        %2661 = vmatprep.subr.bf16.mxu0 0
        %2662 = vmatpush2.bf16.msra.mxu0 %v2613
        %2663 = vmatprep.subr.bf16.mxu0 0
        %2664 = vmatpush2.bf16.msra.mxu0 %v2612
        %2665 = vmatprep.subr.bf16.mxu0 0
        %2666 = vmatpush2.bf16.msra.mxu0 %v2611
        %2667 = vmatprep.mubr.bf16.mxu0 %v2437
        %2668 = vmatmul.mubr.bf16.gmra.mxu0 %v2436
        %v2669 = vpop.f32.mrf.mxu0
        %v2670 = vadd.f32 %v2537, %v2669
        %v2671 = vpop.f32.mrf.mxu0
        %v2672 = vpop.f32.mrf.mxu0
        %v2673 = vadd.f32 %v2537, %v2672
        %v2674 = vpop.f32.mrf.mxu0
        %2675 = vmatprep.mubr.bf16.mxu0 %v2439
        %2676 = vmatmul.mubr.bf16.gmra.mxu0 %v2438
        %v2677 = vpop.f32.mrf.mxu0
        %v2678 = vadd.f32 %v2537, %v2677
        %v2679 = vpop.f32.mrf.mxu0
        %v2680 = vpop.f32.mrf.mxu0
        %v2681 = vadd.f32 %v2537, %v2680
        %v2682 = vpop.f32.mrf.mxu0
        %2683 = vmatprep.mubr.bf16.mxu0 %v2441
        %2684 = vmatmul.mubr.bf16.gmra.mxu0 %v2440
        %v2685 = vpop.f32.mrf.mxu0
        %v2686 = vadd.f32 %v2537, %v2685
        %v2687 = vpop.f32.mrf.mxu0
        %v2688 = vpop.f32.mrf.mxu0
        %v2689 = vadd.f32 %v2537, %v2688
        %v2690 = vpop.f32.mrf.mxu0
        %2691 = vmatprep.mubr.bf16.mxu0 %v2443
        %2692 = vmatmul.mubr.bf16.gmra.mxu0 %v2442
        %v2693 = vpop.f32.mrf.mxu0
        %v2694 = vadd.f32 %v2537, %v2693
        %v2695 = vpop.f32.mrf.mxu0
        %v2696 = vpop.f32.mrf.mxu0
        %v2697 = vadd.f32 %v2537, %v2696
        %v2698 = vpop.f32.mrf.mxu0
        %2699 = vmatprep.mubr.bf16.mxu0 %v2445
        %2700 = vmatmul.mubr.bf16.gmra.mxu0 %v2444
        %v2701 = vpop.f32.mrf.mxu0
        %v2702 = vadd.f32 %v2537, %v2701
        %v2703 = vpop.f32.mrf.mxu0
        %v2704 = vpop.f32.mrf.mxu0
        %v2705 = vadd.f32 %v2537, %v2704
        %v2706 = vpop.f32.mrf.mxu0
        %2707 = vmatprep.mubr.bf16.mxu0 %v2447
        %2708 = vmatmul.mubr.bf16.gmra.mxu0 %v2446
        %v2709 = vpop.f32.mrf.mxu0
        %v2710 = vadd.f32 %v2537, %v2709
        %v2711 = vpop.f32.mrf.mxu0
        %v2712 = vpop.f32.mrf.mxu0
        %v2713 = vadd.f32 %v2537, %v2712
        %v2714 = vpop.f32.mrf.mxu0
        %2715 = vmatprep.mubr.bf16.mxu0 %v2449
        %2716 = vmatmul.mubr.bf16.gmra.mxu0 %v2448
        %v2717 = vpop.f32.mrf.mxu0
        %v2718 = vadd.f32 %v2537, %v2717
        %v2719 = vpop.f32.mrf.mxu0
        %v2720 = vpop.f32.mrf.mxu0
        %v2721 = vadd.f32 %v2537, %v2720
        %v2722 = vpop.f32.mrf.mxu0
        %2723 = vmatprep.mubr.bf16.mxu0 %v2451
        %2724 = vmatmul.mubr.bf16.gmra.mxu0 %v2450
        %v2725 = vpop.f32.mrf.mxu0
        %v2726 = vadd.f32 %v2537, %v2725
        %v2727 = vpop.f32.mrf.mxu0
        %v2728 = vpop.f32.mrf.mxu0
        %v2729 = vadd.f32 %v2537, %v2728
        %v2730 = vpop.f32.mrf.mxu0
        %2731 = vmatprep.mubr.bf16.mxu0 %v2453
        %2732 = vmatmul.mubr.bf16.gmra.mxu0 %v2452
        %v2733 = vpop.f32.mrf.mxu0
        %v2734 = vadd.f32 %v2537, %v2733
        %v2735 = vpop.f32.mrf.mxu0
        %v2736 = vpop.f32.mrf.mxu0
        %v2737 = vadd.f32 %v2537, %v2736
        %v2738 = vpop.f32.mrf.mxu0
        %2739 = vmatprep.mubr.bf16.mxu0 %v2455
        %2740 = vmatmul.mubr.bf16.gmra.mxu0 %v2454
        %v2741 = vpop.f32.mrf.mxu0
        %v2742 = vadd.f32 %v2537, %v2741
        %v2743 = vpop.f32.mrf.mxu0
        %v2744 = vpop.f32.mrf.mxu0
        %v2745 = vadd.f32 %v2537, %v2744
        %v2746 = vpop.f32.mrf.mxu0
        %2747 = vmatprep.mubr.bf16.mxu0 %v2457
        %2748 = vmatmul.mubr.bf16.gmra.mxu0 %v2456
        %v2749 = vpop.f32.mrf.mxu0
        %v2750 = vadd.f32 %v2537, %v2749
        %v2751 = vpop.f32.mrf.mxu0
        %v2752 = vpop.f32.mrf.mxu0
        %v2753 = vadd.f32 %v2537, %v2752
        %v2754 = vpop.f32.mrf.mxu0
        %2755 = vmatprep.mubr.bf16.mxu0 %v2459
        %2756 = vmatmul.mubr.bf16.gmra.mxu0 %v2458
        %v2757 = vpop.f32.mrf.mxu0
        %v2758 = vadd.f32 %v2537, %v2757
        %v2759 = vpop.f32.mrf.mxu0
        %v2760 = vpop.f32.mrf.mxu0
        %v2761 = vadd.f32 %v2537, %v2760
        %v2762 = vpop.f32.mrf.mxu0
        %2763 = vmatprep.mubr.bf16.mxu0 %v2461
        %2764 = vmatmul.mubr.bf16.gmra.mxu0 %v2460
        %v2765 = vpop.f32.mrf.mxu0
        %v2766 = vadd.f32 %v2537, %v2765
        %v2767 = vpop.f32.mrf.mxu0
        %v2768 = vpop.f32.mrf.mxu0
        %v2769 = vadd.f32 %v2537, %v2768
        %v2770 = vpop.f32.mrf.mxu0
        %2771 = vmatprep.mubr.bf16.mxu0 %v2463
        %2772 = vmatmul.mubr.bf16.gmra.mxu0 %v2462
        %v2773 = vpop.f32.mrf.mxu0
        %v2774 = vadd.f32 %v2537, %v2773
        %v2775 = vpop.f32.mrf.mxu0
        %v2776 = vpop.f32.mrf.mxu0
        %v2777 = vadd.f32 %v2537, %v2776
        %v2778 = vpop.f32.mrf.mxu0
        %2779 = vmatprep.mubr.bf16.mxu0 %v2465
        %2780 = vmatmul.mubr.bf16.gmra.mxu0 %v2464
        %v2781 = vpop.f32.mrf.mxu0
        %v2782 = vadd.f32 %v2537, %v2781
        %v2783 = vpop.f32.mrf.mxu0
        %v2784 = vpop.f32.mrf.mxu0
        %v2785 = vadd.f32 %v2537, %v2784
        %v2786 = vpop.f32.mrf.mxu0
        %2787 = vmatprep.mubr.bf16.mxu0 %v2467
        %2788 = vmatmul.mubr.bf16.gmra.mxu0 %v2466
        %v2789 = vpop.f32.mrf.mxu0
        %v2790 = vadd.f32 %v2537, %v2789
        %v2791 = vpop.f32.mrf.mxu0
        %v2792 = vpop.f32.mrf.mxu0
        %v2793 = vadd.f32 %v2537, %v2792
        %v2794 = vpop.f32.mrf.mxu0
        %2795 = vmatprep.mubr.bf16.mxu0 %v2469
        %2796 = vmatmul.mubr.bf16.gmra.mxu0 %v2468
        %v2797 = vpop.f32.mrf.mxu0
        %v2798 = vadd.f32 %v2537, %v2797
        %v2799 = vpop.f32.mrf.mxu0
        %v2800 = vpop.f32.mrf.mxu0
        %v2801 = vadd.f32 %v2537, %v2800
        %v2802 = vpop.f32.mrf.mxu0
        %2803 = vmatprep.mubr.bf16.mxu0 %v2471
        %2804 = vmatmul.mubr.bf16.gmra.mxu0 %v2470
        %v2805 = vpop.f32.mrf.mxu0
        %v2806 = vadd.f32 %v2537, %v2805
        %v2807 = vpop.f32.mrf.mxu0
        %v2808 = vpop.f32.mrf.mxu0
        %v2809 = vadd.f32 %v2537, %v2808
        %v2810 = vpop.f32.mrf.mxu0
        %2811 = vmatprep.mubr.bf16.mxu0 %v2473
        %2812 = vmatmul.mubr.bf16.gmra.mxu0 %v2472
        %v2813 = vpop.f32.mrf.mxu0
        %v2814 = vadd.f32 %v2537, %v2813
        %v2815 = vpop.f32.mrf.mxu0
        %v2816 = vpop.f32.mrf.mxu0
        %v2817 = vadd.f32 %v2537, %v2816
        %v2818 = vpop.f32.mrf.mxu0
        %2819 = vmatprep.mubr.bf16.mxu0 %v2475
        %2820 = vmatmul.mubr.bf16.gmra.mxu0 %v2474
        %v2821 = vpop.f32.mrf.mxu0
        %v2822 = vadd.f32 %v2537, %v2821
        %v2823 = vpop.f32.mrf.mxu0
        %v2824 = vpop.f32.mrf.mxu0
        %v2825 = vadd.f32 %v2537, %v2824
        %v2826 = vpop.f32.mrf.mxu0
        %2827 = vmatprep.mubr.bf16.mxu0 %v2477
        %2828 = vmatmul.mubr.bf16.gmra.mxu0 %v2476
        %v2829 = vpop.f32.mrf.mxu0
        %v2830 = vadd.f32 %v2537, %v2829
        %v2831 = vpop.f32.mrf.mxu0
        %v2832 = vpop.f32.mrf.mxu0
        %v2833 = vadd.f32 %v2537, %v2832
        %v2834 = vpop.f32.mrf.mxu0
        %2835 = vmatprep.mubr.bf16.mxu0 %v2479
        %2836 = vmatmul.mubr.bf16.gmra.mxu0 %v2478
        %v2837 = vpop.f32.mrf.mxu0
        %v2838 = vadd.f32 %v2537, %v2837
        %v2839 = vpop.f32.mrf.mxu0
        %v2840 = vpop.f32.mrf.mxu0
        %v2841 = vadd.f32 %v2537, %v2840
        %v2842 = vpop.f32.mrf.mxu0
        %2843 = vmatprep.mubr.bf16.mxu0 %v2481
        %2844 = vmatmul.mubr.bf16.gmra.mxu0 %v2480
        %v2845 = vpop.f32.mrf.mxu0
        %v2846 = vadd.f32 %v2537, %v2845
        %v2847 = vpop.f32.mrf.mxu0
        %v2848 = vpop.f32.mrf.mxu0
        %v2849 = vadd.f32 %v2537, %v2848
        %v2850 = vpop.f32.mrf.mxu0
        %2851 = vmatprep.mubr.bf16.mxu0 %v2483
        %2852 = vmatmul.mubr.bf16.gmra.mxu0 %v2482
        %v2853 = vpop.f32.mrf.mxu0
        %v2854 = vadd.f32 %v2537, %v2853
        %v2855 = vpop.f32.mrf.mxu0
        %v2856 = vpop.f32.mrf.mxu0
        %v2857 = vadd.f32 %v2537, %v2856
        %v2858 = vpop.f32.mrf.mxu0
        %2859 = vmatprep.mubr.bf16.mxu0 %v2485
        %2860 = vmatmul.mubr.bf16.gmra.mxu0 %v2484
        %v2861 = vpop.f32.mrf.mxu0
        %v2862 = vadd.f32 %v2537, %v2861
        %v2863 = vpop.f32.mrf.mxu0
        %v2864 = vpop.f32.mrf.mxu0
        %v2865 = vadd.f32 %v2537, %v2864
        %v2866 = vpop.f32.mrf.mxu0
        %2867 = vmatprep.mubr.bf16.mxu0 %v2487
        %2868 = vmatmul.mubr.bf16.gmra.mxu0 %v2486
        %v2869 = vpop.f32.mrf.mxu0
        %v2870 = vadd.f32 %v2537, %v2869
        %v2871 = vpop.f32.mrf.mxu0
        %v2872 = vpop.f32.mrf.mxu0
        %v2873 = vadd.f32 %v2537, %v2872
        %v2874 = vpop.f32.mrf.mxu0
        %2875 = vmatprep.mubr.bf16.mxu0 %v2489
        %2876 = vmatmul.mubr.bf16.gmra.mxu0 %v2488
        %v2877 = vpop.f32.mrf.mxu0
        %v2878 = vadd.f32 %v2537, %v2877
        %v2879 = vpop.f32.mrf.mxu0
        %v2880 = vpop.f32.mrf.mxu0
        %v2881 = vadd.f32 %v2537, %v2880
        %v2882 = vpop.f32.mrf.mxu0
        %2883 = vmatprep.mubr.bf16.mxu0 %v2491
        %2884 = vmatmul.mubr.bf16.gmra.mxu0 %v2490
        %v2885 = vpop.f32.mrf.mxu0
        %v2886 = vadd.f32 %v2537, %v2885
        %v2887 = vpop.f32.mrf.mxu0
        %v2888 = vpop.f32.mrf.mxu0
        %v2889 = vadd.f32 %v2537, %v2888
        %v2890 = vpop.f32.mrf.mxu0
        %2891 = vmatprep.mubr.bf16.mxu0 %v2493
        %2892 = vmatmul.mubr.bf16.gmra.mxu0 %v2492
        %v2893 = vpop.f32.mrf.mxu0
        %v2894 = vadd.f32 %v2537, %v2893
        %v2895 = vpop.f32.mrf.mxu0
        %v2896 = vpop.f32.mrf.mxu0
        %v2897 = vadd.f32 %v2537, %v2896
        %v2898 = vpop.f32.mrf.mxu0
        %2899 = vmatprep.mubr.bf16.mxu0 %v2495
        %2900 = vmatmul.mubr.bf16.gmra.mxu0 %v2494
        %v2901 = vpop.f32.mrf.mxu0
        %v2902 = vadd.f32 %v2537, %v2901
        %v2903 = vpop.f32.mrf.mxu0
        %v2904 = vpop.f32.mrf.mxu0
        %v2905 = vadd.f32 %v2537, %v2904
        %v2906 = vpop.f32.mrf.mxu0
        %2907 = vmatprep.mubr.bf16.mxu0 %v2497
        %2908 = vmatmul.mubr.bf16.gmra.mxu0 %v2496
        %v2909 = vpop.f32.mrf.mxu0
        %v2910 = vadd.f32 %v2537, %v2909
        %v2911 = vpop.f32.mrf.mxu0
        %v2912 = vpop.f32.mrf.mxu0
        %v2913 = vadd.f32 %v2537, %v2912
        %v2914 = vpop.f32.mrf.mxu0
        %2915 = vmatprep.mubr.bf16.mxu0 %v2499
        %2916 = vmatmul.mubr.bf16.gmra.mxu0 %v2498
        %v2917 = vpop.f32.mrf.mxu0
        %v2918 = vadd.f32 %v2537, %v2917
        %v2919 = vpop.f32.mrf.mxu0
        %v2920 = vpop.f32.mrf.mxu0
        %v2921 = vadd.f32 %v2537, %v2920
        %v2922 = vpop.f32.mrf.mxu0
        %2923 = vdwg.mxu0
        %v2924 = vmax.f32 %v2670, 0.0
        %v2925 = vmax.f32 %v2673, 0.0
        %v2926 = vmax.f32 %v2678, 0.0
        %v2927 = vmax.f32 %v2681, 0.0
        %v2928 = vmax.f32 %v2686, 0.0
        %v2929 = vmax.f32 %v2689, 0.0
        %v2930 = vmax.f32 %v2694, 0.0
        %v2931 = vmax.f32 %v2697, 0.0
        %v2932 = vmax.f32 %v2702, 0.0
        %v2933 = vmax.f32 %v2705, 0.0
        %v2934 = vmax.f32 %v2710, 0.0
        %v2935 = vmax.f32 %v2713, 0.0
        %v2936 = vmax.f32 %v2718, 0.0
        %v2937 = vmax.f32 %v2721, 0.0
        %v2938 = vmax.f32 %v2726, 0.0
        %v2939 = vmax.f32 %v2729, 0.0
        %v2940 = vmax.f32 %v2734, 0.0
        %v2941 = vmax.f32 %v2737, 0.0
        %v2942 = vmax.f32 %v2742, 0.0
        %v2943 = vmax.f32 %v2745, 0.0
        %v2944 = vmax.f32 %v2750, 0.0
        %v2945 = vmax.f32 %v2753, 0.0
        %v2946 = vmax.f32 %v2758, 0.0
        %v2947 = vmax.f32 %v2761, 0.0
        %v2948 = vmax.f32 %v2766, 0.0
        %v2949 = vmax.f32 %v2769, 0.0
        %v2950 = vmax.f32 %v2774, 0.0
        %v2951 = vmax.f32 %v2777, 0.0
        %v2952 = vmax.f32 %v2782, 0.0
        %v2953 = vmax.f32 %v2785, 0.0
        %v2954 = vmax.f32 %v2790, 0.0
        %v2955 = vmax.f32 %v2793, 0.0
        %v2956 = vmax.f32 %v2798, 0.0
        %v2957 = vmax.f32 %v2801, 0.0
        %v2958 = vmax.f32 %v2806, 0.0
        %v2959 = vmax.f32 %v2809, 0.0
        %v2960 = vmax.f32 %v2814, 0.0
        %v2961 = vmax.f32 %v2817, 0.0
        %v2962 = vmax.f32 %v2822, 0.0
        %v2963 = vmax.f32 %v2825, 0.0
        %v2964 = vmax.f32 %v2830, 0.0
        %v2965 = vmax.f32 %v2833, 0.0
        %v2966 = vmax.f32 %v2838, 0.0
        %v2967 = vmax.f32 %v2841, 0.0
        %v2968 = vmax.f32 %v2846, 0.0
        %v2969 = vmax.f32 %v2849, 0.0
        %v2970 = vmax.f32 %v2854, 0.0
        %v2971 = vmax.f32 %v2857, 0.0
        %v2972 = vmax.f32 %v2862, 0.0
        %v2973 = vmax.f32 %v2865, 0.0
        %v2974 = vmax.f32 %v2870, 0.0
        %v2975 = vmax.f32 %v2873, 0.0
        %v2976 = vmax.f32 %v2878, 0.0
        %v2977 = vmax.f32 %v2881, 0.0
        %v2978 = vmax.f32 %v2886, 0.0
        %v2979 = vmax.f32 %v2889, 0.0
        %v2980 = vmax.f32 %v2894, 0.0
        %v2981 = vmax.f32 %v2897, 0.0
        %v2982 = vmax.f32 %v2902, 0.0
        %v2983 = vmax.f32 %v2905, 0.0
        %v2984 = vmax.f32 %v2910, 0.0
        %v2985 = vmax.f32 %v2913, 0.0
        %v2986 = vmax.f32 %v2918, 0.0
        %v2987 = vmax.f32 %v2921, 0.0
        %v2988 = vpack.c.bf16 %v2925, %v2924
        %v2989 = vpack.c.bf16 %v2927, %v2926
        %v2990 = vpack.c.bf16 %v2929, %v2928
        %v2991 = vpack.c.bf16 %v2931, %v2930
        %v2992 = vpack.c.bf16 %v2933, %v2932
        %v2993 = vpack.c.bf16 %v2935, %v2934
        %v2994 = vpack.c.bf16 %v2937, %v2936
        %v2995 = vpack.c.bf16 %v2939, %v2938
        %v2996 = vpack.c.bf16 %v2941, %v2940
        %v2997 = vpack.c.bf16 %v2943, %v2942
        %v2998 = vpack.c.bf16 %v2945, %v2944
        %v2999 = vpack.c.bf16 %v2947, %v2946
        %v3000 = vpack.c.bf16 %v2949, %v2948
        %v3001 = vpack.c.bf16 %v2951, %v2950
        %v3002 = vpack.c.bf16 %v2953, %v2952
        %v3003 = vpack.c.bf16 %v2955, %v2954
        %v3004 = vpack.c.bf16 %v2957, %v2956
        %v3005 = vpack.c.bf16 %v2959, %v2958
        %v3006 = vpack.c.bf16 %v2961, %v2960
        %v3007 = vpack.c.bf16 %v2963, %v2962
        %v3008 = vpack.c.bf16 %v2965, %v2964
        %v3009 = vpack.c.bf16 %v2967, %v2966
        %v3010 = vpack.c.bf16 %v2969, %v2968
        %v3011 = vpack.c.bf16 %v2971, %v2970
        %v3012 = vpack.c.bf16 %v2973, %v2972
        %v3013 = vpack.c.bf16 %v2975, %v2974
        %v3014 = vpack.c.bf16 %v2977, %v2976
        %v3015 = vpack.c.bf16 %v2979, %v2978
        %v3016 = vpack.c.bf16 %v2981, %v2980
        %v3017 = vpack.c.bf16 %v2983, %v2982
        %v3018 = vpack.c.bf16 %v2985, %v2984
        %v3019 = vpack.c.bf16 %v2987, %v2986
        %v3020 = vld [vmem:[%s5] sm:$0xf]
        %v3021 = vld [vmem:[%s5 + $0x4] sm:$0xf]
        %v3022 = vld [vmem:[%s5 + $0x8] sm:$0xf]
        %v3023 = vld [vmem:[%s5 + $0xc] sm:$0xf]
        %v3024 = vld [vmem:[%s5 + $0x10] sm:$0xf]
        %v3025 = vld [vmem:[%s5 + $0x14] sm:$0xf]
        %v3026 = vld [vmem:[%s5 + $0x18] sm:$0xf]
        %v3027 = vld [vmem:[%s5 + $0x1c] sm:$0xf]
        %v3028 = vld [vmem:[%s6] sm:$0x1]
        %v3030 = vlaneseq
        %v3031 = vshrl.u32 %v3030, 7
        %v3032 = vsub.s32 0, %v3031
        %v3033 = vrot.slane %v3028, %v3032
        %v3043 = vunpack.c.l.b16 %v3020
        %v3044 = vunpack.c.l.b16 %v3021
        %v3045 = vunpack.c.l.b16 %v3022
        %v3046 = vunpack.c.l.b16 %v3023
        %v3047 = vunpack.c.l.b16 %v3024
        %v3048 = vunpack.c.l.b16 %v3025
        %v3049 = vunpack.c.l.b16 %v3026
        %v3050 = vunpack.c.l.b16 %v3027
        %v3051 = vpack.c.b16 %v3044, %v3043
        %v3052 = vpack.c.b16 %v3046, %v3045
        %v3053 = vpack.c.b16 %v3048, %v3047
        %v3054 = vpack.c.b16 %v3050, %v3049
        %vm3059 = vcmask 523264
        %v3061 = vsel %vm3059, %v2988, 0
        %v3064 = vsel %vm3059, %v2989, 0
        %v3067 = vsel %vm3059, %v2990, 0
        %v3070 = vsel %vm3059, %v2991, 0
        %v3073 = vsel %vm3059, %v2992, 0
        %v3076 = vsel %vm3059, %v2993, 0
        %v3079 = vsel %vm3059, %v2994, 0
        %v3082 = vsel %vm3059, %v2995, 0
        %v3085 = vsel %vm3059, %v2996, 0
        %v3088 = vsel %vm3059, %v2997, 0
        %v3091 = vsel %vm3059, %v2998, 0
        %v3094 = vsel %vm3059, %v2999, 0
        %v3097 = vsel %vm3059, %v3000, 0
        %v3100 = vsel %vm3059, %v3001, 0
        %v3103 = vsel %vm3059, %v3002, 0
        %v3106 = vsel %vm3059, %v3003, 0
        %v3109 = vsel %vm3059, %v3004, 0
        %v3112 = vsel %vm3059, %v3005, 0
        %v3115 = vsel %vm3059, %v3006, 0
        %v3118 = vsel %vm3059, %v3007, 0
        %v3121 = vsel %vm3059, %v3008, 0
        %v3124 = vsel %vm3059, %v3009, 0
        %v3127 = vsel %vm3059, %v3010, 0
        %v3130 = vsel %vm3059, %v3011, 0
        %v3133 = vsel %vm3059, %v3012, 0
        %v3136 = vsel %vm3059, %v3013, 0
        %v3139 = vsel %vm3059, %v3014, 0
        %v3142 = vsel %vm3059, %v3015, 0
        %v3145 = vsel %vm3059, %v3016, 0
        %v3148 = vsel %vm3059, %v3017, 0
        %v3151 = vsel %vm3059, %v3018, 0
        %v3154 = vsel %vm3059, %v3019, 0
        %3156 = vmatprep.subr.bf16.mxu0 0
        %3157 = vmatpush1.bf16.msra.mxu0 0
        %3158 = vmatprep.subr.bf16.mxu0 0
        %3159 = vmatpush1.bf16.msra.mxu0 0
        %3160 = vmatprep.subr.bf16.mxu0 0
        %3161 = vmatpush1.bf16.msra.mxu0 0
        %3162 = vmatprep.subr.bf16.mxu0 0
        %3163 = vmatpush1.bf16.msra.mxu0 0
        %3164 = vmatprep.subr.bf16.mxu0 0
        %3165 = vmatpush1.bf16.msra.mxu0 %v3054
        %3166 = vmatprep.subr.bf16.mxu0 0
        %3167 = vmatpush1.bf16.msra.mxu0 %v3053
        %3168 = vmatprep.subr.bf16.mxu0 0
        %3169 = vmatpush1.bf16.msra.mxu0 %v3052
        %3170 = vmatprep.subr.bf16.mxu0 0
        %3171 = vmatpush1.bf16.msra.mxu0 %v3051
        %3172 = vmatprep.subr.bf16.mxu0 0
        %3173 = vmatpush2.bf16.msra.mxu0 0
        %3174 = vmatprep.subr.bf16.mxu0 0
        %3175 = vmatpush2.bf16.msra.mxu0 0
        %3176 = vmatprep.subr.bf16.mxu0 0
        %3177 = vmatpush2.bf16.msra.mxu0 0
        %3178 = vmatprep.subr.bf16.mxu0 0
        %3179 = vmatpush2.bf16.msra.mxu0 0
        %3180 = vmatprep.subr.bf16.mxu0 0
        %3181 = vmatpush2.bf16.msra.mxu0 0
        %3182 = vmatprep.subr.bf16.mxu0 0
        %3183 = vmatpush2.bf16.msra.mxu0 0
        %3184 = vmatprep.subr.bf16.mxu0 0
        %3185 = vmatpush2.bf16.msra.mxu0 0
        %3186 = vmatprep.subr.bf16.mxu0 0
        %3187 = vmatpush2.bf16.msra.mxu0 0
        %3188 = vmatprep.mubr.bf16.mxu0 0
        %3189 = vmatmul.mubr.bf16.gmra.mxu0 %v3061
        %v3190 = vpop.f32.mrf.mxu0
        %v3191 = vadd.f32 %v3033, %v3190
        %v3192 = vpop.f32.mrf.mxu0
        %v3193 = vpop.f32.mrf.mxu0
        %v3194 = vadd.f32 %v3033, %v3193
        %v3195 = vpop.f32.mrf.mxu0
        %3196 = vmatprep.mubr.bf16.mxu0 0
        %3197 = vmatmul.mubr.bf16.gmra.mxu0 %v3064
        %v3198 = vpop.f32.mrf.mxu0
        %v3199 = vadd.f32 %v3033, %v3198
        %v3200 = vpop.f32.mrf.mxu0
        %v3201 = vpop.f32.mrf.mxu0
        %v3202 = vadd.f32 %v3033, %v3201
        %v3203 = vpop.f32.mrf.mxu0
        %3204 = vmatprep.mubr.bf16.mxu0 0
        %3205 = vmatmul.mubr.bf16.gmra.mxu0 %v3067
        %v3206 = vpop.f32.mrf.mxu0
        %v3207 = vadd.f32 %v3033, %v3206
        %v3208 = vpop.f32.mrf.mxu0
        %v3209 = vpop.f32.mrf.mxu0
        %v3210 = vadd.f32 %v3033, %v3209
        %v3211 = vpop.f32.mrf.mxu0
        %3212 = vmatprep.mubr.bf16.mxu0 0
        %3213 = vmatmul.mubr.bf16.gmra.mxu0 %v3070
        %v3214 = vpop.f32.mrf.mxu0
        %v3215 = vadd.f32 %v3033, %v3214
        %v3216 = vpop.f32.mrf.mxu0
        %v3217 = vpop.f32.mrf.mxu0
        %v3218 = vadd.f32 %v3033, %v3217
        %v3219 = vpop.f32.mrf.mxu0
        %3220 = vmatprep.mubr.bf16.mxu0 0
        %3221 = vmatmul.mubr.bf16.gmra.mxu0 %v3073
        %v3222 = vpop.f32.mrf.mxu0
        %v3223 = vadd.f32 %v3033, %v3222
        %v3224 = vpop.f32.mrf.mxu0
        %v3225 = vpop.f32.mrf.mxu0
        %v3226 = vadd.f32 %v3033, %v3225
        %v3227 = vpop.f32.mrf.mxu0
        %3228 = vmatprep.mubr.bf16.mxu0 0
        %3229 = vmatmul.mubr.bf16.gmra.mxu0 %v3076
        %v3230 = vpop.f32.mrf.mxu0
        %v3231 = vadd.f32 %v3033, %v3230
        %v3232 = vpop.f32.mrf.mxu0
        %v3233 = vpop.f32.mrf.mxu0
        %v3234 = vadd.f32 %v3033, %v3233
        %v3235 = vpop.f32.mrf.mxu0
        %3236 = vmatprep.mubr.bf16.mxu0 0
        %3237 = vmatmul.mubr.bf16.gmra.mxu0 %v3079
        %v3238 = vpop.f32.mrf.mxu0
        %v3239 = vadd.f32 %v3033, %v3238
        %v3240 = vpop.f32.mrf.mxu0
        %v3241 = vpop.f32.mrf.mxu0
        %v3242 = vadd.f32 %v3033, %v3241
        %v3243 = vpop.f32.mrf.mxu0
        %3244 = vmatprep.mubr.bf16.mxu0 0
        %3245 = vmatmul.mubr.bf16.gmra.mxu0 %v3082
        %v3246 = vpop.f32.mrf.mxu0
        %v3247 = vadd.f32 %v3033, %v3246
        %v3248 = vpop.f32.mrf.mxu0
        %v3249 = vpop.f32.mrf.mxu0
        %v3250 = vadd.f32 %v3033, %v3249
        %v3251 = vpop.f32.mrf.mxu0
        %3252 = vmatprep.mubr.bf16.mxu0 0
        %3253 = vmatmul.mubr.bf16.gmra.mxu0 %v3085
        %v3254 = vpop.f32.mrf.mxu0
        %v3255 = vadd.f32 %v3033, %v3254
        %v3256 = vpop.f32.mrf.mxu0
        %v3257 = vpop.f32.mrf.mxu0
        %v3258 = vadd.f32 %v3033, %v3257
        %v3259 = vpop.f32.mrf.mxu0
        %3260 = vmatprep.mubr.bf16.mxu0 0
        %3261 = vmatmul.mubr.bf16.gmra.mxu0 %v3088
        %v3262 = vpop.f32.mrf.mxu0
        %v3263 = vadd.f32 %v3033, %v3262
        %v3264 = vpop.f32.mrf.mxu0
        %v3265 = vpop.f32.mrf.mxu0
        %v3266 = vadd.f32 %v3033, %v3265
        %v3267 = vpop.f32.mrf.mxu0
        %3268 = vmatprep.mubr.bf16.mxu0 0
        %3269 = vmatmul.mubr.bf16.gmra.mxu0 %v3091
        %v3270 = vpop.f32.mrf.mxu0
        %v3271 = vadd.f32 %v3033, %v3270
        %v3272 = vpop.f32.mrf.mxu0
        %v3273 = vpop.f32.mrf.mxu0
        %v3274 = vadd.f32 %v3033, %v3273
        %v3275 = vpop.f32.mrf.mxu0
        %3276 = vmatprep.mubr.bf16.mxu0 0
        %3277 = vmatmul.mubr.bf16.gmra.mxu0 %v3094
        %v3278 = vpop.f32.mrf.mxu0
        %v3279 = vadd.f32 %v3033, %v3278
        %v3280 = vpop.f32.mrf.mxu0
        %v3281 = vpop.f32.mrf.mxu0
        %v3282 = vadd.f32 %v3033, %v3281
        %v3283 = vpop.f32.mrf.mxu0
        %3284 = vmatprep.mubr.bf16.mxu0 0
        %3285 = vmatmul.mubr.bf16.gmra.mxu0 %v3097
        %v3286 = vpop.f32.mrf.mxu0
        %v3287 = vadd.f32 %v3033, %v3286
        %v3288 = vpop.f32.mrf.mxu0
        %v3289 = vpop.f32.mrf.mxu0
        %v3290 = vadd.f32 %v3033, %v3289
        %v3291 = vpop.f32.mrf.mxu0
        %3292 = vmatprep.mubr.bf16.mxu0 0
        %3293 = vmatmul.mubr.bf16.gmra.mxu0 %v3100
        %v3294 = vpop.f32.mrf.mxu0
        %v3295 = vadd.f32 %v3033, %v3294
        %v3296 = vpop.f32.mrf.mxu0
        %v3297 = vpop.f32.mrf.mxu0
        %v3298 = vadd.f32 %v3033, %v3297
        %v3299 = vpop.f32.mrf.mxu0
        %3300 = vmatprep.mubr.bf16.mxu0 0
        %3301 = vmatmul.mubr.bf16.gmra.mxu0 %v3103
        %v3302 = vpop.f32.mrf.mxu0
        %v3303 = vadd.f32 %v3033, %v3302
        %v3304 = vpop.f32.mrf.mxu0
        %v3305 = vpop.f32.mrf.mxu0
        %v3306 = vadd.f32 %v3033, %v3305
        %v3307 = vpop.f32.mrf.mxu0
        %3308 = vmatprep.mubr.bf16.mxu0 0
        %3309 = vmatmul.mubr.bf16.gmra.mxu0 %v3106
        %v3310 = vpop.f32.mrf.mxu0
        %v3311 = vadd.f32 %v3033, %v3310
        %v3312 = vpop.f32.mrf.mxu0
        %v3313 = vpop.f32.mrf.mxu0
        %v3314 = vadd.f32 %v3033, %v3313
        %v3315 = vpop.f32.mrf.mxu0
        %3316 = vmatprep.mubr.bf16.mxu0 0
        %3317 = vmatmul.mubr.bf16.gmra.mxu0 %v3109
        %v3318 = vpop.f32.mrf.mxu0
        %v3319 = vadd.f32 %v3033, %v3318
        %v3320 = vpop.f32.mrf.mxu0
        %v3321 = vpop.f32.mrf.mxu0
        %v3322 = vadd.f32 %v3033, %v3321
        %v3323 = vpop.f32.mrf.mxu0
        %3324 = vmatprep.mubr.bf16.mxu0 0
        %3325 = vmatmul.mubr.bf16.gmra.mxu0 %v3112
        %v3326 = vpop.f32.mrf.mxu0
        %v3327 = vadd.f32 %v3033, %v3326
        %v3328 = vpop.f32.mrf.mxu0
        %v3329 = vpop.f32.mrf.mxu0
        %v3330 = vadd.f32 %v3033, %v3329
        %v3331 = vpop.f32.mrf.mxu0
        %3332 = vmatprep.mubr.bf16.mxu0 0
        %3333 = vmatmul.mubr.bf16.gmra.mxu0 %v3115
        %v3334 = vpop.f32.mrf.mxu0
        %v3335 = vadd.f32 %v3033, %v3334
        %v3336 = vpop.f32.mrf.mxu0
        %v3337 = vpop.f32.mrf.mxu0
        %v3338 = vadd.f32 %v3033, %v3337
        %v3339 = vpop.f32.mrf.mxu0
        %3340 = vmatprep.mubr.bf16.mxu0 0
        %3341 = vmatmul.mubr.bf16.gmra.mxu0 %v3118
        %v3342 = vpop.f32.mrf.mxu0
        %v3343 = vadd.f32 %v3033, %v3342
        %v3344 = vpop.f32.mrf.mxu0
        %v3345 = vpop.f32.mrf.mxu0
        %v3346 = vadd.f32 %v3033, %v3345
        %v3347 = vpop.f32.mrf.mxu0
        %3348 = vmatprep.mubr.bf16.mxu0 0
        %3349 = vmatmul.mubr.bf16.gmra.mxu0 %v3121
        %v3350 = vpop.f32.mrf.mxu0
        %v3351 = vadd.f32 %v3033, %v3350
        %v3352 = vpop.f32.mrf.mxu0
        %v3353 = vpop.f32.mrf.mxu0
        %v3354 = vadd.f32 %v3033, %v3353
        %v3355 = vpop.f32.mrf.mxu0
        %3356 = vmatprep.mubr.bf16.mxu0 0
        %3357 = vmatmul.mubr.bf16.gmra.mxu0 %v3124
        %v3358 = vpop.f32.mrf.mxu0
        %v3359 = vadd.f32 %v3033, %v3358
        %v3360 = vpop.f32.mrf.mxu0
        %v3361 = vpop.f32.mrf.mxu0
        %v3362 = vadd.f32 %v3033, %v3361
        %v3363 = vpop.f32.mrf.mxu0
        %3364 = vmatprep.mubr.bf16.mxu0 0
        %3365 = vmatmul.mubr.bf16.gmra.mxu0 %v3127
        %v3366 = vpop.f32.mrf.mxu0
        %v3367 = vadd.f32 %v3033, %v3366
        %v3368 = vpop.f32.mrf.mxu0
        %v3369 = vpop.f32.mrf.mxu0
        %v3370 = vadd.f32 %v3033, %v3369
        %v3371 = vpop.f32.mrf.mxu0
        %3372 = vmatprep.mubr.bf16.mxu0 0
        %3373 = vmatmul.mubr.bf16.gmra.mxu0 %v3130
        %v3374 = vpop.f32.mrf.mxu0
        %v3375 = vadd.f32 %v3033, %v3374
        %v3376 = vpop.f32.mrf.mxu0
        %v3377 = vpop.f32.mrf.mxu0
        %v3378 = vadd.f32 %v3033, %v3377
        %v3379 = vpop.f32.mrf.mxu0
        %3380 = vmatprep.mubr.bf16.mxu0 0
        %3381 = vmatmul.mubr.bf16.gmra.mxu0 %v3133
        %v3382 = vpop.f32.mrf.mxu0
        %v3383 = vadd.f32 %v3033, %v3382
        %v3384 = vpop.f32.mrf.mxu0
        %v3385 = vpop.f32.mrf.mxu0
        %v3386 = vadd.f32 %v3033, %v3385
        %v3387 = vpop.f32.mrf.mxu0
        %3388 = vmatprep.mubr.bf16.mxu0 0
        %3389 = vmatmul.mubr.bf16.gmra.mxu0 %v3136
        %v3390 = vpop.f32.mrf.mxu0
        %v3391 = vadd.f32 %v3033, %v3390
        %v3392 = vpop.f32.mrf.mxu0
        %v3393 = vpop.f32.mrf.mxu0
        %v3394 = vadd.f32 %v3033, %v3393
        %v3395 = vpop.f32.mrf.mxu0
        %3396 = vmatprep.mubr.bf16.mxu0 0
        %3397 = vmatmul.mubr.bf16.gmra.mxu0 %v3139
        %v3398 = vpop.f32.mrf.mxu0
        %v3399 = vadd.f32 %v3033, %v3398
        %v3400 = vpop.f32.mrf.mxu0
        %v3401 = vpop.f32.mrf.mxu0
        %v3402 = vadd.f32 %v3033, %v3401
        %v3403 = vpop.f32.mrf.mxu0
        %3404 = vmatprep.mubr.bf16.mxu0 0
        %3405 = vmatmul.mubr.bf16.gmra.mxu0 %v3142
        %v3406 = vpop.f32.mrf.mxu0
        %v3407 = vadd.f32 %v3033, %v3406
        %v3408 = vpop.f32.mrf.mxu0
        %v3409 = vpop.f32.mrf.mxu0
        %v3410 = vadd.f32 %v3033, %v3409
        %v3411 = vpop.f32.mrf.mxu0
        %3412 = vmatprep.mubr.bf16.mxu0 0
        %3413 = vmatmul.mubr.bf16.gmra.mxu0 %v3145
        %v3414 = vpop.f32.mrf.mxu0
        %v3415 = vadd.f32 %v3033, %v3414
        %v3416 = vpop.f32.mrf.mxu0
        %v3417 = vpop.f32.mrf.mxu0
        %v3418 = vadd.f32 %v3033, %v3417
        %v3419 = vpop.f32.mrf.mxu0
        %3420 = vmatprep.mubr.bf16.mxu0 0
        %3421 = vmatmul.mubr.bf16.gmra.mxu0 %v3148
        %v3422 = vpop.f32.mrf.mxu0
        %v3423 = vadd.f32 %v3033, %v3422
        %v3424 = vpop.f32.mrf.mxu0
        %v3425 = vpop.f32.mrf.mxu0
        %v3426 = vadd.f32 %v3033, %v3425
        %v3427 = vpop.f32.mrf.mxu0
        %3428 = vmatprep.mubr.bf16.mxu0 0
        %3429 = vmatmul.mubr.bf16.gmra.mxu0 %v3151
        %v3430 = vpop.f32.mrf.mxu0
        %v3431 = vadd.f32 %v3033, %v3430
        %v3432 = vpop.f32.mrf.mxu0
        %v3433 = vpop.f32.mrf.mxu0
        %v3434 = vadd.f32 %v3033, %v3433
        %v3435 = vpop.f32.mrf.mxu0
        %3436 = vmatprep.mubr.bf16.mxu0 0
        %3437 = vmatmul.mubr.bf16.gmra.mxu0 %v3154
        %v3438 = vpop.f32.mrf.mxu0
        %v3439 = vadd.f32 %v3033, %v3438
        %v3440 = vpop.f32.mrf.mxu0
        %v3441 = vpop.f32.mrf.mxu0
        %v3442 = vadd.f32 %v3033, %v3441
        %v3443 = vpop.f32.mrf.mxu0
        %3444 = vdwg.mxu0
        %v3445 = vmax.f32 %v3191, 0.0
        %v3446 = vmax.f32 %v3194, 0.0
        %v3447 = vmax.f32 %v3199, 0.0
        %v3448 = vmax.f32 %v3202, 0.0
        %v3449 = vmax.f32 %v3207, 0.0
        %v3450 = vmax.f32 %v3210, 0.0
        %v3451 = vmax.f32 %v3215, 0.0
        %v3452 = vmax.f32 %v3218, 0.0
        %v3453 = vmax.f32 %v3223, 0.0
        %v3454 = vmax.f32 %v3226, 0.0
        %v3455 = vmax.f32 %v3231, 0.0
        %v3456 = vmax.f32 %v3234, 0.0
        %v3457 = vmax.f32 %v3239, 0.0
        %v3458 = vmax.f32 %v3242, 0.0
        %v3459 = vmax.f32 %v3247, 0.0
        %v3460 = vmax.f32 %v3250, 0.0
        %v3461 = vmax.f32 %v3255, 0.0
        %v3462 = vmax.f32 %v3258, 0.0
        %v3463 = vmax.f32 %v3263, 0.0
        %v3464 = vmax.f32 %v3266, 0.0
        %v3465 = vmax.f32 %v3271, 0.0
        %v3466 = vmax.f32 %v3274, 0.0
        %v3467 = vmax.f32 %v3279, 0.0
        %v3468 = vmax.f32 %v3282, 0.0
        %v3469 = vmax.f32 %v3287, 0.0
        %v3470 = vmax.f32 %v3290, 0.0
        %v3471 = vmax.f32 %v3295, 0.0
        %v3472 = vmax.f32 %v3298, 0.0
        %v3473 = vmax.f32 %v3303, 0.0
        %v3474 = vmax.f32 %v3306, 0.0
        %v3475 = vmax.f32 %v3311, 0.0
        %v3476 = vmax.f32 %v3314, 0.0
        %v3477 = vmax.f32 %v3319, 0.0
        %v3478 = vmax.f32 %v3322, 0.0
        %v3479 = vmax.f32 %v3327, 0.0
        %v3480 = vmax.f32 %v3330, 0.0
        %v3481 = vmax.f32 %v3335, 0.0
        %v3482 = vmax.f32 %v3338, 0.0
        %v3483 = vmax.f32 %v3343, 0.0
        %v3484 = vmax.f32 %v3346, 0.0
        %v3485 = vmax.f32 %v3351, 0.0
        %v3486 = vmax.f32 %v3354, 0.0
        %v3487 = vmax.f32 %v3359, 0.0
        %v3488 = vmax.f32 %v3362, 0.0
        %v3489 = vmax.f32 %v3367, 0.0
        %v3490 = vmax.f32 %v3370, 0.0
        %v3491 = vmax.f32 %v3375, 0.0
        %v3492 = vmax.f32 %v3378, 0.0
        %v3493 = vmax.f32 %v3383, 0.0
        %v3494 = vmax.f32 %v3386, 0.0
        %v3495 = vmax.f32 %v3391, 0.0
        %v3496 = vmax.f32 %v3394, 0.0
        %v3497 = vmax.f32 %v3399, 0.0
        %v3498 = vmax.f32 %v3402, 0.0
        %v3499 = vmax.f32 %v3407, 0.0
        %v3500 = vmax.f32 %v3410, 0.0
        %v3501 = vmax.f32 %v3415, 0.0
        %v3502 = vmax.f32 %v3418, 0.0
        %v3503 = vmax.f32 %v3423, 0.0
        %v3504 = vmax.f32 %v3426, 0.0
        %v3505 = vmax.f32 %v3431, 0.0
        %v3506 = vmax.f32 %v3434, 0.0
        %v3507 = vmax.f32 %v3439, 0.0
        %v3508 = vmax.f32 %v3442, 0.0
        %v3509 = vpack.c.bf16 %v3446, %v3445
        %v3510 = vpack.c.bf16 %v3448, %v3447
        %v3511 = vpack.c.bf16 %v3450, %v3449
        %v3512 = vpack.c.bf16 %v3452, %v3451
        %v3513 = vpack.c.bf16 %v3454, %v3453
        %v3514 = vpack.c.bf16 %v3456, %v3455
        %v3515 = vpack.c.bf16 %v3458, %v3457
        %v3516 = vpack.c.bf16 %v3460, %v3459
        %v3517 = vpack.c.bf16 %v3462, %v3461
        %v3518 = vpack.c.bf16 %v3464, %v3463
        %v3519 = vpack.c.bf16 %v3466, %v3465
        %v3520 = vpack.c.bf16 %v3468, %v3467
        %v3521 = vpack.c.bf16 %v3470, %v3469
        %v3522 = vpack.c.bf16 %v3472, %v3471
        %v3523 = vpack.c.bf16 %v3474, %v3473
        %v3524 = vpack.c.bf16 %v3476, %v3475
        %v3525 = vpack.c.bf16 %v3478, %v3477
        %v3526 = vpack.c.bf16 %v3480, %v3479
        %v3527 = vpack.c.bf16 %v3482, %v3481
        %v3528 = vpack.c.bf16 %v3484, %v3483
        %v3529 = vpack.c.bf16 %v3486, %v3485
        %v3530 = vpack.c.bf16 %v3488, %v3487
        %v3531 = vpack.c.bf16 %v3490, %v3489
        %v3532 = vpack.c.bf16 %v3492, %v3491
        %v3533 = vpack.c.bf16 %v3494, %v3493
        %v3534 = vpack.c.bf16 %v3496, %v3495
        %v3535 = vpack.c.bf16 %v3498, %v3497
        %v3536 = vpack.c.bf16 %v3500, %v3499
        %v3537 = vpack.c.bf16 %v3502, %v3501
        %v3538 = vpack.c.bf16 %v3504, %v3503
        %v3539 = vpack.c.bf16 %v3506, %v3505
        %v3540 = vpack.c.bf16 %v3508, %v3507
        %v3541 = vld [vmem:[%s7] sm:$0xff]
        %v3542 = vld [vmem:[%s7 + $0x8] sm:$0xff]
        %v3543 = vld [vmem:[%s7 + $0x10] sm:$0xff]
        %v3544 = vld [vmem:[%s7 + $0x18] sm:$0xff]
        %v3545 = vld [vmem:[%s7 + $0x20] sm:$0xff]
        %v3546 = vld [vmem:[%s7 + $0x28] sm:$0xff]
        %v3547 = vld [vmem:[%s7 + $0x30] sm:$0xff]
        %v3548 = vld [vmem:[%s7 + $0x38] sm:$0xff]
        %v3549 = vld [vmem:[%s8] sm:$0x3]
        %v3551 = vlaneseq
        %v3552 = vshrl.u32 %v3551, 7
        %v3553 = vsub.s32 0, %v3552
        %v3554 = vrot.slane %v3549, %v3553
        %v3555 = vlaneseq
        %v3556 = vshrl.u32 %v3555, 7
        %v3557 = vsub.s32 1, %v3556
        %v3558 = vrot.slane %v3549, %v3557
        %v3569 = vunpack.c.l.b16 %v3541
        %v3570 = vunpack.c.h.b16 %v3541
        %v3571 = vunpack.c.l.b16 %v3542
        %v3572 = vunpack.c.h.b16 %v3542
        %v3573 = vunpack.c.l.b16 %v3543
        %v3574 = vunpack.c.h.b16 %v3543
        %v3575 = vunpack.c.l.b16 %v3544
        %v3576 = vunpack.c.h.b16 %v3544
        %v3577 = vunpack.c.l.b16 %v3545
        %v3578 = vunpack.c.h.b16 %v3545
        %v3579 = vunpack.c.l.b16 %v3546
        %v3580 = vunpack.c.h.b16 %v3546
        %v3581 = vunpack.c.l.b16 %v3547
        %v3582 = vunpack.c.h.b16 %v3547
        %v3583 = vunpack.c.l.b16 %v3548
        %v3584 = vunpack.c.h.b16 %v3548
        %v3585 = vpack.c.b16 %v3571, %v3569
        %v3586 = vpack.c.b16 %v3572, %v3570
        %v3587 = vpack.c.b16 %v3575, %v3573
        %v3588 = vpack.c.b16 %v3576, %v3574
        %v3589 = vpack.c.b16 %v3579, %v3577
        %v3590 = vpack.c.b16 %v3580, %v3578
        %v3591 = vpack.c.b16 %v3583, %v3581
        %v3592 = vpack.c.b16 %v3584, %v3582
        %v3602 = vsel %vm3059, %v3509, 0
        %v3605 = vsel %vm3059, %v3510, 0
        %v3608 = vsel %vm3059, %v3511, 0
        %v3611 = vsel %vm3059, %v3512, 0
        %v3614 = vsel %vm3059, %v3513, 0
        %v3617 = vsel %vm3059, %v3514, 0
        %v3620 = vsel %vm3059, %v3515, 0
        %v3623 = vsel %vm3059, %v3516, 0
        %v3626 = vsel %vm3059, %v3517, 0
        %v3629 = vsel %vm3059, %v3518, 0
        %v3632 = vsel %vm3059, %v3519, 0
        %v3635 = vsel %vm3059, %v3520, 0
        %v3638 = vsel %vm3059, %v3521, 0
        %v3641 = vsel %vm3059, %v3522, 0
        %v3644 = vsel %vm3059, %v3523, 0
        %v3647 = vsel %vm3059, %v3524, 0
        %v3650 = vsel %vm3059, %v3525, 0
        %v3653 = vsel %vm3059, %v3526, 0
        %v3656 = vsel %vm3059, %v3527, 0
        %v3659 = vsel %vm3059, %v3528, 0
        %v3662 = vsel %vm3059, %v3529, 0
        %v3665 = vsel %vm3059, %v3530, 0
        %v3668 = vsel %vm3059, %v3531, 0
        %v3671 = vsel %vm3059, %v3532, 0
        %v3674 = vsel %vm3059, %v3533, 0
        %v3677 = vsel %vm3059, %v3534, 0
        %v3680 = vsel %vm3059, %v3535, 0
        %v3683 = vsel %vm3059, %v3536, 0
        %v3686 = vsel %vm3059, %v3537, 0
        %v3689 = vsel %vm3059, %v3538, 0
        %v3692 = vsel %vm3059, %v3539, 0
        %v3695 = vsel %vm3059, %v3540, 0
        %3697 = vmatprep.subr.bf16.mxu0 0
        %3698 = vmatpush1.bf16.msra.mxu0 0
        %3699 = vmatprep.subr.bf16.mxu0 0
        %3700 = vmatpush1.bf16.msra.mxu0 0
        %3701 = vmatprep.subr.bf16.mxu0 0
        %3702 = vmatpush1.bf16.msra.mxu0 0
        %3703 = vmatprep.subr.bf16.mxu0 0
        %3704 = vmatpush1.bf16.msra.mxu0 0
        %3705 = vmatprep.subr.bf16.mxu0 %v3592
        %3706 = vmatpush1.bf16.msra.mxu0 %v3591
        %3707 = vmatprep.subr.bf16.mxu0 %v3590
        %3708 = vmatpush1.bf16.msra.mxu0 %v3589
        %3709 = vmatprep.subr.bf16.mxu0 %v3588
        %3710 = vmatpush1.bf16.msra.mxu0 %v3587
        %3711 = vmatprep.subr.bf16.mxu0 %v3586
        %3712 = vmatpush1.bf16.msra.mxu0 %v3585
        %3713 = vmatprep.subr.bf16.mxu0 0
        %3714 = vmatpush2.bf16.msra.mxu0 0
        %3715 = vmatprep.subr.bf16.mxu0 0
        %3716 = vmatpush2.bf16.msra.mxu0 0
        %3717 = vmatprep.subr.bf16.mxu0 0
        %3718 = vmatpush2.bf16.msra.mxu0 0
        %3719 = vmatprep.subr.bf16.mxu0 0
        %3720 = vmatpush2.bf16.msra.mxu0 0
        %3721 = vmatprep.subr.bf16.mxu0 0
        %3722 = vmatpush2.bf16.msra.mxu0 0
        %3723 = vmatprep.subr.bf16.mxu0 0
        %3724 = vmatpush2.bf16.msra.mxu0 0
        %3725 = vmatprep.subr.bf16.mxu0 0
        %3726 = vmatpush2.bf16.msra.mxu0 0
        %3727 = vmatprep.subr.bf16.mxu0 0
        %3728 = vmatpush2.bf16.msra.mxu0 0
        %3729 = vmatprep.mubr.bf16.mxu0 0
        %3730 = vmatmul.mubr.bf16.gmra.mxu0 %v3602
        %v3731 = vpop.f32.mrf.mxu0
        %v3732 = vadd.f32 %v3554, %v3731
        %v3733 = vpop.f32.mrf.mxu0
        %v3734 = vadd.f32 %v3558, %v3733
        %v3735 = vpop.f32.mrf.mxu0
        %v3736 = vadd.f32 %v3554, %v3735
        %v3737 = vpop.f32.mrf.mxu0
        %v3738 = vadd.f32 %v3558, %v3737
        %3739 = vmatprep.mubr.bf16.mxu0 0
        %3740 = vmatmul.mubr.bf16.gmra.mxu0 %v3605
        %v3741 = vpop.f32.mrf.mxu0
        %v3742 = vadd.f32 %v3554, %v3741
        %v3743 = vpop.f32.mrf.mxu0
        %v3744 = vadd.f32 %v3558, %v3743
        %v3745 = vpop.f32.mrf.mxu0
        %v3746 = vadd.f32 %v3554, %v3745
        %v3747 = vpop.f32.mrf.mxu0
        %v3748 = vadd.f32 %v3558, %v3747
        %3749 = vmatprep.mubr.bf16.mxu0 0
        %3750 = vmatmul.mubr.bf16.gmra.mxu0 %v3608
        %v3751 = vpop.f32.mrf.mxu0
        %v3752 = vadd.f32 %v3554, %v3751
        %v3753 = vpop.f32.mrf.mxu0
        %v3754 = vadd.f32 %v3558, %v3753
        %v3755 = vpop.f32.mrf.mxu0
        %v3756 = vadd.f32 %v3554, %v3755
        %v3757 = vpop.f32.mrf.mxu0
        %v3758 = vadd.f32 %v3558, %v3757
        %3759 = vmatprep.mubr.bf16.mxu0 0
        %3760 = vmatmul.mubr.bf16.gmra.mxu0 %v3611
        %v3761 = vpop.f32.mrf.mxu0
        %v3762 = vadd.f32 %v3554, %v3761
        %v3763 = vpop.f32.mrf.mxu0
        %v3764 = vadd.f32 %v3558, %v3763
        %v3765 = vpop.f32.mrf.mxu0
        %v3766 = vadd.f32 %v3554, %v3765
        %v3767 = vpop.f32.mrf.mxu0
        %v3768 = vadd.f32 %v3558, %v3767
        %3769 = vmatprep.mubr.bf16.mxu0 0
        %3770 = vmatmul.mubr.bf16.gmra.mxu0 %v3614
        %v3771 = vpop.f32.mrf.mxu0
        %v3772 = vadd.f32 %v3554, %v3771
        %v3773 = vpop.f32.mrf.mxu0
        %v3774 = vadd.f32 %v3558, %v3773
        %v3775 = vpop.f32.mrf.mxu0
        %v3776 = vadd.f32 %v3554, %v3775
        %v3777 = vpop.f32.mrf.mxu0
        %v3778 = vadd.f32 %v3558, %v3777
        %3779 = vmatprep.mubr.bf16.mxu0 0
        %3780 = vmatmul.mubr.bf16.gmra.mxu0 %v3617
        %v3781 = vpop.f32.mrf.mxu0
        %v3782 = vadd.f32 %v3554, %v3781
        %v3783 = vpop.f32.mrf.mxu0
        %v3784 = vadd.f32 %v3558, %v3783
        %v3785 = vpop.f32.mrf.mxu0
        %v3786 = vadd.f32 %v3554, %v3785
        %v3787 = vpop.f32.mrf.mxu0
        %v3788 = vadd.f32 %v3558, %v3787
        %3789 = vmatprep.mubr.bf16.mxu0 0
        %3790 = vmatmul.mubr.bf16.gmra.mxu0 %v3620
        %v3791 = vpop.f32.mrf.mxu0
        %v3792 = vadd.f32 %v3554, %v3791
        %v3793 = vpop.f32.mrf.mxu0
        %v3794 = vadd.f32 %v3558, %v3793
        %v3795 = vpop.f32.mrf.mxu0
        %v3796 = vadd.f32 %v3554, %v3795
        %v3797 = vpop.f32.mrf.mxu0
        %v3798 = vadd.f32 %v3558, %v3797
        %3799 = vmatprep.mubr.bf16.mxu0 0
        %3800 = vmatmul.mubr.bf16.gmra.mxu0 %v3623
        %v3801 = vpop.f32.mrf.mxu0
        %v3802 = vadd.f32 %v3554, %v3801
        %v3803 = vpop.f32.mrf.mxu0
        %v3804 = vadd.f32 %v3558, %v3803
        %v3805 = vpop.f32.mrf.mxu0
        %v3806 = vadd.f32 %v3554, %v3805
        %v3807 = vpop.f32.mrf.mxu0
        %v3808 = vadd.f32 %v3558, %v3807
        %3809 = vmatprep.mubr.bf16.mxu0 0
        %3810 = vmatmul.mubr.bf16.gmra.mxu0 %v3626
        %v3811 = vpop.f32.mrf.mxu0
        %v3812 = vadd.f32 %v3554, %v3811
        %v3813 = vpop.f32.mrf.mxu0
        %v3814 = vadd.f32 %v3558, %v3813
        %v3815 = vpop.f32.mrf.mxu0
        %v3816 = vadd.f32 %v3554, %v3815
        %v3817 = vpop.f32.mrf.mxu0
        %v3818 = vadd.f32 %v3558, %v3817
        %3819 = vmatprep.mubr.bf16.mxu0 0
        %3820 = vmatmul.mubr.bf16.gmra.mxu0 %v3629
        %v3821 = vpop.f32.mrf.mxu0
        %v3822 = vadd.f32 %v3554, %v3821
        %v3823 = vpop.f32.mrf.mxu0
        %v3824 = vadd.f32 %v3558, %v3823
        %v3825 = vpop.f32.mrf.mxu0
        %v3826 = vadd.f32 %v3554, %v3825
        %v3827 = vpop.f32.mrf.mxu0
        %v3828 = vadd.f32 %v3558, %v3827
        %3829 = vmatprep.mubr.bf16.mxu0 0
        %3830 = vmatmul.mubr.bf16.gmra.mxu0 %v3632
        %v3831 = vpop.f32.mrf.mxu0
        %v3832 = vadd.f32 %v3554, %v3831
        %v3833 = vpop.f32.mrf.mxu0
        %v3834 = vadd.f32 %v3558, %v3833
        %v3835 = vpop.f32.mrf.mxu0
        %v3836 = vadd.f32 %v3554, %v3835
        %v3837 = vpop.f32.mrf.mxu0
        %v3838 = vadd.f32 %v3558, %v3837
        %3839 = vmatprep.mubr.bf16.mxu0 0
        %3840 = vmatmul.mubr.bf16.gmra.mxu0 %v3635
        %v3841 = vpop.f32.mrf.mxu0
        %v3842 = vadd.f32 %v3554, %v3841
        %v3843 = vpop.f32.mrf.mxu0
        %v3844 = vadd.f32 %v3558, %v3843
        %v3845 = vpop.f32.mrf.mxu0
        %v3846 = vadd.f32 %v3554, %v3845
        %v3847 = vpop.f32.mrf.mxu0
        %v3848 = vadd.f32 %v3558, %v3847
        %3849 = vmatprep.mubr.bf16.mxu0 0
        %3850 = vmatmul.mubr.bf16.gmra.mxu0 %v3638
        %v3851 = vpop.f32.mrf.mxu0
        %v3852 = vadd.f32 %v3554, %v3851
        %v3853 = vpop.f32.mrf.mxu0
        %v3854 = vadd.f32 %v3558, %v3853
        %v3855 = vpop.f32.mrf.mxu0
        %v3856 = vadd.f32 %v3554, %v3855
        %v3857 = vpop.f32.mrf.mxu0
        %v3858 = vadd.f32 %v3558, %v3857
        %3859 = vmatprep.mubr.bf16.mxu0 0
        %3860 = vmatmul.mubr.bf16.gmra.mxu0 %v3641
        %v3861 = vpop.f32.mrf.mxu0
        %v3862 = vadd.f32 %v3554, %v3861
        %v3863 = vpop.f32.mrf.mxu0
        %v3864 = vadd.f32 %v3558, %v3863
        %v3865 = vpop.f32.mrf.mxu0
        %v3866 = vadd.f32 %v3554, %v3865
        %v3867 = vpop.f32.mrf.mxu0
        %v3868 = vadd.f32 %v3558, %v3867
        %3869 = vmatprep.mubr.bf16.mxu0 0
        %3870 = vmatmul.mubr.bf16.gmra.mxu0 %v3644
        %v3871 = vpop.f32.mrf.mxu0
        %v3872 = vadd.f32 %v3554, %v3871
        %v3873 = vpop.f32.mrf.mxu0
        %v3874 = vadd.f32 %v3558, %v3873
        %v3875 = vpop.f32.mrf.mxu0
        %v3876 = vadd.f32 %v3554, %v3875
        %v3877 = vpop.f32.mrf.mxu0
        %v3878 = vadd.f32 %v3558, %v3877
        %3879 = vmatprep.mubr.bf16.mxu0 0
        %3880 = vmatmul.mubr.bf16.gmra.mxu0 %v3647
        %v3881 = vpop.f32.mrf.mxu0
        %v3882 = vadd.f32 %v3554, %v3881
        %v3883 = vpop.f32.mrf.mxu0
        %v3884 = vadd.f32 %v3558, %v3883
        %v3885 = vpop.f32.mrf.mxu0
        %v3886 = vadd.f32 %v3554, %v3885
        %v3887 = vpop.f32.mrf.mxu0
        %v3888 = vadd.f32 %v3558, %v3887
        %3889 = vmatprep.mubr.bf16.mxu0 0
        %3890 = vmatmul.mubr.bf16.gmra.mxu0 %v3650
        %v3891 = vpop.f32.mrf.mxu0
        %v3892 = vadd.f32 %v3554, %v3891
        %v3893 = vpop.f32.mrf.mxu0
        %v3894 = vadd.f32 %v3558, %v3893
        %v3895 = vpop.f32.mrf.mxu0
        %v3896 = vadd.f32 %v3554, %v3895
        %v3897 = vpop.f32.mrf.mxu0
        %v3898 = vadd.f32 %v3558, %v3897
        %3899 = vmatprep.mubr.bf16.mxu0 0
        %3900 = vmatmul.mubr.bf16.gmra.mxu0 %v3653
        %v3901 = vpop.f32.mrf.mxu0
        %v3902 = vadd.f32 %v3554, %v3901
        %v3903 = vpop.f32.mrf.mxu0
        %v3904 = vadd.f32 %v3558, %v3903
        %v3905 = vpop.f32.mrf.mxu0
        %v3906 = vadd.f32 %v3554, %v3905
        %v3907 = vpop.f32.mrf.mxu0
        %v3908 = vadd.f32 %v3558, %v3907
        %3909 = vmatprep.mubr.bf16.mxu0 0
        %3910 = vmatmul.mubr.bf16.gmra.mxu0 %v3656
        %v3911 = vpop.f32.mrf.mxu0
        %v3912 = vadd.f32 %v3554, %v3911
        %v3913 = vpop.f32.mrf.mxu0
        %v3914 = vadd.f32 %v3558, %v3913
        %v3915 = vpop.f32.mrf.mxu0
        %v3916 = vadd.f32 %v3554, %v3915
        %v3917 = vpop.f32.mrf.mxu0
        %v3918 = vadd.f32 %v3558, %v3917
        %3919 = vmatprep.mubr.bf16.mxu0 0
        %3920 = vmatmul.mubr.bf16.gmra.mxu0 %v3659
        %v3921 = vpop.f32.mrf.mxu0
        %v3922 = vadd.f32 %v3554, %v3921
        %v3923 = vpop.f32.mrf.mxu0
        %v3924 = vadd.f32 %v3558, %v3923
        %v3925 = vpop.f32.mrf.mxu0
        %v3926 = vadd.f32 %v3554, %v3925
        %v3927 = vpop.f32.mrf.mxu0
        %v3928 = vadd.f32 %v3558, %v3927
        %3929 = vmatprep.mubr.bf16.mxu0 0
        %3930 = vmatmul.mubr.bf16.gmra.mxu0 %v3662
        %v3931 = vpop.f32.mrf.mxu0
        %v3932 = vadd.f32 %v3554, %v3931
        %v3933 = vpop.f32.mrf.mxu0
        %v3934 = vadd.f32 %v3558, %v3933
        %v3935 = vpop.f32.mrf.mxu0
        %v3936 = vadd.f32 %v3554, %v3935
        %v3937 = vpop.f32.mrf.mxu0
        %v3938 = vadd.f32 %v3558, %v3937
        %3939 = vmatprep.mubr.bf16.mxu0 0
        %3940 = vmatmul.mubr.bf16.gmra.mxu0 %v3665
        %v3941 = vpop.f32.mrf.mxu0
        %v3942 = vadd.f32 %v3554, %v3941
        %v3943 = vpop.f32.mrf.mxu0
        %v3944 = vadd.f32 %v3558, %v3943
        %v3945 = vpop.f32.mrf.mxu0
        %v3946 = vadd.f32 %v3554, %v3945
        %v3947 = vpop.f32.mrf.mxu0
        %v3948 = vadd.f32 %v3558, %v3947
        %3949 = vmatprep.mubr.bf16.mxu0 0
        %3950 = vmatmul.mubr.bf16.gmra.mxu0 %v3668
        %v3951 = vpop.f32.mrf.mxu0
        %v3952 = vadd.f32 %v3554, %v3951
        %v3953 = vpop.f32.mrf.mxu0
        %v3954 = vadd.f32 %v3558, %v3953
        %v3955 = vpop.f32.mrf.mxu0
        %v3956 = vadd.f32 %v3554, %v3955
        %v3957 = vpop.f32.mrf.mxu0
        %v3958 = vadd.f32 %v3558, %v3957
        %3959 = vmatprep.mubr.bf16.mxu0 0
        %3960 = vmatmul.mubr.bf16.gmra.mxu0 %v3671
        %v3961 = vpop.f32.mrf.mxu0
        %v3962 = vadd.f32 %v3554, %v3961
        %v3963 = vpop.f32.mrf.mxu0
        %v3964 = vadd.f32 %v3558, %v3963
        %v3965 = vpop.f32.mrf.mxu0
        %v3966 = vadd.f32 %v3554, %v3965
        %v3967 = vpop.f32.mrf.mxu0
        %v3968 = vadd.f32 %v3558, %v3967
        %3969 = vmatprep.mubr.bf16.mxu0 0
        %3970 = vmatmul.mubr.bf16.gmra.mxu0 %v3674
        %v3971 = vpop.f32.mrf.mxu0
        %v3972 = vadd.f32 %v3554, %v3971
        %v3973 = vpop.f32.mrf.mxu0
        %v3974 = vadd.f32 %v3558, %v3973
        %v3975 = vpop.f32.mrf.mxu0
        %v3976 = vadd.f32 %v3554, %v3975
        %v3977 = vpop.f32.mrf.mxu0
        %v3978 = vadd.f32 %v3558, %v3977
        %3979 = vmatprep.mubr.bf16.mxu0 0
        %3980 = vmatmul.mubr.bf16.gmra.mxu0 %v3677
        %v3981 = vpop.f32.mrf.mxu0
        %v3982 = vadd.f32 %v3554, %v3981
        %v3983 = vpop.f32.mrf.mxu0
        %v3984 = vadd.f32 %v3558, %v3983
        %v3985 = vpop.f32.mrf.mxu0
        %v3986 = vadd.f32 %v3554, %v3985
        %v3987 = vpop.f32.mrf.mxu0
        %v3988 = vadd.f32 %v3558, %v3987
        %3989 = vmatprep.mubr.bf16.mxu0 0
        %3990 = vmatmul.mubr.bf16.gmra.mxu0 %v3680
        %v3991 = vpop.f32.mrf.mxu0
        %v3992 = vadd.f32 %v3554, %v3991
        %v3993 = vpop.f32.mrf.mxu0
        %v3994 = vadd.f32 %v3558, %v3993
        %v3995 = vpop.f32.mrf.mxu0
        %v3996 = vadd.f32 %v3554, %v3995
        %v3997 = vpop.f32.mrf.mxu0
        %v3998 = vadd.f32 %v3558, %v3997
        %3999 = vmatprep.mubr.bf16.mxu0 0
        %4000 = vmatmul.mubr.bf16.gmra.mxu0 %v3683
        %v4001 = vpop.f32.mrf.mxu0
        %v4002 = vadd.f32 %v3554, %v4001
        %v4003 = vpop.f32.mrf.mxu0
        %v4004 = vadd.f32 %v3558, %v4003
        %v4005 = vpop.f32.mrf.mxu0
        %v4006 = vadd.f32 %v3554, %v4005
        %v4007 = vpop.f32.mrf.mxu0
        %v4008 = vadd.f32 %v3558, %v4007
        %4009 = vmatprep.mubr.bf16.mxu0 0
        %4010 = vmatmul.mubr.bf16.gmra.mxu0 %v3686
        %v4011 = vpop.f32.mrf.mxu0
        %v4012 = vadd.f32 %v3554, %v4011
        %v4013 = vpop.f32.mrf.mxu0
        %v4014 = vadd.f32 %v3558, %v4013
        %v4015 = vpop.f32.mrf.mxu0
        %v4016 = vadd.f32 %v3554, %v4015
        %v4017 = vpop.f32.mrf.mxu0
        %v4018 = vadd.f32 %v3558, %v4017
        %4019 = vmatprep.mubr.bf16.mxu0 0
        %4020 = vmatmul.mubr.bf16.gmra.mxu0 %v3689
        %v4021 = vpop.f32.mrf.mxu0
        %v4022 = vadd.f32 %v3554, %v4021
        %v4023 = vpop.f32.mrf.mxu0
        %v4024 = vadd.f32 %v3558, %v4023
        %v4025 = vpop.f32.mrf.mxu0
        %v4026 = vadd.f32 %v3554, %v4025
        %v4027 = vpop.f32.mrf.mxu0
        %v4028 = vadd.f32 %v3558, %v4027
        %4029 = vmatprep.mubr.bf16.mxu0 0
        %4030 = vmatmul.mubr.bf16.gmra.mxu0 %v3692
        %v4031 = vpop.f32.mrf.mxu0
        %v4032 = vadd.f32 %v3554, %v4031
        %v4033 = vpop.f32.mrf.mxu0
        %v4034 = vadd.f32 %v3558, %v4033
        %v4035 = vpop.f32.mrf.mxu0
        %v4036 = vadd.f32 %v3554, %v4035
        %v4037 = vpop.f32.mrf.mxu0
        %v4038 = vadd.f32 %v3558, %v4037
        %4039 = vmatprep.mubr.bf16.mxu0 0
        %4040 = vmatmul.mubr.bf16.gmra.mxu0 %v3695
        %v4041 = vpop.f32.mrf.mxu0
        %v4042 = vadd.f32 %v3554, %v4041
        %v4043 = vpop.f32.mrf.mxu0
        %v4044 = vadd.f32 %v3558, %v4043
        %v4045 = vpop.f32.mrf.mxu0
        %v4046 = vadd.f32 %v3554, %v4045
        %v4047 = vpop.f32.mrf.mxu0
        %v4048 = vadd.f32 %v3558, %v4047
        %4049 = vdwg.mxu0
        %v4050 = vmax.f32 %v3732, 0.0
        %v4051 = vmax.f32 %v3734, 0.0
        %v4052 = vmax.f32 %v3736, 0.0
        %v4053 = vmax.f32 %v3738, 0.0
        %v4054 = vmax.f32 %v3742, 0.0
        %v4055 = vmax.f32 %v3744, 0.0
        %v4056 = vmax.f32 %v3746, 0.0
        %v4057 = vmax.f32 %v3748, 0.0
        %v4058 = vmax.f32 %v3752, 0.0
        %v4059 = vmax.f32 %v3754, 0.0
        %v4060 = vmax.f32 %v3756, 0.0
        %v4061 = vmax.f32 %v3758, 0.0
        %v4062 = vmax.f32 %v3762, 0.0
        %v4063 = vmax.f32 %v3764, 0.0
        %v4064 = vmax.f32 %v3766, 0.0
        %v4065 = vmax.f32 %v3768, 0.0
        %v4066 = vmax.f32 %v3772, 0.0
        %v4067 = vmax.f32 %v3774, 0.0
        %v4068 = vmax.f32 %v3776, 0.0
        %v4069 = vmax.f32 %v3778, 0.0
        %v4070 = vmax.f32 %v3782, 0.0
        %v4071 = vmax.f32 %v3784, 0.0
        %v4072 = vmax.f32 %v3786, 0.0
        %v4073 = vmax.f32 %v3788, 0.0
        %v4074 = vmax.f32 %v3792, 0.0
        %v4075 = vmax.f32 %v3794, 0.0
        %v4076 = vmax.f32 %v3796, 0.0
        %v4077 = vmax.f32 %v3798, 0.0
        %v4078 = vmax.f32 %v3802, 0.0
        %v4079 = vmax.f32 %v3804, 0.0
        %v4080 = vmax.f32 %v3806, 0.0
        %v4081 = vmax.f32 %v3808, 0.0
        %v4082 = vmax.f32 %v3812, 0.0
        %v4083 = vmax.f32 %v3814, 0.0
        %v4084 = vmax.f32 %v3816, 0.0
        %v4085 = vmax.f32 %v3818, 0.0
        %v4086 = vmax.f32 %v3822, 0.0
        %v4087 = vmax.f32 %v3824, 0.0
        %v4088 = vmax.f32 %v3826, 0.0
        %v4089 = vmax.f32 %v3828, 0.0
        %v4090 = vmax.f32 %v3832, 0.0
        %v4091 = vmax.f32 %v3834, 0.0
        %v4092 = vmax.f32 %v3836, 0.0
        %v4093 = vmax.f32 %v3838, 0.0
        %v4094 = vmax.f32 %v3842, 0.0
        %v4095 = vmax.f32 %v3844, 0.0
        %v4096 = vmax.f32 %v3846, 0.0
        %v4097 = vmax.f32 %v3848, 0.0
        %v4098 = vmax.f32 %v3852, 0.0
        %v4099 = vmax.f32 %v3854, 0.0
        %v4100 = vmax.f32 %v3856, 0.0
        %v4101 = vmax.f32 %v3858, 0.0
        %v4102 = vmax.f32 %v3862, 0.0
        %v4103 = vmax.f32 %v3864, 0.0
        %v4104 = vmax.f32 %v3866, 0.0
        %v4105 = vmax.f32 %v3868, 0.0
        %v4106 = vmax.f32 %v3872, 0.0
        %v4107 = vmax.f32 %v3874, 0.0
        %v4108 = vmax.f32 %v3876, 0.0
        %v4109 = vmax.f32 %v3878, 0.0
        %v4110 = vmax.f32 %v3882, 0.0
        %v4111 = vmax.f32 %v3884, 0.0
        %v4112 = vmax.f32 %v3886, 0.0
        %v4113 = vmax.f32 %v3888, 0.0
        %v4114 = vmax.f32 %v3892, 0.0
        %v4115 = vmax.f32 %v3894, 0.0
        %v4116 = vmax.f32 %v3896, 0.0
        %v4117 = vmax.f32 %v3898, 0.0
        %v4118 = vmax.f32 %v3902, 0.0
        %v4119 = vmax.f32 %v3904, 0.0
        %v4120 = vmax.f32 %v3906, 0.0
        %v4121 = vmax.f32 %v3908, 0.0
        %v4122 = vmax.f32 %v3912, 0.0
        %v4123 = vmax.f32 %v3914, 0.0
        %v4124 = vmax.f32 %v3916, 0.0
        %v4125 = vmax.f32 %v3918, 0.0
        %v4126 = vmax.f32 %v3922, 0.0
        %v4127 = vmax.f32 %v3924, 0.0
        %v4128 = vmax.f32 %v3926, 0.0
        %v4129 = vmax.f32 %v3928, 0.0
        %v4130 = vmax.f32 %v3932, 0.0
        %v4131 = vmax.f32 %v3934, 0.0
        %v4132 = vmax.f32 %v3936, 0.0
        %v4133 = vmax.f32 %v3938, 0.0
        %v4134 = vmax.f32 %v3942, 0.0
        %v4135 = vmax.f32 %v3944, 0.0
        %v4136 = vmax.f32 %v3946, 0.0
        %v4137 = vmax.f32 %v3948, 0.0
        %v4138 = vmax.f32 %v3952, 0.0
        %v4139 = vmax.f32 %v3954, 0.0
        %v4140 = vmax.f32 %v3956, 0.0
        %v4141 = vmax.f32 %v3958, 0.0
        %v4142 = vmax.f32 %v3962, 0.0
        %v4143 = vmax.f32 %v3964, 0.0
        %v4144 = vmax.f32 %v3966, 0.0
        %v4145 = vmax.f32 %v3968, 0.0
        %v4146 = vmax.f32 %v3972, 0.0
        %v4147 = vmax.f32 %v3974, 0.0
        %v4148 = vmax.f32 %v3976, 0.0
        %v4149 = vmax.f32 %v3978, 0.0
        %v4150 = vmax.f32 %v3982, 0.0
        %v4151 = vmax.f32 %v3984, 0.0
        %v4152 = vmax.f32 %v3986, 0.0
        %v4153 = vmax.f32 %v3988, 0.0
        %v4154 = vmax.f32 %v3992, 0.0
        %v4155 = vmax.f32 %v3994, 0.0
        %v4156 = vmax.f32 %v3996, 0.0
        %v4157 = vmax.f32 %v3998, 0.0
        %v4158 = vmax.f32 %v4002, 0.0
        %v4159 = vmax.f32 %v4004, 0.0
        %v4160 = vmax.f32 %v4006, 0.0
        %v4161 = vmax.f32 %v4008, 0.0
        %v4162 = vmax.f32 %v4012, 0.0
        %v4163 = vmax.f32 %v4014, 0.0
        %v4164 = vmax.f32 %v4016, 0.0
        %v4165 = vmax.f32 %v4018, 0.0
        %v4166 = vmax.f32 %v4022, 0.0
        %v4167 = vmax.f32 %v4024, 0.0
        %v4168 = vmax.f32 %v4026, 0.0
        %v4169 = vmax.f32 %v4028, 0.0
        %v4170 = vmax.f32 %v4032, 0.0
        %v4171 = vmax.f32 %v4034, 0.0
        %v4172 = vmax.f32 %v4036, 0.0
        %v4173 = vmax.f32 %v4038, 0.0
        %v4174 = vmax.f32 %v4042, 0.0
        %v4175 = vmax.f32 %v4044, 0.0
        %v4176 = vmax.f32 %v4046, 0.0
        %v4177 = vmax.f32 %v4048, 0.0
        %v4178 = vpack.c.bf16 %v4052, %v4050
        %v4179 = vpack.c.bf16 %v4053, %v4051
        %v4180 = vpack.c.bf16 %v4056, %v4054
        %v4181 = vpack.c.bf16 %v4057, %v4055
        %v4182 = vpack.c.bf16 %v4060, %v4058
        %v4183 = vpack.c.bf16 %v4061, %v4059
        %v4184 = vpack.c.bf16 %v4064, %v4062
        %v4185 = vpack.c.bf16 %v4065, %v4063
        %v4186 = vpack.c.bf16 %v4068, %v4066
        %v4187 = vpack.c.bf16 %v4069, %v4067
        %v4188 = vpack.c.bf16 %v4072, %v4070
        %v4189 = vpack.c.bf16 %v4073, %v4071
        %v4190 = vpack.c.bf16 %v4076, %v4074
        %v4191 = vpack.c.bf16 %v4077, %v4075
        %v4192 = vpack.c.bf16 %v4080, %v4078
        %v4193 = vpack.c.bf16 %v4081, %v4079
        %v4194 = vpack.c.bf16 %v4084, %v4082
        %v4195 = vpack.c.bf16 %v4085, %v4083
        %v4196 = vpack.c.bf16 %v4088, %v4086
        %v4197 = vpack.c.bf16 %v4089, %v4087
        %v4198 = vpack.c.bf16 %v4092, %v4090
        %v4199 = vpack.c.bf16 %v4093, %v4091
        %v4200 = vpack.c.bf16 %v4096, %v4094
        %v4201 = vpack.c.bf16 %v4097, %v4095
        %v4202 = vpack.c.bf16 %v4100, %v4098
        %v4203 = vpack.c.bf16 %v4101, %v4099
        %v4204 = vpack.c.bf16 %v4104, %v4102
        %v4205 = vpack.c.bf16 %v4105, %v4103
        %v4206 = vpack.c.bf16 %v4108, %v4106
        %v4207 = vpack.c.bf16 %v4109, %v4107
        %v4208 = vpack.c.bf16 %v4112, %v4110
        %v4209 = vpack.c.bf16 %v4113, %v4111
        %v4210 = vpack.c.bf16 %v4116, %v4114
        %v4211 = vpack.c.bf16 %v4117, %v4115
        %v4212 = vpack.c.bf16 %v4120, %v4118
        %v4213 = vpack.c.bf16 %v4121, %v4119
        %v4214 = vpack.c.bf16 %v4124, %v4122
        %v4215 = vpack.c.bf16 %v4125, %v4123
        %v4216 = vpack.c.bf16 %v4128, %v4126
        %v4217 = vpack.c.bf16 %v4129, %v4127
        %v4218 = vpack.c.bf16 %v4132, %v4130
        %v4219 = vpack.c.bf16 %v4133, %v4131
        %v4220 = vpack.c.bf16 %v4136, %v4134
        %v4221 = vpack.c.bf16 %v4137, %v4135
        %v4222 = vpack.c.bf16 %v4140, %v4138
        %v4223 = vpack.c.bf16 %v4141, %v4139
        %v4224 = vpack.c.bf16 %v4144, %v4142
        %v4225 = vpack.c.bf16 %v4145, %v4143
        %v4226 = vpack.c.bf16 %v4148, %v4146
        %v4227 = vpack.c.bf16 %v4149, %v4147
        %v4228 = vpack.c.bf16 %v4152, %v4150
        %v4229 = vpack.c.bf16 %v4153, %v4151
        %v4230 = vpack.c.bf16 %v4156, %v4154
        %v4231 = vpack.c.bf16 %v4157, %v4155
        %v4232 = vpack.c.bf16 %v4160, %v4158
        %v4233 = vpack.c.bf16 %v4161, %v4159
        %v4234 = vpack.c.bf16 %v4164, %v4162
        %v4235 = vpack.c.bf16 %v4165, %v4163
        %v4236 = vpack.c.bf16 %v4168, %v4166
        %v4237 = vpack.c.bf16 %v4169, %v4167
        %v4238 = vpack.c.bf16 %v4172, %v4170
        %v4239 = vpack.c.bf16 %v4173, %v4171
        %v4240 = vpack.c.bf16 %v4176, %v4174
        %v4241 = vpack.c.bf16 %v4177, %v4175
        %v4242 = vld [vmem:[#allocation7] sm:$0xff]
        %v4243 = vld [vmem:[#allocation7 + $0x8] sm:$0xff]
        %v4244 = vld [vmem:[#allocation7 + $0x10] sm:$0xff]
        %v4245 = vld [vmem:[#allocation7 + $0x18] sm:$0xff]
        %v4246 = vld [vmem:[#allocation7 + $0x20] sm:$0xff]
        %v4247 = vld [vmem:[#allocation7 + $0x28] sm:$0xff]
        %v4248 = vld [vmem:[#allocation7 + $0x30] sm:$0xff]
        %v4249 = vld [vmem:[#allocation7 + $0x38] sm:$0xff]
        %v4250 = vld [vmem:[#allocation7 + $0x40] sm:$0xff]
        %v4251 = vld [vmem:[#allocation7 + $0x48] sm:$0xff]
        %v4252 = vld [vmem:[#allocation7 + $0x50] sm:$0xff]
        %v4253 = vld [vmem:[#allocation7 + $0x58] sm:$0xff]
        %v4254 = vld [vmem:[#allocation7 + $0x60] sm:$0xff]
        %v4255 = vld [vmem:[#allocation7 + $0x68] sm:$0xff]
        %v4256 = vld [vmem:[#allocation7 + $0x70] sm:$0xff]
        %v4257 = vld [vmem:[#allocation7 + $0x78] sm:$0xff]
        %v4258 = vld [vmem:[#allocation7 + $0x80] sm:$0xff]
        %v4259 = vld [vmem:[#allocation7 + $0x88] sm:$0xff]
        %v4260 = vld [vmem:[#allocation7 + $0x90] sm:$0xff]
        %v4261 = vld [vmem:[#allocation7 + $0x98] sm:$0xff]
        %v4262 = vld [vmem:[#allocation7 + $0xa0] sm:$0xff]
        %v4263 = vld [vmem:[#allocation7 + $0xa8] sm:$0xff]
        %v4264 = vld [vmem:[#allocation7 + $0xb0] sm:$0xff]
        %v4265 = vld [vmem:[#allocation7 + $0xb8] sm:$0xff]
        %v4266 = vld [vmem:[#allocation7 + $0xc0] sm:$0xff]
        %v4267 = vld [vmem:[#allocation7 + $0xc8] sm:$0xff]
        %v4268 = vld [vmem:[#allocation7 + $0xd0] sm:$0xff]
        %v4269 = vld [vmem:[#allocation7 + $0xd8] sm:$0xff]
        %v4270 = vld [vmem:[#allocation7 + $0xe0] sm:$0xff]
        %v4271 = vld [vmem:[#allocation7 + $0xe8] sm:$0xff]
        %v4272 = vld [vmem:[#allocation7 + $0xf0] sm:$0xff]
        %v4273 = vld [vmem:[#allocation7 + $0xf8] sm:$0xff]
        %v4274 = vld [vmem:[#allocation7 + $0x100] sm:$0xff]
        %v4275 = vld [vmem:[#allocation7 + $0x108] sm:$0xff]
        %v4276 = vld [vmem:[#allocation7 + $0x110] sm:$0xff]
        %v4277 = vld [vmem:[#allocation7 + $0x118] sm:$0xff]
        %v4278 = vld [vmem:[#allocation7 + $0x120] sm:$0xff]
        %v4279 = vld [vmem:[#allocation7 + $0x128] sm:$0xff]
        %v4280 = vld [vmem:[#allocation7 + $0x130] sm:$0xff]
        %v4281 = vld [vmem:[#allocation7 + $0x138] sm:$0xff]
        %v4282 = vld [vmem:[#allocation7 + $0x140] sm:$0xff]
        %v4283 = vld [vmem:[#allocation7 + $0x148] sm:$0xff]
        %v4284 = vld [vmem:[#allocation7 + $0x150] sm:$0xff]
        %v4285 = vld [vmem:[#allocation7 + $0x158] sm:$0xff]
        %v4286 = vld [vmem:[#allocation7 + $0x160] sm:$0xff]
        %v4287 = vld [vmem:[#allocation7 + $0x168] sm:$0xff]
        %v4288 = vld [vmem:[#allocation7 + $0x170] sm:$0xff]
        %v4289 = vld [vmem:[#allocation7 + $0x178] sm:$0xff]
        %v4290 = vld [vmem:[#allocation7 + $0x180] sm:$0xff]
        %v4291 = vld [vmem:[#allocation7 + $0x188] sm:$0xff]
        %v4292 = vld [vmem:[#allocation7 + $0x190] sm:$0xff]
        %v4293 = vld [vmem:[#allocation7 + $0x198] sm:$0xff]
        %v4294 = vld [vmem:[#allocation7 + $0x1a0] sm:$0xff]
        %v4295 = vld [vmem:[#allocation7 + $0x1a8] sm:$0xff]
        %v4296 = vld [vmem:[#allocation7 + $0x1b0] sm:$0xff]
        %v4297 = vld [vmem:[#allocation7 + $0x1b8] sm:$0xff]
        %v4298 = vld [vmem:[#allocation7 + $0x1c0] sm:$0xff]
        %v4299 = vld [vmem:[#allocation7 + $0x1c8] sm:$0xff]
        %v4300 = vld [vmem:[#allocation7 + $0x1d0] sm:$0xff]
        %v4301 = vld [vmem:[#allocation7 + $0x1d8] sm:$0xff]
        %v4302 = vld [vmem:[#allocation7 + $0x1e0] sm:$0xff]
        %v4303 = vld [vmem:[#allocation7 + $0x1e8] sm:$0xff]
        %v4304 = vld [vmem:[#allocation7 + $0x1f0] sm:$0xff]
        %v4305 = vld [vmem:[#allocation7 + $0x1f8] sm:$0xff]
        %v4306 = vld [vmem:[%s10] sm:$0xf]
        %v4308 = vlaneseq
        %v4309 = vshrl.u32 %v4308, 7
        %v4310 = vsub.s32 0, %v4309
        %v4311 = vrot.slane %v4306, %v4310
        %v4312 = vlaneseq
        %v4313 = vshrl.u32 %v4312, 7
        %v4314 = vsub.s32 1, %v4313
        %v4315 = vrot.slane %v4306, %v4314
        %v4316 = vlaneseq
        %v4317 = vshrl.u32 %v4316, 7
        %v4318 = vsub.s32 2, %v4317
        %v4319 = vrot.slane %v4306, %v4318
        %v4320 = vlaneseq
        %v4321 = vshrl.u32 %v4320, 7
        %v4322 = vsub.s32 3, %v4321
        %v4323 = vrot.slane %v4306, %v4322
        %v4392 = vunpack.c.l.b16 %v4242
        %v4393 = vunpack.c.h.b16 %v4242
        %v4394 = vunpack.c.l.b16 %v4243
        %v4395 = vunpack.c.h.b16 %v4243
        %v4396 = vunpack.c.l.b16 %v4244
        %v4397 = vunpack.c.h.b16 %v4244
        %v4398 = vunpack.c.l.b16 %v4245
        %v4399 = vunpack.c.h.b16 %v4245
        %v4400 = vunpack.c.l.b16 %v4246
        %v4401 = vunpack.c.h.b16 %v4246
        %v4402 = vunpack.c.l.b16 %v4247
        %v4403 = vunpack.c.h.b16 %v4247
        %v4404 = vunpack.c.l.b16 %v4248
        %v4405 = vunpack.c.h.b16 %v4248
        %v4406 = vunpack.c.l.b16 %v4249
        %v4407 = vunpack.c.h.b16 %v4249
        %v4408 = vunpack.c.l.b16 %v4250
        %v4409 = vunpack.c.h.b16 %v4250
        %v4410 = vunpack.c.l.b16 %v4251
        %v4411 = vunpack.c.h.b16 %v4251
        %v4412 = vunpack.c.l.b16 %v4252
        %v4413 = vunpack.c.h.b16 %v4252
        %v4414 = vunpack.c.l.b16 %v4253
        %v4415 = vunpack.c.h.b16 %v4253
        %v4416 = vunpack.c.l.b16 %v4254
        %v4417 = vunpack.c.h.b16 %v4254
        %v4418 = vunpack.c.l.b16 %v4255
        %v4419 = vunpack.c.h.b16 %v4255
        %v4420 = vunpack.c.l.b16 %v4256
        %v4421 = vunpack.c.h.b16 %v4256
        %v4422 = vunpack.c.l.b16 %v4257
        %v4423 = vunpack.c.h.b16 %v4257
        %v4424 = vunpack.c.l.b16 %v4258
        %v4425 = vunpack.c.h.b16 %v4258
        %v4426 = vunpack.c.l.b16 %v4259
        %v4427 = vunpack.c.h.b16 %v4259
        %v4428 = vunpack.c.l.b16 %v4260
        %v4429 = vunpack.c.h.b16 %v4260
        %v4430 = vunpack.c.l.b16 %v4261
        %v4431 = vunpack.c.h.b16 %v4261
        %v4432 = vunpack.c.l.b16 %v4262
        %v4433 = vunpack.c.h.b16 %v4262
        %v4434 = vunpack.c.l.b16 %v4263
        %v4435 = vunpack.c.h.b16 %v4263
        %v4436 = vunpack.c.l.b16 %v4264
        %v4437 = vunpack.c.h.b16 %v4264
        %v4438 = vunpack.c.l.b16 %v4265
        %v4439 = vunpack.c.h.b16 %v4265
        %v4440 = vunpack.c.l.b16 %v4266
        %v4441 = vunpack.c.h.b16 %v4266
        %v4442 = vunpack.c.l.b16 %v4267
        %v4443 = vunpack.c.h.b16 %v4267
        %v4444 = vunpack.c.l.b16 %v4268
        %v4445 = vunpack.c.h.b16 %v4268
        %v4446 = vunpack.c.l.b16 %v4269
        %v4447 = vunpack.c.h.b16 %v4269
        %v4448 = vunpack.c.l.b16 %v4270
        %v4449 = vunpack.c.h.b16 %v4270
        %v4450 = vunpack.c.l.b16 %v4271
        %v4451 = vunpack.c.h.b16 %v4271
        %v4452 = vunpack.c.l.b16 %v4272
        %v4453 = vunpack.c.h.b16 %v4272
        %v4454 = vunpack.c.l.b16 %v4273
        %v4455 = vunpack.c.h.b16 %v4273
        %v4456 = vunpack.c.l.b16 %v4274
        %v4457 = vunpack.c.h.b16 %v4274
        %v4458 = vunpack.c.l.b16 %v4275
        %v4459 = vunpack.c.h.b16 %v4275
        %v4460 = vunpack.c.l.b16 %v4276
        %v4461 = vunpack.c.h.b16 %v4276
        %v4462 = vunpack.c.l.b16 %v4277
        %v4463 = vunpack.c.h.b16 %v4277
        %v4464 = vunpack.c.l.b16 %v4278
        %v4465 = vunpack.c.h.b16 %v4278
        %v4466 = vunpack.c.l.b16 %v4279
        %v4467 = vunpack.c.h.b16 %v4279
        %v4468 = vunpack.c.l.b16 %v4280
        %v4469 = vunpack.c.h.b16 %v4280
        %v4470 = vunpack.c.l.b16 %v4281
        %v4471 = vunpack.c.h.b16 %v4281
        %v4472 = vunpack.c.l.b16 %v4282
        %v4473 = vunpack.c.h.b16 %v4282
        %v4474 = vunpack.c.l.b16 %v4283
        %v4475 = vunpack.c.h.b16 %v4283
        %v4476 = vunpack.c.l.b16 %v4284
        %v4477 = vunpack.c.h.b16 %v4284
        %v4478 = vunpack.c.l.b16 %v4285
        %v4479 = vunpack.c.h.b16 %v4285
        %v4480 = vunpack.c.l.b16 %v4286
        %v4481 = vunpack.c.h.b16 %v4286
        %v4482 = vunpack.c.l.b16 %v4287
        %v4483 = vunpack.c.h.b16 %v4287
        %v4484 = vunpack.c.l.b16 %v4288
        %v4485 = vunpack.c.h.b16 %v4288
        %v4486 = vunpack.c.l.b16 %v4289
        %v4487 = vunpack.c.h.b16 %v4289
        %v4488 = vunpack.c.l.b16 %v4290
        %v4489 = vunpack.c.h.b16 %v4290
        %v4490 = vunpack.c.l.b16 %v4291
        %v4491 = vunpack.c.h.b16 %v4291
        %v4492 = vunpack.c.l.b16 %v4292
        %v4493 = vunpack.c.h.b16 %v4292
        %v4494 = vunpack.c.l.b16 %v4293
        %v4495 = vunpack.c.h.b16 %v4293
        %v4496 = vunpack.c.l.b16 %v4294
        %v4497 = vunpack.c.h.b16 %v4294
        %v4498 = vunpack.c.l.b16 %v4295
        %v4499 = vunpack.c.h.b16 %v4295
        %v4500 = vunpack.c.l.b16 %v4296
        %v4501 = vunpack.c.h.b16 %v4296
        %v4502 = vunpack.c.l.b16 %v4297
        %v4503 = vunpack.c.h.b16 %v4297
        %v4504 = vunpack.c.l.b16 %v4298
        %v4505 = vunpack.c.h.b16 %v4298
        %v4506 = vunpack.c.l.b16 %v4299
        %v4507 = vunpack.c.h.b16 %v4299
        %v4508 = vunpack.c.l.b16 %v4300
        %v4509 = vunpack.c.h.b16 %v4300
        %v4510 = vunpack.c.l.b16 %v4301
        %v4511 = vunpack.c.h.b16 %v4301
        %v4512 = vunpack.c.l.b16 %v4302
        %v4513 = vunpack.c.h.b16 %v4302
        %v4514 = vunpack.c.l.b16 %v4303
        %v4515 = vunpack.c.h.b16 %v4303
        %v4516 = vunpack.c.l.b16 %v4304
        %v4517 = vunpack.c.h.b16 %v4304
        %v4518 = vunpack.c.l.b16 %v4305
        %v4519 = vunpack.c.h.b16 %v4305
        %v4520 = vpack.c.b16 %v4396, %v4392
        %v4521 = vpack.c.b16 %v4397, %v4393
        %v4522 = vpack.c.b16 %v4398, %v4394
        %v4523 = vpack.c.b16 %v4399, %v4395
        %v4524 = vpack.c.b16 %v4404, %v4400
        %v4525 = vpack.c.b16 %v4405, %v4401
        %v4526 = vpack.c.b16 %v4406, %v4402
        %v4527 = vpack.c.b16 %v4407, %v4403
        %v4528 = vpack.c.b16 %v4412, %v4408
        %v4529 = vpack.c.b16 %v4413, %v4409
        %v4530 = vpack.c.b16 %v4414, %v4410
        %v4531 = vpack.c.b16 %v4415, %v4411
        %v4532 = vpack.c.b16 %v4420, %v4416
        %v4533 = vpack.c.b16 %v4421, %v4417
        %v4534 = vpack.c.b16 %v4422, %v4418
        %v4535 = vpack.c.b16 %v4423, %v4419
        %v4536 = vpack.c.b16 %v4428, %v4424
        %v4537 = vpack.c.b16 %v4429, %v4425
        %v4538 = vpack.c.b16 %v4430, %v4426
        %v4539 = vpack.c.b16 %v4431, %v4427
        %v4540 = vpack.c.b16 %v4436, %v4432
        %v4541 = vpack.c.b16 %v4437, %v4433
        %v4542 = vpack.c.b16 %v4438, %v4434
        %v4543 = vpack.c.b16 %v4439, %v4435
        %v4544 = vpack.c.b16 %v4444, %v4440
        %v4545 = vpack.c.b16 %v4445, %v4441
        %v4546 = vpack.c.b16 %v4446, %v4442
        %v4547 = vpack.c.b16 %v4447, %v4443
        %v4548 = vpack.c.b16 %v4452, %v4448
        %v4549 = vpack.c.b16 %v4453, %v4449
        %v4550 = vpack.c.b16 %v4454, %v4450
        %v4551 = vpack.c.b16 %v4455, %v4451
        %v4552 = vpack.c.b16 %v4460, %v4456
        %v4553 = vpack.c.b16 %v4461, %v4457
        %v4554 = vpack.c.b16 %v4462, %v4458
        %v4555 = vpack.c.b16 %v4463, %v4459
        %v4556 = vpack.c.b16 %v4468, %v4464
        %v4557 = vpack.c.b16 %v4469, %v4465
        %v4558 = vpack.c.b16 %v4470, %v4466
        %v4559 = vpack.c.b16 %v4471, %v4467
        %v4560 = vpack.c.b16 %v4476, %v4472
        %v4561 = vpack.c.b16 %v4477, %v4473
        %v4562 = vpack.c.b16 %v4478, %v4474
        %v4563 = vpack.c.b16 %v4479, %v4475
        %v4564 = vpack.c.b16 %v4484, %v4480
        %v4565 = vpack.c.b16 %v4485, %v4481
        %v4566 = vpack.c.b16 %v4486, %v4482
        %v4567 = vpack.c.b16 %v4487, %v4483
        %v4568 = vpack.c.b16 %v4492, %v4488
        %v4569 = vpack.c.b16 %v4493, %v4489
        %v4570 = vpack.c.b16 %v4494, %v4490
        %v4571 = vpack.c.b16 %v4495, %v4491
        %v4572 = vpack.c.b16 %v4500, %v4496
        %v4573 = vpack.c.b16 %v4501, %v4497
        %v4574 = vpack.c.b16 %v4502, %v4498
        %v4575 = vpack.c.b16 %v4503, %v4499
        %v4576 = vpack.c.b16 %v4508, %v4504
        %v4577 = vpack.c.b16 %v4509, %v4505
        %v4578 = vpack.c.b16 %v4510, %v4506
        %v4579 = vpack.c.b16 %v4511, %v4507
        %v4580 = vpack.c.b16 %v4516, %v4512
        %v4581 = vpack.c.b16 %v4517, %v4513
        %v4582 = vpack.c.b16 %v4518, %v4514
        %v4583 = vpack.c.b16 %v4519, %v4515
        %4648 = vmatprep.subr.bf16.mxu0 %v4549
        %4649 = vmatpush1.bf16.msra.mxu0 %v4548
        %4650 = vmatprep.subr.bf16.mxu0 %v4545
        %4651 = vmatpush1.bf16.msra.mxu0 %v4544
        %4652 = vmatprep.subr.bf16.mxu0 %v4541
        %4653 = vmatpush1.bf16.msra.mxu0 %v4540
        %4654 = vmatprep.subr.bf16.mxu0 %v4537
        %4655 = vmatpush1.bf16.msra.mxu0 %v4536
        %4656 = vmatprep.subr.bf16.mxu0 %v4533
        %4657 = vmatpush1.bf16.msra.mxu0 %v4532
        %4658 = vmatprep.subr.bf16.mxu0 %v4529
        %4659 = vmatpush1.bf16.msra.mxu0 %v4528
        %4660 = vmatprep.subr.bf16.mxu0 %v4525
        %4661 = vmatpush1.bf16.msra.mxu0 %v4524
        %4662 = vmatprep.subr.bf16.mxu0 %v4521
        %4663 = vmatpush1.bf16.msra.mxu0 %v4520
        %4664 = vmatprep.subr.bf16.mxu0 %v4581
        %4665 = vmatpush2.bf16.msra.mxu0 %v4580
        %4666 = vmatprep.subr.bf16.mxu0 %v4577
        %4667 = vmatpush2.bf16.msra.mxu0 %v4576
        %4668 = vmatprep.subr.bf16.mxu0 %v4573
        %4669 = vmatpush2.bf16.msra.mxu0 %v4572
        %4670 = vmatprep.subr.bf16.mxu0 %v4569
        %4671 = vmatpush2.bf16.msra.mxu0 %v4568
        %4672 = vmatprep.subr.bf16.mxu0 %v4565
        %4673 = vmatpush2.bf16.msra.mxu0 %v4564
        %4674 = vmatprep.subr.bf16.mxu0 %v4561
        %4675 = vmatpush2.bf16.msra.mxu0 %v4560
        %4676 = vmatprep.subr.bf16.mxu0 %v4557
        %4677 = vmatpush2.bf16.msra.mxu0 %v4556
        %4678 = vmatprep.subr.bf16.mxu0 %v4553
        %4679 = vmatpush2.bf16.msra.mxu0 %v4552
        %4680 = vmatprep.mubr.bf16.mxu0 %v4179
        %4681 = vmatmul.mubr.bf16.gmra.mxu0 %v4178
        %v4682 = vpop.f32.mrf.mxu0
        %v4683 = vadd.f32 %v4311, %v4682
        %v4684 = vpop.f32.mrf.mxu0
        %v4685 = vadd.f32 %v4315, %v4684
        %v4686 = vpop.f32.mrf.mxu0
        %v4687 = vadd.f32 %v4311, %v4686
        %v4688 = vpop.f32.mrf.mxu0
        %v4689 = vadd.f32 %v4315, %v4688
        %4690 = vmatprep.mubr.bf16.mxu0 %v4181
        %4691 = vmatmul.mubr.bf16.gmra.mxu0 %v4180
        %v4692 = vpop.f32.mrf.mxu0
        %v4693 = vadd.f32 %v4311, %v4692
        %v4694 = vpop.f32.mrf.mxu0
        %v4695 = vadd.f32 %v4315, %v4694
        %v4696 = vpop.f32.mrf.mxu0
        %v4697 = vadd.f32 %v4311, %v4696
        %v4698 = vpop.f32.mrf.mxu0
        %v4699 = vadd.f32 %v4315, %v4698
        %4700 = vmatprep.mubr.bf16.mxu0 %v4183
        %4701 = vmatmul.mubr.bf16.gmra.mxu0 %v4182
        %v4702 = vpop.f32.mrf.mxu0
        %v4703 = vadd.f32 %v4311, %v4702
        %v4704 = vpop.f32.mrf.mxu0
        %v4705 = vadd.f32 %v4315, %v4704
        %v4706 = vpop.f32.mrf.mxu0
        %v4707 = vadd.f32 %v4311, %v4706
        %v4708 = vpop.f32.mrf.mxu0
        %v4709 = vadd.f32 %v4315, %v4708
        %4710 = vmatprep.mubr.bf16.mxu0 %v4185
        %4711 = vmatmul.mubr.bf16.gmra.mxu0 %v4184
        %v4712 = vpop.f32.mrf.mxu0
        %v4713 = vadd.f32 %v4311, %v4712
        %v4714 = vpop.f32.mrf.mxu0
        %v4715 = vadd.f32 %v4315, %v4714
        %v4716 = vpop.f32.mrf.mxu0
        %v4717 = vadd.f32 %v4311, %v4716
        %v4718 = vpop.f32.mrf.mxu0
        %v4719 = vadd.f32 %v4315, %v4718
        %4720 = vmatprep.mubr.bf16.mxu0 %v4187
        %4721 = vmatmul.mubr.bf16.gmra.mxu0 %v4186
        %v4722 = vpop.f32.mrf.mxu0
        %v4723 = vadd.f32 %v4311, %v4722
        %v4724 = vpop.f32.mrf.mxu0
        %v4725 = vadd.f32 %v4315, %v4724
        %v4726 = vpop.f32.mrf.mxu0
        %v4727 = vadd.f32 %v4311, %v4726
        %v4728 = vpop.f32.mrf.mxu0
        %v4729 = vadd.f32 %v4315, %v4728
        %4730 = vmatprep.mubr.bf16.mxu0 %v4189
        %4731 = vmatmul.mubr.bf16.gmra.mxu0 %v4188
        %v4732 = vpop.f32.mrf.mxu0
        %v4733 = vadd.f32 %v4311, %v4732
        %v4734 = vpop.f32.mrf.mxu0
        %v4735 = vadd.f32 %v4315, %v4734
        %v4736 = vpop.f32.mrf.mxu0
        %v4737 = vadd.f32 %v4311, %v4736
        %v4738 = vpop.f32.mrf.mxu0
        %v4739 = vadd.f32 %v4315, %v4738
        %4740 = vmatprep.mubr.bf16.mxu0 %v4191
        %4741 = vmatmul.mubr.bf16.gmra.mxu0 %v4190
        %v4742 = vpop.f32.mrf.mxu0
        %v4743 = vadd.f32 %v4311, %v4742
        %v4744 = vpop.f32.mrf.mxu0
        %v4745 = vadd.f32 %v4315, %v4744
        %v4746 = vpop.f32.mrf.mxu0
        %v4747 = vadd.f32 %v4311, %v4746
        %v4748 = vpop.f32.mrf.mxu0
        %v4749 = vadd.f32 %v4315, %v4748
        %4750 = vmatprep.mubr.bf16.mxu0 %v4193
        %4751 = vmatmul.mubr.bf16.gmra.mxu0 %v4192
        %v4752 = vpop.f32.mrf.mxu0
        %v4753 = vadd.f32 %v4311, %v4752
        %v4754 = vpop.f32.mrf.mxu0
        %v4755 = vadd.f32 %v4315, %v4754
        %v4756 = vpop.f32.mrf.mxu0
        %v4757 = vadd.f32 %v4311, %v4756
        %v4758 = vpop.f32.mrf.mxu0
        %v4759 = vadd.f32 %v4315, %v4758
        %4760 = vmatprep.mubr.bf16.mxu0 %v4195
        %4761 = vmatmul.mubr.bf16.gmra.mxu0 %v4194
        %v4762 = vpop.f32.mrf.mxu0
        %v4763 = vadd.f32 %v4311, %v4762
        %v4764 = vpop.f32.mrf.mxu0
        %v4765 = vadd.f32 %v4315, %v4764
        %v4766 = vpop.f32.mrf.mxu0
        %v4767 = vadd.f32 %v4311, %v4766
        %v4768 = vpop.f32.mrf.mxu0
        %v4769 = vadd.f32 %v4315, %v4768
        %4770 = vmatprep.mubr.bf16.mxu0 %v4197
        %4771 = vmatmul.mubr.bf16.gmra.mxu0 %v4196
        %v4772 = vpop.f32.mrf.mxu0
        %v4773 = vadd.f32 %v4311, %v4772
        %v4774 = vpop.f32.mrf.mxu0
        %v4775 = vadd.f32 %v4315, %v4774
        %v4776 = vpop.f32.mrf.mxu0
        %v4777 = vadd.f32 %v4311, %v4776
        %v4778 = vpop.f32.mrf.mxu0
        %v4779 = vadd.f32 %v4315, %v4778
        %4780 = vmatprep.mubr.bf16.mxu0 %v4199
        %4781 = vmatmul.mubr.bf16.gmra.mxu0 %v4198
        %v4782 = vpop.f32.mrf.mxu0
        %v4783 = vadd.f32 %v4311, %v4782
        %v4784 = vpop.f32.mrf.mxu0
        %v4785 = vadd.f32 %v4315, %v4784
        %v4786 = vpop.f32.mrf.mxu0
        %v4787 = vadd.f32 %v4311, %v4786
        %v4788 = vpop.f32.mrf.mxu0
        %v4789 = vadd.f32 %v4315, %v4788
        %4790 = vmatprep.mubr.bf16.mxu0 %v4201
        %4791 = vmatmul.mubr.bf16.gmra.mxu0 %v4200
        %v4792 = vpop.f32.mrf.mxu0
        %v4793 = vadd.f32 %v4311, %v4792
        %v4794 = vpop.f32.mrf.mxu0
        %v4795 = vadd.f32 %v4315, %v4794
        %v4796 = vpop.f32.mrf.mxu0
        %v4797 = vadd.f32 %v4311, %v4796
        %v4798 = vpop.f32.mrf.mxu0
        %v4799 = vadd.f32 %v4315, %v4798
        %4800 = vmatprep.mubr.bf16.mxu0 %v4203
        %4801 = vmatmul.mubr.bf16.gmra.mxu0 %v4202
        %v4802 = vpop.f32.mrf.mxu0
        %v4803 = vadd.f32 %v4311, %v4802
        %v4804 = vpop.f32.mrf.mxu0
        %v4805 = vadd.f32 %v4315, %v4804
        %v4806 = vpop.f32.mrf.mxu0
        %v4807 = vadd.f32 %v4311, %v4806
        %v4808 = vpop.f32.mrf.mxu0
        %v4809 = vadd.f32 %v4315, %v4808
        %4810 = vmatprep.mubr.bf16.mxu0 %v4205
        %4811 = vmatmul.mubr.bf16.gmra.mxu0 %v4204
        %v4812 = vpop.f32.mrf.mxu0
        %v4813 = vadd.f32 %v4311, %v4812
        %v4814 = vpop.f32.mrf.mxu0
        %v4815 = vadd.f32 %v4315, %v4814
        %v4816 = vpop.f32.mrf.mxu0
        %v4817 = vadd.f32 %v4311, %v4816
        %v4818 = vpop.f32.mrf.mxu0
        %v4819 = vadd.f32 %v4315, %v4818
        %4820 = vmatprep.mubr.bf16.mxu0 %v4207
        %4821 = vmatmul.mubr.bf16.gmra.mxu0 %v4206
        %v4822 = vpop.f32.mrf.mxu0
        %v4823 = vadd.f32 %v4311, %v4822
        %v4824 = vpop.f32.mrf.mxu0
        %v4825 = vadd.f32 %v4315, %v4824
        %v4826 = vpop.f32.mrf.mxu0
        %v4827 = vadd.f32 %v4311, %v4826
        %v4828 = vpop.f32.mrf.mxu0
        %v4829 = vadd.f32 %v4315, %v4828
        %4830 = vmatprep.mubr.bf16.mxu0 %v4209
        %4831 = vmatmul.mubr.bf16.gmra.mxu0 %v4208
        %v4832 = vpop.f32.mrf.mxu0
        %v4833 = vadd.f32 %v4311, %v4832
        %v4834 = vpop.f32.mrf.mxu0
        %v4835 = vadd.f32 %v4315, %v4834
        %v4836 = vpop.f32.mrf.mxu0
        %v4837 = vadd.f32 %v4311, %v4836
        %v4838 = vpop.f32.mrf.mxu0
        %v4839 = vadd.f32 %v4315, %v4838
        %4840 = vmatprep.mubr.bf16.mxu0 %v4211
        %4841 = vmatmul.mubr.bf16.gmra.mxu0 %v4210
        %v4842 = vpop.f32.mrf.mxu0
        %v4843 = vadd.f32 %v4311, %v4842
        %v4844 = vpop.f32.mrf.mxu0
        %v4845 = vadd.f32 %v4315, %v4844
        %v4846 = vpop.f32.mrf.mxu0
        %v4847 = vadd.f32 %v4311, %v4846
        %v4848 = vpop.f32.mrf.mxu0
        %v4849 = vadd.f32 %v4315, %v4848
        %4850 = vmatprep.mubr.bf16.mxu0 %v4213
        %4851 = vmatmul.mubr.bf16.gmra.mxu0 %v4212
        %v4852 = vpop.f32.mrf.mxu0
        %v4853 = vadd.f32 %v4311, %v4852
        %v4854 = vpop.f32.mrf.mxu0
        %v4855 = vadd.f32 %v4315, %v4854
        %v4856 = vpop.f32.mrf.mxu0
        %v4857 = vadd.f32 %v4311, %v4856
        %v4858 = vpop.f32.mrf.mxu0
        %v4859 = vadd.f32 %v4315, %v4858
        %4860 = vmatprep.mubr.bf16.mxu0 %v4215
        %4861 = vmatmul.mubr.bf16.gmra.mxu0 %v4214
        %v4862 = vpop.f32.mrf.mxu0
        %v4863 = vadd.f32 %v4311, %v4862
        %v4864 = vpop.f32.mrf.mxu0
        %v4865 = vadd.f32 %v4315, %v4864
        %v4866 = vpop.f32.mrf.mxu0
        %v4867 = vadd.f32 %v4311, %v4866
        %v4868 = vpop.f32.mrf.mxu0
        %v4869 = vadd.f32 %v4315, %v4868
        %4870 = vmatprep.mubr.bf16.mxu0 %v4217
        %4871 = vmatmul.mubr.bf16.gmra.mxu0 %v4216
        %v4872 = vpop.f32.mrf.mxu0
        %v4873 = vadd.f32 %v4311, %v4872
        %v4874 = vpop.f32.mrf.mxu0
        %v4875 = vadd.f32 %v4315, %v4874
        %v4876 = vpop.f32.mrf.mxu0
        %v4877 = vadd.f32 %v4311, %v4876
        %v4878 = vpop.f32.mrf.mxu0
        %v4879 = vadd.f32 %v4315, %v4878
        %4880 = vmatprep.mubr.bf16.mxu0 %v4219
        %4881 = vmatmul.mubr.bf16.gmra.mxu0 %v4218
        %v4882 = vpop.f32.mrf.mxu0
        %v4883 = vadd.f32 %v4311, %v4882
        %v4884 = vpop.f32.mrf.mxu0
        %v4885 = vadd.f32 %v4315, %v4884
        %v4886 = vpop.f32.mrf.mxu0
        %v4887 = vadd.f32 %v4311, %v4886
        %v4888 = vpop.f32.mrf.mxu0
        %v4889 = vadd.f32 %v4315, %v4888
        %4890 = vmatprep.mubr.bf16.mxu0 %v4221
        %4891 = vmatmul.mubr.bf16.gmra.mxu0 %v4220
        %v4892 = vpop.f32.mrf.mxu0
        %v4893 = vadd.f32 %v4311, %v4892
        %v4894 = vpop.f32.mrf.mxu0
        %v4895 = vadd.f32 %v4315, %v4894
        %v4896 = vpop.f32.mrf.mxu0
        %v4897 = vadd.f32 %v4311, %v4896
        %v4898 = vpop.f32.mrf.mxu0
        %v4899 = vadd.f32 %v4315, %v4898
        %4900 = vmatprep.mubr.bf16.mxu0 %v4223
        %4901 = vmatmul.mubr.bf16.gmra.mxu0 %v4222
        %v4902 = vpop.f32.mrf.mxu0
        %v4903 = vadd.f32 %v4311, %v4902
        %v4904 = vpop.f32.mrf.mxu0
        %v4905 = vadd.f32 %v4315, %v4904
        %v4906 = vpop.f32.mrf.mxu0
        %v4907 = vadd.f32 %v4311, %v4906
        %v4908 = vpop.f32.mrf.mxu0
        %v4909 = vadd.f32 %v4315, %v4908
        %4910 = vmatprep.mubr.bf16.mxu0 %v4225
        %4911 = vmatmul.mubr.bf16.gmra.mxu0 %v4224
        %v4912 = vpop.f32.mrf.mxu0
        %v4913 = vadd.f32 %v4311, %v4912
        %v4914 = vpop.f32.mrf.mxu0
        %v4915 = vadd.f32 %v4315, %v4914
        %v4916 = vpop.f32.mrf.mxu0
        %v4917 = vadd.f32 %v4311, %v4916
        %v4918 = vpop.f32.mrf.mxu0
        %v4919 = vadd.f32 %v4315, %v4918
        %4920 = vmatprep.mubr.bf16.mxu0 %v4227
        %4921 = vmatmul.mubr.bf16.gmra.mxu0 %v4226
        %v4922 = vpop.f32.mrf.mxu0
        %v4923 = vadd.f32 %v4311, %v4922
        %v4924 = vpop.f32.mrf.mxu0
        %v4925 = vadd.f32 %v4315, %v4924
        %v4926 = vpop.f32.mrf.mxu0
        %v4927 = vadd.f32 %v4311, %v4926
        %v4928 = vpop.f32.mrf.mxu0
        %v4929 = vadd.f32 %v4315, %v4928
        %4930 = vmatprep.mubr.bf16.mxu0 %v4229
        %4931 = vmatmul.mubr.bf16.gmra.mxu0 %v4228
        %v4932 = vpop.f32.mrf.mxu0
        %v4933 = vadd.f32 %v4311, %v4932
        %v4934 = vpop.f32.mrf.mxu0
        %v4935 = vadd.f32 %v4315, %v4934
        %v4936 = vpop.f32.mrf.mxu0
        %v4937 = vadd.f32 %v4311, %v4936
        %v4938 = vpop.f32.mrf.mxu0
        %v4939 = vadd.f32 %v4315, %v4938
        %4940 = vmatprep.mubr.bf16.mxu0 %v4231
        %4941 = vmatmul.mubr.bf16.gmra.mxu0 %v4230
        %v4942 = vpop.f32.mrf.mxu0
        %v4943 = vadd.f32 %v4311, %v4942
        %v4944 = vpop.f32.mrf.mxu0
        %v4945 = vadd.f32 %v4315, %v4944
        %v4946 = vpop.f32.mrf.mxu0
        %v4947 = vadd.f32 %v4311, %v4946
        %v4948 = vpop.f32.mrf.mxu0
        %v4949 = vadd.f32 %v4315, %v4948
        %4950 = vmatprep.mubr.bf16.mxu0 %v4233
        %4951 = vmatmul.mubr.bf16.gmra.mxu0 %v4232
        %v4952 = vpop.f32.mrf.mxu0
        %v4953 = vadd.f32 %v4311, %v4952
        %v4954 = vpop.f32.mrf.mxu0
        %v4955 = vadd.f32 %v4315, %v4954
        %v4956 = vpop.f32.mrf.mxu0
        %v4957 = vadd.f32 %v4311, %v4956
        %v4958 = vpop.f32.mrf.mxu0
        %v4959 = vadd.f32 %v4315, %v4958
        %4960 = vmatprep.mubr.bf16.mxu0 %v4235
        %4961 = vmatmul.mubr.bf16.gmra.mxu0 %v4234
        %v4962 = vpop.f32.mrf.mxu0
        %v4963 = vadd.f32 %v4311, %v4962
        %v4964 = vpop.f32.mrf.mxu0
        %v4965 = vadd.f32 %v4315, %v4964
        %v4966 = vpop.f32.mrf.mxu0
        %v4967 = vadd.f32 %v4311, %v4966
        %v4968 = vpop.f32.mrf.mxu0
        %v4969 = vadd.f32 %v4315, %v4968
        %4970 = vmatprep.mubr.bf16.mxu0 %v4237
        %4971 = vmatmul.mubr.bf16.gmra.mxu0 %v4236
        %v4972 = vpop.f32.mrf.mxu0
        %v4973 = vadd.f32 %v4311, %v4972
        %v4974 = vpop.f32.mrf.mxu0
        %v4975 = vadd.f32 %v4315, %v4974
        %v4976 = vpop.f32.mrf.mxu0
        %v4977 = vadd.f32 %v4311, %v4976
        %v4978 = vpop.f32.mrf.mxu0
        %v4979 = vadd.f32 %v4315, %v4978
        %4980 = vmatprep.mubr.bf16.mxu0 %v4239
        %4981 = vmatmul.mubr.bf16.gmra.mxu0 %v4238
        %v4982 = vpop.f32.mrf.mxu0
        %v4983 = vadd.f32 %v4311, %v4982
        %v4984 = vpop.f32.mrf.mxu0
        %v4985 = vadd.f32 %v4315, %v4984
        %v4986 = vpop.f32.mrf.mxu0
        %v4987 = vadd.f32 %v4311, %v4986
        %v4988 = vpop.f32.mrf.mxu0
        %v4989 = vadd.f32 %v4315, %v4988
        %4990 = vmatprep.mubr.bf16.mxu0 %v4241
        %4991 = vmatmul.mubr.bf16.gmra.mxu0 %v4240
        %v4992 = vpop.f32.mrf.mxu0
        %v4993 = vadd.f32 %v4311, %v4992
        %v4994 = vpop.f32.mrf.mxu0
        %v4995 = vadd.f32 %v4315, %v4994
        %v4996 = vpop.f32.mrf.mxu0
        %v4997 = vadd.f32 %v4311, %v4996
        %v4998 = vpop.f32.mrf.mxu0
        %v4999 = vadd.f32 %v4315, %v4998
        %5000 = vdwg.mxu0
        %5001 = vmatprep.subr.bf16.mxu0 %v4551
        %5002 = vmatpush1.bf16.msra.mxu0 %v4550
        %5003 = vmatprep.subr.bf16.mxu0 %v4547
        %5004 = vmatpush1.bf16.msra.mxu0 %v4546
        %5005 = vmatprep.subr.bf16.mxu0 %v4543
        %5006 = vmatpush1.bf16.msra.mxu0 %v4542
        %5007 = vmatprep.subr.bf16.mxu0 %v4539
        %5008 = vmatpush1.bf16.msra.mxu0 %v4538
        %5009 = vmatprep.subr.bf16.mxu0 %v4535
        %5010 = vmatpush1.bf16.msra.mxu0 %v4534
        %5011 = vmatprep.subr.bf16.mxu0 %v4531
        %5012 = vmatpush1.bf16.msra.mxu0 %v4530
        %5013 = vmatprep.subr.bf16.mxu0 %v4527
        %5014 = vmatpush1.bf16.msra.mxu0 %v4526
        %5015 = vmatprep.subr.bf16.mxu0 %v4523
        %5016 = vmatpush1.bf16.msra.mxu0 %v4522
        %5017 = vmatprep.subr.bf16.mxu0 %v4583
        %5018 = vmatpush2.bf16.msra.mxu0 %v4582
        %5019 = vmatprep.subr.bf16.mxu0 %v4579
        %5020 = vmatpush2.bf16.msra.mxu0 %v4578
        %5021 = vmatprep.subr.bf16.mxu0 %v4575
        %5022 = vmatpush2.bf16.msra.mxu0 %v4574
        %5023 = vmatprep.subr.bf16.mxu0 %v4571
        %5024 = vmatpush2.bf16.msra.mxu0 %v4570
        %5025 = vmatprep.subr.bf16.mxu0 %v4567
        %5026 = vmatpush2.bf16.msra.mxu0 %v4566
        %5027 = vmatprep.subr.bf16.mxu0 %v4563
        %5028 = vmatpush2.bf16.msra.mxu0 %v4562
        %5029 = vmatprep.subr.bf16.mxu0 %v4559
        %5030 = vmatpush2.bf16.msra.mxu0 %v4558
        %5031 = vmatprep.subr.bf16.mxu0 %v4555
        %5032 = vmatpush2.bf16.msra.mxu0 %v4554
        %5033 = vmatprep.mubr.bf16.mxu0 %v4179
        %5034 = vmatmul.mubr.bf16.gmra.mxu0 %v4178
        %v5035 = vpop.f32.mrf.mxu0
        %v5036 = vadd.f32 %v4319, %v5035
        %v5037 = vpop.f32.mrf.mxu0
        %v5038 = vadd.f32 %v4323, %v5037
        %v5039 = vpop.f32.mrf.mxu0
        %v5040 = vadd.f32 %v4319, %v5039
        %v5041 = vpop.f32.mrf.mxu0
        %v5042 = vadd.f32 %v4323, %v5041
        %5043 = vmatprep.mubr.bf16.mxu0 %v4181
        %5044 = vmatmul.mubr.bf16.gmra.mxu0 %v4180
        %v5045 = vpop.f32.mrf.mxu0
        %v5046 = vadd.f32 %v4319, %v5045
        %v5047 = vpop.f32.mrf.mxu0
        %v5048 = vadd.f32 %v4323, %v5047
        %v5049 = vpop.f32.mrf.mxu0
        %v5050 = vadd.f32 %v4319, %v5049
        %v5051 = vpop.f32.mrf.mxu0
        %v5052 = vadd.f32 %v4323, %v5051
        %5053 = vmatprep.mubr.bf16.mxu0 %v4183
        %5054 = vmatmul.mubr.bf16.gmra.mxu0 %v4182
        %v5055 = vpop.f32.mrf.mxu0
        %v5056 = vadd.f32 %v4319, %v5055
        %v5057 = vpop.f32.mrf.mxu0
        %v5058 = vadd.f32 %v4323, %v5057
        %v5059 = vpop.f32.mrf.mxu0
        %v5060 = vadd.f32 %v4319, %v5059
        %v5061 = vpop.f32.mrf.mxu0
        %v5062 = vadd.f32 %v4323, %v5061
        %5063 = vmatprep.mubr.bf16.mxu0 %v4185
        %5064 = vmatmul.mubr.bf16.gmra.mxu0 %v4184
        %v5065 = vpop.f32.mrf.mxu0
        %v5066 = vadd.f32 %v4319, %v5065
        %v5067 = vpop.f32.mrf.mxu0
        %v5068 = vadd.f32 %v4323, %v5067
        %v5069 = vpop.f32.mrf.mxu0
        %v5070 = vadd.f32 %v4319, %v5069
        %v5071 = vpop.f32.mrf.mxu0
        %v5072 = vadd.f32 %v4323, %v5071
        %5073 = vmatprep.mubr.bf16.mxu0 %v4187
        %5074 = vmatmul.mubr.bf16.gmra.mxu0 %v4186
        %v5075 = vpop.f32.mrf.mxu0
        %v5076 = vadd.f32 %v4319, %v5075
        %v5077 = vpop.f32.mrf.mxu0
        %v5078 = vadd.f32 %v4323, %v5077
        %v5079 = vpop.f32.mrf.mxu0
        %v5080 = vadd.f32 %v4319, %v5079
        %v5081 = vpop.f32.mrf.mxu0
        %v5082 = vadd.f32 %v4323, %v5081
        %5083 = vmatprep.mubr.bf16.mxu0 %v4189
        %5084 = vmatmul.mubr.bf16.gmra.mxu0 %v4188
        %v5085 = vpop.f32.mrf.mxu0
        %v5086 = vadd.f32 %v4319, %v5085
        %v5087 = vpop.f32.mrf.mxu0
        %v5088 = vadd.f32 %v4323, %v5087
        %v5089 = vpop.f32.mrf.mxu0
        %v5090 = vadd.f32 %v4319, %v5089
        %v5091 = vpop.f32.mrf.mxu0
        %v5092 = vadd.f32 %v4323, %v5091
        %5093 = vmatprep.mubr.bf16.mxu0 %v4191
        %5094 = vmatmul.mubr.bf16.gmra.mxu0 %v4190
        %v5095 = vpop.f32.mrf.mxu0
        %v5096 = vadd.f32 %v4319, %v5095
        %v5097 = vpop.f32.mrf.mxu0
        %v5098 = vadd.f32 %v4323, %v5097
        %v5099 = vpop.f32.mrf.mxu0
        %v5100 = vadd.f32 %v4319, %v5099
        %v5101 = vpop.f32.mrf.mxu0
        %v5102 = vadd.f32 %v4323, %v5101
        %5103 = vmatprep.mubr.bf16.mxu0 %v4193
        %5104 = vmatmul.mubr.bf16.gmra.mxu0 %v4192
        %v5105 = vpop.f32.mrf.mxu0
        %v5106 = vadd.f32 %v4319, %v5105
        %v5107 = vpop.f32.mrf.mxu0
        %v5108 = vadd.f32 %v4323, %v5107
        %v5109 = vpop.f32.mrf.mxu0
        %v5110 = vadd.f32 %v4319, %v5109
        %v5111 = vpop.f32.mrf.mxu0
        %v5112 = vadd.f32 %v4323, %v5111
        %5113 = vmatprep.mubr.bf16.mxu0 %v4195
        %5114 = vmatmul.mubr.bf16.gmra.mxu0 %v4194
        %v5115 = vpop.f32.mrf.mxu0
        %v5116 = vadd.f32 %v4319, %v5115
        %v5117 = vpop.f32.mrf.mxu0
        %v5118 = vadd.f32 %v4323, %v5117
        %v5119 = vpop.f32.mrf.mxu0
        %v5120 = vadd.f32 %v4319, %v5119
        %v5121 = vpop.f32.mrf.mxu0
        %v5122 = vadd.f32 %v4323, %v5121
        %5123 = vmatprep.mubr.bf16.mxu0 %v4197
        %5124 = vmatmul.mubr.bf16.gmra.mxu0 %v4196
        %v5125 = vpop.f32.mrf.mxu0
        %v5126 = vadd.f32 %v4319, %v5125
        %v5127 = vpop.f32.mrf.mxu0
        %v5128 = vadd.f32 %v4323, %v5127
        %v5129 = vpop.f32.mrf.mxu0
        %v5130 = vadd.f32 %v4319, %v5129
        %v5131 = vpop.f32.mrf.mxu0
        %v5132 = vadd.f32 %v4323, %v5131
        %5133 = vmatprep.mubr.bf16.mxu0 %v4199
        %5134 = vmatmul.mubr.bf16.gmra.mxu0 %v4198
        %v5135 = vpop.f32.mrf.mxu0
        %v5136 = vadd.f32 %v4319, %v5135
        %v5137 = vpop.f32.mrf.mxu0
        %v5138 = vadd.f32 %v4323, %v5137
        %v5139 = vpop.f32.mrf.mxu0
        %v5140 = vadd.f32 %v4319, %v5139
        %v5141 = vpop.f32.mrf.mxu0
        %v5142 = vadd.f32 %v4323, %v5141
        %5143 = vmatprep.mubr.bf16.mxu0 %v4201
        %5144 = vmatmul.mubr.bf16.gmra.mxu0 %v4200
        %v5145 = vpop.f32.mrf.mxu0
        %v5146 = vadd.f32 %v4319, %v5145
        %v5147 = vpop.f32.mrf.mxu0
        %v5148 = vadd.f32 %v4323, %v5147
        %v5149 = vpop.f32.mrf.mxu0
        %v5150 = vadd.f32 %v4319, %v5149
        %v5151 = vpop.f32.mrf.mxu0
        %v5152 = vadd.f32 %v4323, %v5151
        %5153 = vmatprep.mubr.bf16.mxu0 %v4203
        %5154 = vmatmul.mubr.bf16.gmra.mxu0 %v4202
        %v5155 = vpop.f32.mrf.mxu0
        %v5156 = vadd.f32 %v4319, %v5155
        %v5157 = vpop.f32.mrf.mxu0
        %v5158 = vadd.f32 %v4323, %v5157
        %v5159 = vpop.f32.mrf.mxu0
        %v5160 = vadd.f32 %v4319, %v5159
        %v5161 = vpop.f32.mrf.mxu0
        %v5162 = vadd.f32 %v4323, %v5161
        %5163 = vmatprep.mubr.bf16.mxu0 %v4205
        %5164 = vmatmul.mubr.bf16.gmra.mxu0 %v4204
        %v5165 = vpop.f32.mrf.mxu0
        %v5166 = vadd.f32 %v4319, %v5165
        %v5167 = vpop.f32.mrf.mxu0
        %v5168 = vadd.f32 %v4323, %v5167
        %v5169 = vpop.f32.mrf.mxu0
        %v5170 = vadd.f32 %v4319, %v5169
        %v5171 = vpop.f32.mrf.mxu0
        %v5172 = vadd.f32 %v4323, %v5171
        %5173 = vmatprep.mubr.bf16.mxu0 %v4207
        %5174 = vmatmul.mubr.bf16.gmra.mxu0 %v4206
        %v5175 = vpop.f32.mrf.mxu0
        %v5176 = vadd.f32 %v4319, %v5175
        %v5177 = vpop.f32.mrf.mxu0
        %v5178 = vadd.f32 %v4323, %v5177
        %v5179 = vpop.f32.mrf.mxu0
        %v5180 = vadd.f32 %v4319, %v5179
        %v5181 = vpop.f32.mrf.mxu0
        %v5182 = vadd.f32 %v4323, %v5181
        %5183 = vmatprep.mubr.bf16.mxu0 %v4209
        %5184 = vmatmul.mubr.bf16.gmra.mxu0 %v4208
        %v5185 = vpop.f32.mrf.mxu0
        %v5186 = vadd.f32 %v4319, %v5185
        %v5187 = vpop.f32.mrf.mxu0
        %v5188 = vadd.f32 %v4323, %v5187
        %v5189 = vpop.f32.mrf.mxu0
        %v5190 = vadd.f32 %v4319, %v5189
        %v5191 = vpop.f32.mrf.mxu0
        %v5192 = vadd.f32 %v4323, %v5191
        %5193 = vmatprep.mubr.bf16.mxu0 %v4211
        %5194 = vmatmul.mubr.bf16.gmra.mxu0 %v4210
        %v5195 = vpop.f32.mrf.mxu0
        %v5196 = vadd.f32 %v4319, %v5195
        %v5197 = vpop.f32.mrf.mxu0
        %v5198 = vadd.f32 %v4323, %v5197
        %v5199 = vpop.f32.mrf.mxu0
        %v5200 = vadd.f32 %v4319, %v5199
        %v5201 = vpop.f32.mrf.mxu0
        %v5202 = vadd.f32 %v4323, %v5201
        %5203 = vmatprep.mubr.bf16.mxu0 %v4213
        %5204 = vmatmul.mubr.bf16.gmra.mxu0 %v4212
        %v5205 = vpop.f32.mrf.mxu0
        %v5206 = vadd.f32 %v4319, %v5205
        %v5207 = vpop.f32.mrf.mxu0
        %v5208 = vadd.f32 %v4323, %v5207
        %v5209 = vpop.f32.mrf.mxu0
        %v5210 = vadd.f32 %v4319, %v5209
        %v5211 = vpop.f32.mrf.mxu0
        %v5212 = vadd.f32 %v4323, %v5211
        %5213 = vmatprep.mubr.bf16.mxu0 %v4215
        %5214 = vmatmul.mubr.bf16.gmra.mxu0 %v4214
        %v5215 = vpop.f32.mrf.mxu0
        %v5216 = vadd.f32 %v4319, %v5215
        %v5217 = vpop.f32.mrf.mxu0
        %v5218 = vadd.f32 %v4323, %v5217
        %v5219 = vpop.f32.mrf.mxu0
        %v5220 = vadd.f32 %v4319, %v5219
        %v5221 = vpop.f32.mrf.mxu0
        %v5222 = vadd.f32 %v4323, %v5221
        %5223 = vmatprep.mubr.bf16.mxu0 %v4217
        %5224 = vmatmul.mubr.bf16.gmra.mxu0 %v4216
        %v5225 = vpop.f32.mrf.mxu0
        %v5226 = vadd.f32 %v4319, %v5225
        %v5227 = vpop.f32.mrf.mxu0
        %v5228 = vadd.f32 %v4323, %v5227
        %v5229 = vpop.f32.mrf.mxu0
        %v5230 = vadd.f32 %v4319, %v5229
        %v5231 = vpop.f32.mrf.mxu0
        %v5232 = vadd.f32 %v4323, %v5231
        %5233 = vmatprep.mubr.bf16.mxu0 %v4219
        %5234 = vmatmul.mubr.bf16.gmra.mxu0 %v4218
        %v5235 = vpop.f32.mrf.mxu0
        %v5236 = vadd.f32 %v4319, %v5235
        %v5237 = vpop.f32.mrf.mxu0
        %v5238 = vadd.f32 %v4323, %v5237
        %v5239 = vpop.f32.mrf.mxu0
        %v5240 = vadd.f32 %v4319, %v5239
        %v5241 = vpop.f32.mrf.mxu0
        %v5242 = vadd.f32 %v4323, %v5241
        %5243 = vmatprep.mubr.bf16.mxu0 %v4221
        %5244 = vmatmul.mubr.bf16.gmra.mxu0 %v4220
        %v5245 = vpop.f32.mrf.mxu0
        %v5246 = vadd.f32 %v4319, %v5245
        %v5247 = vpop.f32.mrf.mxu0
        %v5248 = vadd.f32 %v4323, %v5247
        %v5249 = vpop.f32.mrf.mxu0
        %v5250 = vadd.f32 %v4319, %v5249
        %v5251 = vpop.f32.mrf.mxu0
        %v5252 = vadd.f32 %v4323, %v5251
        %5253 = vmatprep.mubr.bf16.mxu0 %v4223
        %5254 = vmatmul.mubr.bf16.gmra.mxu0 %v4222
        %v5255 = vpop.f32.mrf.mxu0
        %v5256 = vadd.f32 %v4319, %v5255
        %v5257 = vpop.f32.mrf.mxu0
        %v5258 = vadd.f32 %v4323, %v5257
        %v5259 = vpop.f32.mrf.mxu0
        %v5260 = vadd.f32 %v4319, %v5259
        %v5261 = vpop.f32.mrf.mxu0
        %v5262 = vadd.f32 %v4323, %v5261
        %5263 = vmatprep.mubr.bf16.mxu0 %v4225
        %5264 = vmatmul.mubr.bf16.gmra.mxu0 %v4224
        %v5265 = vpop.f32.mrf.mxu0
        %v5266 = vadd.f32 %v4319, %v5265
        %v5267 = vpop.f32.mrf.mxu0
        %v5268 = vadd.f32 %v4323, %v5267
        %v5269 = vpop.f32.mrf.mxu0
        %v5270 = vadd.f32 %v4319, %v5269
        %v5271 = vpop.f32.mrf.mxu0
        %v5272 = vadd.f32 %v4323, %v5271
        %5273 = vmatprep.mubr.bf16.mxu0 %v4227
        %5274 = vmatmul.mubr.bf16.gmra.mxu0 %v4226
        %v5275 = vpop.f32.mrf.mxu0
        %v5276 = vadd.f32 %v4319, %v5275
        %v5277 = vpop.f32.mrf.mxu0
        %v5278 = vadd.f32 %v4323, %v5277
        %v5279 = vpop.f32.mrf.mxu0
        %v5280 = vadd.f32 %v4319, %v5279
        %v5281 = vpop.f32.mrf.mxu0
        %v5282 = vadd.f32 %v4323, %v5281
        %5283 = vmatprep.mubr.bf16.mxu0 %v4229
        %5284 = vmatmul.mubr.bf16.gmra.mxu0 %v4228
        %v5285 = vpop.f32.mrf.mxu0
        %v5286 = vadd.f32 %v4319, %v5285
        %v5287 = vpop.f32.mrf.mxu0
        %v5288 = vadd.f32 %v4323, %v5287
        %v5289 = vpop.f32.mrf.mxu0
        %v5290 = vadd.f32 %v4319, %v5289
        %v5291 = vpop.f32.mrf.mxu0
        %v5292 = vadd.f32 %v4323, %v5291
        %5293 = vmatprep.mubr.bf16.mxu0 %v4231
        %5294 = vmatmul.mubr.bf16.gmra.mxu0 %v4230
        %v5295 = vpop.f32.mrf.mxu0
        %v5296 = vadd.f32 %v4319, %v5295
        %v5297 = vpop.f32.mrf.mxu0
        %v5298 = vadd.f32 %v4323, %v5297
        %v5299 = vpop.f32.mrf.mxu0
        %v5300 = vadd.f32 %v4319, %v5299
        %v5301 = vpop.f32.mrf.mxu0
        %v5302 = vadd.f32 %v4323, %v5301
        %5303 = vmatprep.mubr.bf16.mxu0 %v4233
        %5304 = vmatmul.mubr.bf16.gmra.mxu0 %v4232
        %v5305 = vpop.f32.mrf.mxu0
        %v5306 = vadd.f32 %v4319, %v5305
        %v5307 = vpop.f32.mrf.mxu0
        %v5308 = vadd.f32 %v4323, %v5307
        %v5309 = vpop.f32.mrf.mxu0
        %v5310 = vadd.f32 %v4319, %v5309
        %v5311 = vpop.f32.mrf.mxu0
        %v5312 = vadd.f32 %v4323, %v5311
        %5313 = vmatprep.mubr.bf16.mxu0 %v4235
        %5314 = vmatmul.mubr.bf16.gmra.mxu0 %v4234
        %v5315 = vpop.f32.mrf.mxu0
        %v5316 = vadd.f32 %v4319, %v5315
        %v5317 = vpop.f32.mrf.mxu0
        %v5318 = vadd.f32 %v4323, %v5317
        %v5319 = vpop.f32.mrf.mxu0
        %v5320 = vadd.f32 %v4319, %v5319
        %v5321 = vpop.f32.mrf.mxu0
        %v5322 = vadd.f32 %v4323, %v5321
        %5323 = vmatprep.mubr.bf16.mxu0 %v4237
        %5324 = vmatmul.mubr.bf16.gmra.mxu0 %v4236
        %v5325 = vpop.f32.mrf.mxu0
        %v5326 = vadd.f32 %v4319, %v5325
        %v5327 = vpop.f32.mrf.mxu0
        %v5328 = vadd.f32 %v4323, %v5327
        %v5329 = vpop.f32.mrf.mxu0
        %v5330 = vadd.f32 %v4319, %v5329
        %v5331 = vpop.f32.mrf.mxu0
        %v5332 = vadd.f32 %v4323, %v5331
        %5333 = vmatprep.mubr.bf16.mxu0 %v4239
        %5334 = vmatmul.mubr.bf16.gmra.mxu0 %v4238
        %v5335 = vpop.f32.mrf.mxu0
        %v5336 = vadd.f32 %v4319, %v5335
        %v5337 = vpop.f32.mrf.mxu0
        %v5338 = vadd.f32 %v4323, %v5337
        %v5339 = vpop.f32.mrf.mxu0
        %v5340 = vadd.f32 %v4319, %v5339
        %v5341 = vpop.f32.mrf.mxu0
        %v5342 = vadd.f32 %v4323, %v5341
        %5343 = vmatprep.mubr.bf16.mxu0 %v4241
        %5344 = vmatmul.mubr.bf16.gmra.mxu0 %v4240
        %v5345 = vpop.f32.mrf.mxu0
        %v5346 = vadd.f32 %v4319, %v5345
        %v5347 = vpop.f32.mrf.mxu0
        %v5348 = vadd.f32 %v4323, %v5347
        %v5349 = vpop.f32.mrf.mxu0
        %v5350 = vadd.f32 %v4319, %v5349
        %v5351 = vpop.f32.mrf.mxu0
        %v5352 = vadd.f32 %v4323, %v5351
        %5353 = vdwg.mxu0
        %v5354 = vpack.c.bf16 %v4687, %v4683
        %v5355 = vpack.c.bf16 %v4689, %v4685
        %v5356 = vpack.c.bf16 %v5040, %v5036
        %v5357 = vpack.c.bf16 %v5042, %v5038
        %v5358 = vpack.c.bf16 %v4697, %v4693
        %v5359 = vpack.c.bf16 %v4699, %v4695
        %v5360 = vpack.c.bf16 %v5050, %v5046
        %v5361 = vpack.c.bf16 %v5052, %v5048
        %v5362 = vpack.c.bf16 %v4707, %v4703
        %v5363 = vpack.c.bf16 %v4709, %v4705
        %v5364 = vpack.c.bf16 %v5060, %v5056
        %v5365 = vpack.c.bf16 %v5062, %v5058
        %v5366 = vpack.c.bf16 %v4717, %v4713
        %v5367 = vpack.c.bf16 %v4719, %v4715
        %v5368 = vpack.c.bf16 %v5070, %v5066
        %v5369 = vpack.c.bf16 %v5072, %v5068
        %v5370 = vpack.c.bf16 %v4727, %v4723
        %v5371 = vpack.c.bf16 %v4729, %v4725
        %v5372 = vpack.c.bf16 %v5080, %v5076
        %v5373 = vpack.c.bf16 %v5082, %v5078
        %v5374 = vpack.c.bf16 %v4737, %v4733
        %v5375 = vpack.c.bf16 %v4739, %v4735
        %v5376 = vpack.c.bf16 %v5090, %v5086
        %v5377 = vpack.c.bf16 %v5092, %v5088
        %v5378 = vpack.c.bf16 %v4747, %v4743
        %v5379 = vpack.c.bf16 %v4749, %v4745
        %v5380 = vpack.c.bf16 %v5100, %v5096
        %v5381 = vpack.c.bf16 %v5102, %v5098
        %v5382 = vpack.c.bf16 %v4757, %v4753
        %v5383 = vpack.c.bf16 %v4759, %v4755
        %v5384 = vpack.c.bf16 %v5110, %v5106
        %v5385 = vpack.c.bf16 %v5112, %v5108
        %v5386 = vpack.c.bf16 %v4767, %v4763
        %v5387 = vpack.c.bf16 %v4769, %v4765
        %v5388 = vpack.c.bf16 %v5120, %v5116
        %v5389 = vpack.c.bf16 %v5122, %v5118
        %v5390 = vpack.c.bf16 %v4777, %v4773
        %v5391 = vpack.c.bf16 %v4779, %v4775
        %v5392 = vpack.c.bf16 %v5130, %v5126
        %v5393 = vpack.c.bf16 %v5132, %v5128
        %v5394 = vpack.c.bf16 %v4787, %v4783
        %v5395 = vpack.c.bf16 %v4789, %v4785
        %v5396 = vpack.c.bf16 %v5140, %v5136
        %v5397 = vpack.c.bf16 %v5142, %v5138
        %v5398 = vpack.c.bf16 %v4797, %v4793
        %v5399 = vpack.c.bf16 %v4799, %v4795
        %v5400 = vpack.c.bf16 %v5150, %v5146
        %v5401 = vpack.c.bf16 %v5152, %v5148
        %v5402 = vpack.c.bf16 %v4807, %v4803
        %v5403 = vpack.c.bf16 %v4809, %v4805
        %v5404 = vpack.c.bf16 %v5160, %v5156
        %v5405 = vpack.c.bf16 %v5162, %v5158
        %v5406 = vpack.c.bf16 %v4817, %v4813
        %v5407 = vpack.c.bf16 %v4819, %v4815
        %v5408 = vpack.c.bf16 %v5170, %v5166
        %v5409 = vpack.c.bf16 %v5172, %v5168
        %v5410 = vpack.c.bf16 %v4827, %v4823
        %v5411 = vpack.c.bf16 %v4829, %v4825
        %v5412 = vpack.c.bf16 %v5180, %v5176
        %v5413 = vpack.c.bf16 %v5182, %v5178
        %v5414 = vpack.c.bf16 %v4837, %v4833
        %v5415 = vpack.c.bf16 %v4839, %v4835
        %v5416 = vpack.c.bf16 %v5190, %v5186
        %v5417 = vpack.c.bf16 %v5192, %v5188
        %v5418 = vpack.c.bf16 %v4847, %v4843
        %v5419 = vpack.c.bf16 %v4849, %v4845
        %v5420 = vpack.c.bf16 %v5200, %v5196
        %v5421 = vpack.c.bf16 %v5202, %v5198
        %v5422 = vpack.c.bf16 %v4857, %v4853
        %v5423 = vpack.c.bf16 %v4859, %v4855
        %v5424 = vpack.c.bf16 %v5210, %v5206
        %v5425 = vpack.c.bf16 %v5212, %v5208
        %v5426 = vpack.c.bf16 %v4867, %v4863
        %v5427 = vpack.c.bf16 %v4869, %v4865
        %v5428 = vpack.c.bf16 %v5220, %v5216
        %v5429 = vpack.c.bf16 %v5222, %v5218
        %v5430 = vpack.c.bf16 %v4877, %v4873
        %v5431 = vpack.c.bf16 %v4879, %v4875
        %v5432 = vpack.c.bf16 %v5230, %v5226
        %v5433 = vpack.c.bf16 %v5232, %v5228
        %v5434 = vpack.c.bf16 %v4887, %v4883
        %v5435 = vpack.c.bf16 %v4889, %v4885
        %v5436 = vpack.c.bf16 %v5240, %v5236
        %v5437 = vpack.c.bf16 %v5242, %v5238
        %v5438 = vpack.c.bf16 %v4897, %v4893
        %v5439 = vpack.c.bf16 %v4899, %v4895
        %v5440 = vpack.c.bf16 %v5250, %v5246
        %v5441 = vpack.c.bf16 %v5252, %v5248
        %v5442 = vpack.c.bf16 %v4907, %v4903
        %v5443 = vpack.c.bf16 %v4909, %v4905
        %v5444 = vpack.c.bf16 %v5260, %v5256
        %v5445 = vpack.c.bf16 %v5262, %v5258
        %v5446 = vpack.c.bf16 %v4917, %v4913
        %v5447 = vpack.c.bf16 %v4919, %v4915
        %v5448 = vpack.c.bf16 %v5270, %v5266
        %v5449 = vpack.c.bf16 %v5272, %v5268
        %v5450 = vpack.c.bf16 %v4927, %v4923
        %v5451 = vpack.c.bf16 %v4929, %v4925
        %v5452 = vpack.c.bf16 %v5280, %v5276
        %v5453 = vpack.c.bf16 %v5282, %v5278
        %v5454 = vpack.c.bf16 %v4937, %v4933
        %v5455 = vpack.c.bf16 %v4939, %v4935
        %v5456 = vpack.c.bf16 %v5290, %v5286
        %v5457 = vpack.c.bf16 %v5292, %v5288
        %v5458 = vpack.c.bf16 %v4947, %v4943
        %v5459 = vpack.c.bf16 %v4949, %v4945
        %v5460 = vpack.c.bf16 %v5300, %v5296
        %v5461 = vpack.c.bf16 %v5302, %v5298
        %v5462 = vpack.c.bf16 %v4957, %v4953
        %v5463 = vpack.c.bf16 %v4959, %v4955
        %v5464 = vpack.c.bf16 %v5310, %v5306
        %v5465 = vpack.c.bf16 %v5312, %v5308
        %v5466 = vpack.c.bf16 %v4967, %v4963
        %v5467 = vpack.c.bf16 %v4969, %v4965
        %v5468 = vpack.c.bf16 %v5320, %v5316
        %v5469 = vpack.c.bf16 %v5322, %v5318
        %v5470 = vpack.c.bf16 %v4977, %v4973
        %v5471 = vpack.c.bf16 %v4979, %v4975
        %v5472 = vpack.c.bf16 %v5330, %v5326
        %v5473 = vpack.c.bf16 %v5332, %v5328
        %v5474 = vpack.c.bf16 %v4987, %v4983
        %v5475 = vpack.c.bf16 %v4989, %v4985
        %v5476 = vpack.c.bf16 %v5340, %v5336
        %v5477 = vpack.c.bf16 %v5342, %v5338
        %v5478 = vpack.c.bf16 %v4997, %v4993
        %v5479 = vpack.c.bf16 %v4999, %v4995
        %v5480 = vpack.c.bf16 %v5350, %v5346
        %v5481 = vpack.c.bf16 %v5352, %v5348
        %v5610 = vunpack.c.l.b16 %v5354
        %v5611 = vunpack.c.l.b16 %v5355
        %v5612 = vunpack.c.l.b16 %v5356
        %v5613 = vunpack.c.l.b16 %v5357
        %v5614 = vunpack.c.h.b16 %v5354
        %v5615 = vunpack.c.h.b16 %v5355
        %v5616 = vunpack.c.h.b16 %v5356
        %v5617 = vunpack.c.h.b16 %v5357
        %v5618 = vunpack.c.l.b16 %v5358
        %v5619 = vunpack.c.l.b16 %v5359
        %v5620 = vunpack.c.l.b16 %v5360
        %v5621 = vunpack.c.l.b16 %v5361
        %v5622 = vunpack.c.h.b16 %v5358
        %v5623 = vunpack.c.h.b16 %v5359
        %v5624 = vunpack.c.h.b16 %v5360
        %v5625 = vunpack.c.h.b16 %v5361
        %v5626 = vunpack.c.l.b16 %v5362
        %v5627 = vunpack.c.l.b16 %v5363
        %v5628 = vunpack.c.l.b16 %v5364
        %v5629 = vunpack.c.l.b16 %v5365
        %v5630 = vunpack.c.h.b16 %v5362
        %v5631 = vunpack.c.h.b16 %v5363
        %v5632 = vunpack.c.h.b16 %v5364
        %v5633 = vunpack.c.h.b16 %v5365
        %v5634 = vunpack.c.l.b16 %v5366
        %v5635 = vunpack.c.l.b16 %v5367
        %v5636 = vunpack.c.l.b16 %v5368
        %v5637 = vunpack.c.l.b16 %v5369
        %v5638 = vunpack.c.h.b16 %v5366
        %v5639 = vunpack.c.h.b16 %v5367
        %v5640 = vunpack.c.h.b16 %v5368
        %v5641 = vunpack.c.h.b16 %v5369
        %v5642 = vunpack.c.l.b16 %v5370
        %v5643 = vunpack.c.l.b16 %v5371
        %v5644 = vunpack.c.l.b16 %v5372
        %v5645 = vunpack.c.l.b16 %v5373
        %v5646 = vunpack.c.h.b16 %v5370
        %v5647 = vunpack.c.h.b16 %v5371
        %v5648 = vunpack.c.h.b16 %v5372
        %v5649 = vunpack.c.h.b16 %v5373
        %v5650 = vunpack.c.l.b16 %v5374
        %v5651 = vunpack.c.l.b16 %v5375
        %v5652 = vunpack.c.l.b16 %v5376
        %v5653 = vunpack.c.l.b16 %v5377
        %v5654 = vunpack.c.h.b16 %v5374
        %v5655 = vunpack.c.h.b16 %v5375
        %v5656 = vunpack.c.h.b16 %v5376
        %v5657 = vunpack.c.h.b16 %v5377
        %v5658 = vunpack.c.l.b16 %v5378
        %v5659 = vunpack.c.l.b16 %v5379
        %v5660 = vunpack.c.l.b16 %v5380
        %v5661 = vunpack.c.l.b16 %v5381
        %v5662 = vunpack.c.h.b16 %v5378
        %v5663 = vunpack.c.h.b16 %v5379
        %v5664 = vunpack.c.h.b16 %v5380
        %v5665 = vunpack.c.h.b16 %v5381
        %v5666 = vunpack.c.l.b16 %v5382
        %v5667 = vunpack.c.l.b16 %v5383
        %v5668 = vunpack.c.l.b16 %v5384
        %v5669 = vunpack.c.l.b16 %v5385
        %v5670 = vunpack.c.h.b16 %v5382
        %v5671 = vunpack.c.h.b16 %v5383
        %v5672 = vunpack.c.h.b16 %v5384
        %v5673 = vunpack.c.h.b16 %v5385
        %v5674 = vunpack.c.l.b16 %v5386
        %v5675 = vunpack.c.l.b16 %v5387
        %v5676 = vunpack.c.l.b16 %v5388
        %v5677 = vunpack.c.l.b16 %v5389
        %v5678 = vunpack.c.h.b16 %v5386
        %v5679 = vunpack.c.h.b16 %v5387
        %v5680 = vunpack.c.h.b16 %v5388
        %v5681 = vunpack.c.h.b16 %v5389
        %v5682 = vunpack.c.l.b16 %v5390
        %v5683 = vunpack.c.l.b16 %v5391
        %v5684 = vunpack.c.l.b16 %v5392
        %v5685 = vunpack.c.l.b16 %v5393
        %v5686 = vunpack.c.h.b16 %v5390
        %v5687 = vunpack.c.h.b16 %v5391
        %v5688 = vunpack.c.h.b16 %v5392
        %v5689 = vunpack.c.h.b16 %v5393
        %v5690 = vunpack.c.l.b16 %v5394
        %v5691 = vunpack.c.l.b16 %v5395
        %v5692 = vunpack.c.l.b16 %v5396
        %v5693 = vunpack.c.l.b16 %v5397
        %v5694 = vunpack.c.h.b16 %v5394
        %v5695 = vunpack.c.h.b16 %v5395
        %v5696 = vunpack.c.h.b16 %v5396
        %v5697 = vunpack.c.h.b16 %v5397
        %v5698 = vunpack.c.l.b16 %v5398
        %v5699 = vunpack.c.l.b16 %v5399
        %v5700 = vunpack.c.l.b16 %v5400
        %v5701 = vunpack.c.l.b16 %v5401
        %v5702 = vunpack.c.h.b16 %v5398
        %v5703 = vunpack.c.h.b16 %v5399
        %v5704 = vunpack.c.h.b16 %v5400
        %v5705 = vunpack.c.h.b16 %v5401
        %v5706 = vunpack.c.l.b16 %v5402
        %v5707 = vunpack.c.l.b16 %v5403
        %v5708 = vunpack.c.l.b16 %v5404
        %v5709 = vunpack.c.l.b16 %v5405
        %v5710 = vunpack.c.h.b16 %v5402
        %v5711 = vunpack.c.h.b16 %v5403
        %v5712 = vunpack.c.h.b16 %v5404
        %v5713 = vunpack.c.h.b16 %v5405
        %v5714 = vunpack.c.l.b16 %v5406
        %v5715 = vunpack.c.l.b16 %v5407
        %v5716 = vunpack.c.l.b16 %v5408
        %v5717 = vunpack.c.l.b16 %v5409
        %v5718 = vunpack.c.h.b16 %v5406
        %v5719 = vunpack.c.h.b16 %v5407
        %v5720 = vunpack.c.h.b16 %v5408
        %v5721 = vunpack.c.h.b16 %v5409
        %v5722 = vunpack.c.l.b16 %v5410
        %v5723 = vunpack.c.l.b16 %v5411
        %v5724 = vunpack.c.l.b16 %v5412
        %v5725 = vunpack.c.l.b16 %v5413
        %v5726 = vunpack.c.h.b16 %v5410
        %v5727 = vunpack.c.h.b16 %v5411
        %v5728 = vunpack.c.h.b16 %v5412
        %v5729 = vunpack.c.h.b16 %v5413
        %v5730 = vunpack.c.l.b16 %v5414
        %v5731 = vunpack.c.l.b16 %v5415
        %v5732 = vunpack.c.l.b16 %v5416
        %v5733 = vunpack.c.l.b16 %v5417
        %v5734 = vunpack.c.h.b16 %v5414
        %v5735 = vunpack.c.h.b16 %v5415
        %v5736 = vunpack.c.h.b16 %v5416
        %v5737 = vunpack.c.h.b16 %v5417
        %v5738 = vunpack.c.l.b16 %v5418
        %v5739 = vunpack.c.l.b16 %v5419
        %v5740 = vunpack.c.l.b16 %v5420
        %v5741 = vunpack.c.l.b16 %v5421
        %v5742 = vunpack.c.h.b16 %v5418
        %v5743 = vunpack.c.h.b16 %v5419
        %v5744 = vunpack.c.h.b16 %v5420
        %v5745 = vunpack.c.h.b16 %v5421
        %v5746 = vunpack.c.l.b16 %v5422
        %v5747 = vunpack.c.l.b16 %v5423
        %v5748 = vunpack.c.l.b16 %v5424
        %v5749 = vunpack.c.l.b16 %v5425
        %v5750 = vunpack.c.h.b16 %v5422
        %v5751 = vunpack.c.h.b16 %v5423
        %v5752 = vunpack.c.h.b16 %v5424
        %v5753 = vunpack.c.h.b16 %v5425
        %v5754 = vunpack.c.l.b16 %v5426
        %v5755 = vunpack.c.l.b16 %v5427
        %v5756 = vunpack.c.l.b16 %v5428
        %v5757 = vunpack.c.l.b16 %v5429
        %v5758 = vunpack.c.h.b16 %v5426
        %v5759 = vunpack.c.h.b16 %v5427
        %v5760 = vunpack.c.h.b16 %v5428
        %v5761 = vunpack.c.h.b16 %v5429
        %v5762 = vunpack.c.l.b16 %v5430
        %v5763 = vunpack.c.l.b16 %v5431
        %v5764 = vunpack.c.l.b16 %v5432
        %v5765 = vunpack.c.l.b16 %v5433
        %v5766 = vunpack.c.h.b16 %v5430
        %v5767 = vunpack.c.h.b16 %v5431
        %v5768 = vunpack.c.h.b16 %v5432
        %v5769 = vunpack.c.h.b16 %v5433
        %v5770 = vunpack.c.l.b16 %v5434
        %v5771 = vunpack.c.l.b16 %v5435
        %v5772 = vunpack.c.l.b16 %v5436
        %v5773 = vunpack.c.l.b16 %v5437
        %v5774 = vunpack.c.h.b16 %v5434
        %v5775 = vunpack.c.h.b16 %v5435
        %v5776 = vunpack.c.h.b16 %v5436
        %v5777 = vunpack.c.h.b16 %v5437
        %v5778 = vunpack.c.l.b16 %v5438
        %v5779 = vunpack.c.l.b16 %v5439
        %v5780 = vunpack.c.l.b16 %v5440
        %v5781 = vunpack.c.l.b16 %v5441
        %v5782 = vunpack.c.h.b16 %v5438
        %v5783 = vunpack.c.h.b16 %v5439
        %v5784 = vunpack.c.h.b16 %v5440
        %v5785 = vunpack.c.h.b16 %v5441
        %v5786 = vunpack.c.l.b16 %v5442
        %v5787 = vunpack.c.l.b16 %v5443
        %v5788 = vunpack.c.l.b16 %v5444
        %v5789 = vunpack.c.l.b16 %v5445
        %v5790 = vunpack.c.h.b16 %v5442
        %v5791 = vunpack.c.h.b16 %v5443
        %v5792 = vunpack.c.h.b16 %v5444
        %v5793 = vunpack.c.h.b16 %v5445
        %v5794 = vunpack.c.l.b16 %v5446
        %v5795 = vunpack.c.l.b16 %v5447
        %v5796 = vunpack.c.l.b16 %v5448
        %v5797 = vunpack.c.l.b16 %v5449
        %v5798 = vunpack.c.h.b16 %v5446
        %v5799 = vunpack.c.h.b16 %v5447
        %v5800 = vunpack.c.h.b16 %v5448
        %v5801 = vunpack.c.h.b16 %v5449
        %v5802 = vunpack.c.l.b16 %v5450
        %v5803 = vunpack.c.l.b16 %v5451
        %v5804 = vunpack.c.l.b16 %v5452
        %v5805 = vunpack.c.l.b16 %v5453
        %v5806 = vunpack.c.h.b16 %v5450
        %v5807 = vunpack.c.h.b16 %v5451
        %v5808 = vunpack.c.h.b16 %v5452
        %v5809 = vunpack.c.h.b16 %v5453
        %v5810 = vunpack.c.l.b16 %v5454
        %v5811 = vunpack.c.l.b16 %v5455
        %v5812 = vunpack.c.l.b16 %v5456
        %v5813 = vunpack.c.l.b16 %v5457
        %v5814 = vunpack.c.h.b16 %v5454
        %v5815 = vunpack.c.h.b16 %v5455
        %v5816 = vunpack.c.h.b16 %v5456
        %v5817 = vunpack.c.h.b16 %v5457
        %v5818 = vunpack.c.l.b16 %v5458
        %v5819 = vunpack.c.l.b16 %v5459
        %v5820 = vunpack.c.l.b16 %v5460
        %v5821 = vunpack.c.l.b16 %v5461
        %v5822 = vunpack.c.h.b16 %v5458
        %v5823 = vunpack.c.h.b16 %v5459
        %v5824 = vunpack.c.h.b16 %v5460
        %v5825 = vunpack.c.h.b16 %v5461
        %v5826 = vunpack.c.l.b16 %v5462
        %v5827 = vunpack.c.l.b16 %v5463
        %v5828 = vunpack.c.l.b16 %v5464
        %v5829 = vunpack.c.l.b16 %v5465
        %v5830 = vunpack.c.h.b16 %v5462
        %v5831 = vunpack.c.h.b16 %v5463
        %v5832 = vunpack.c.h.b16 %v5464
        %v5833 = vunpack.c.h.b16 %v5465
        %v5834 = vunpack.c.l.b16 %v5466
        %v5835 = vunpack.c.l.b16 %v5467
        %v5836 = vunpack.c.l.b16 %v5468
        %v5837 = vunpack.c.l.b16 %v5469
        %v5838 = vunpack.c.h.b16 %v5466
        %v5839 = vunpack.c.h.b16 %v5467
        %v5840 = vunpack.c.h.b16 %v5468
        %v5841 = vunpack.c.h.b16 %v5469
        %v5842 = vunpack.c.l.b16 %v5470
        %v5843 = vunpack.c.l.b16 %v5471
        %v5844 = vunpack.c.l.b16 %v5472
        %v5845 = vunpack.c.l.b16 %v5473
        %v5846 = vunpack.c.h.b16 %v5470
        %v5847 = vunpack.c.h.b16 %v5471
        %v5848 = vunpack.c.h.b16 %v5472
        %v5849 = vunpack.c.h.b16 %v5473
        %v5850 = vunpack.c.l.b16 %v5474
        %v5851 = vunpack.c.l.b16 %v5475
        %v5852 = vunpack.c.l.b16 %v5476
        %v5853 = vunpack.c.l.b16 %v5477
        %v5854 = vunpack.c.h.b16 %v5474
        %v5855 = vunpack.c.h.b16 %v5475
        %v5856 = vunpack.c.h.b16 %v5476
        %v5857 = vunpack.c.h.b16 %v5477
        %v5858 = vunpack.c.l.b16 %v5478
        %v5859 = vunpack.c.l.b16 %v5479
        %v5860 = vunpack.c.l.b16 %v5480
        %v5861 = vunpack.c.l.b16 %v5481
        %v5862 = vunpack.c.h.b16 %v5478
        %v5863 = vunpack.c.h.b16 %v5479
        %v5864 = vunpack.c.h.b16 %v5480
        %v5865 = vunpack.c.h.b16 %v5481
        %v5866 = vpack.c.b16 %v5611, %v5610
        %v5867 = vpack.c.b16 %v5613, %v5612
        %v5868 = vpack.c.b16 %v5615, %v5614
        %v5869 = vpack.c.b16 %v5617, %v5616
        %v5870 = vpack.c.b16 %v5619, %v5618
        %v5871 = vpack.c.b16 %v5621, %v5620
        %v5872 = vpack.c.b16 %v5623, %v5622
        %v5873 = vpack.c.b16 %v5625, %v5624
        %v5874 = vpack.c.b16 %v5627, %v5626
        %v5875 = vpack.c.b16 %v5629, %v5628
        %v5876 = vpack.c.b16 %v5631, %v5630
        %v5877 = vpack.c.b16 %v5633, %v5632
        %v5878 = vpack.c.b16 %v5635, %v5634
        %v5879 = vpack.c.b16 %v5637, %v5636
        %v5880 = vpack.c.b16 %v5639, %v5638
        %v5881 = vpack.c.b16 %v5641, %v5640
        %v5882 = vpack.c.b16 %v5643, %v5642
        %v5883 = vpack.c.b16 %v5645, %v5644
        %v5884 = vpack.c.b16 %v5647, %v5646
        %v5885 = vpack.c.b16 %v5649, %v5648
        %v5886 = vpack.c.b16 %v5651, %v5650
        %v5887 = vpack.c.b16 %v5653, %v5652
        %v5888 = vpack.c.b16 %v5655, %v5654
        %v5889 = vpack.c.b16 %v5657, %v5656
        %v5890 = vpack.c.b16 %v5659, %v5658
        %v5891 = vpack.c.b16 %v5661, %v5660
        %v5892 = vpack.c.b16 %v5663, %v5662
        %v5893 = vpack.c.b16 %v5665, %v5664
        %v5894 = vpack.c.b16 %v5667, %v5666
        %v5895 = vpack.c.b16 %v5669, %v5668
        %v5896 = vpack.c.b16 %v5671, %v5670
        %v5897 = vpack.c.b16 %v5673, %v5672
        %v5898 = vpack.c.b16 %v5675, %v5674
        %v5899 = vpack.c.b16 %v5677, %v5676
        %v5900 = vpack.c.b16 %v5679, %v5678
        %v5901 = vpack.c.b16 %v5681, %v5680
        %v5902 = vpack.c.b16 %v5683, %v5682
        %v5903 = vpack.c.b16 %v5685, %v5684
        %v5904 = vpack.c.b16 %v5687, %v5686
        %v5905 = vpack.c.b16 %v5689, %v5688
        %v5906 = vpack.c.b16 %v5691, %v5690
        %v5907 = vpack.c.b16 %v5693, %v5692
        %v5908 = vpack.c.b16 %v5695, %v5694
        %v5909 = vpack.c.b16 %v5697, %v5696
        %v5910 = vpack.c.b16 %v5699, %v5698
        %v5911 = vpack.c.b16 %v5701, %v5700
        %v5912 = vpack.c.b16 %v5703, %v5702
        %v5913 = vpack.c.b16 %v5705, %v5704
        %v5914 = vpack.c.b16 %v5707, %v5706
        %v5915 = vpack.c.b16 %v5709, %v5708
        %v5916 = vpack.c.b16 %v5711, %v5710
        %v5917 = vpack.c.b16 %v5713, %v5712
        %v5918 = vpack.c.b16 %v5715, %v5714
        %v5919 = vpack.c.b16 %v5717, %v5716
        %v5920 = vpack.c.b16 %v5719, %v5718
        %v5921 = vpack.c.b16 %v5721, %v5720
        %v5922 = vpack.c.b16 %v5723, %v5722
        %v5923 = vpack.c.b16 %v5725, %v5724
        %v5924 = vpack.c.b16 %v5727, %v5726
        %v5925 = vpack.c.b16 %v5729, %v5728
        %v5926 = vpack.c.b16 %v5731, %v5730
        %v5927 = vpack.c.b16 %v5733, %v5732
        %v5928 = vpack.c.b16 %v5735, %v5734
        %v5929 = vpack.c.b16 %v5737, %v5736
        %v5930 = vpack.c.b16 %v5739, %v5738
        %v5931 = vpack.c.b16 %v5741, %v5740
        %v5932 = vpack.c.b16 %v5743, %v5742
        %v5933 = vpack.c.b16 %v5745, %v5744
        %v5934 = vpack.c.b16 %v5747, %v5746
        %v5935 = vpack.c.b16 %v5749, %v5748
        %v5936 = vpack.c.b16 %v5751, %v5750
        %v5937 = vpack.c.b16 %v5753, %v5752
        %v5938 = vpack.c.b16 %v5755, %v5754
        %v5939 = vpack.c.b16 %v5757, %v5756
        %v5940 = vpack.c.b16 %v5759, %v5758
        %v5941 = vpack.c.b16 %v5761, %v5760
        %v5942 = vpack.c.b16 %v5763, %v5762
        %v5943 = vpack.c.b16 %v5765, %v5764
        %v5944 = vpack.c.b16 %v5767, %v5766
        %v5945 = vpack.c.b16 %v5769, %v5768
        %v5946 = vpack.c.b16 %v5771, %v5770
        %v5947 = vpack.c.b16 %v5773, %v5772
        %v5948 = vpack.c.b16 %v5775, %v5774
        %v5949 = vpack.c.b16 %v5777, %v5776
        %v5950 = vpack.c.b16 %v5779, %v5778
        %v5951 = vpack.c.b16 %v5781, %v5780
        %v5952 = vpack.c.b16 %v5783, %v5782
        %v5953 = vpack.c.b16 %v5785, %v5784
        %v5954 = vpack.c.b16 %v5787, %v5786
        %v5955 = vpack.c.b16 %v5789, %v5788
        %v5956 = vpack.c.b16 %v5791, %v5790
        %v5957 = vpack.c.b16 %v5793, %v5792
        %v5958 = vpack.c.b16 %v5795, %v5794
        %v5959 = vpack.c.b16 %v5797, %v5796
        %v5960 = vpack.c.b16 %v5799, %v5798
        %v5961 = vpack.c.b16 %v5801, %v5800
        %v5962 = vpack.c.b16 %v5803, %v5802
        %v5963 = vpack.c.b16 %v5805, %v5804
        %v5964 = vpack.c.b16 %v5807, %v5806
        %v5965 = vpack.c.b16 %v5809, %v5808
        %v5966 = vpack.c.b16 %v5811, %v5810
        %v5967 = vpack.c.b16 %v5813, %v5812
        %v5968 = vpack.c.b16 %v5815, %v5814
        %v5969 = vpack.c.b16 %v5817, %v5816
        %v5970 = vpack.c.b16 %v5819, %v5818
        %v5971 = vpack.c.b16 %v5821, %v5820
        %v5972 = vpack.c.b16 %v5823, %v5822
        %v5973 = vpack.c.b16 %v5825, %v5824
        %v5974 = vpack.c.b16 %v5827, %v5826
        %v5975 = vpack.c.b16 %v5829, %v5828
        %v5976 = vpack.c.b16 %v5831, %v5830
        %v5977 = vpack.c.b16 %v5833, %v5832
        %v5978 = vpack.c.b16 %v5835, %v5834
        %v5979 = vpack.c.b16 %v5837, %v5836
        %v5980 = vpack.c.b16 %v5839, %v5838
        %v5981 = vpack.c.b16 %v5841, %v5840
        %v5982 = vpack.c.b16 %v5843, %v5842
        %v5983 = vpack.c.b16 %v5845, %v5844
        %v5984 = vpack.c.b16 %v5847, %v5846
        %v5985 = vpack.c.b16 %v5849, %v5848
        %v5986 = vpack.c.b16 %v5851, %v5850
        %v5987 = vpack.c.b16 %v5853, %v5852
        %v5988 = vpack.c.b16 %v5855, %v5854
        %v5989 = vpack.c.b16 %v5857, %v5856
        %v5990 = vpack.c.b16 %v5859, %v5858
        %v5991 = vpack.c.b16 %v5861, %v5860
        %v5992 = vpack.c.b16 %v5863, %v5862
        %v5993 = vpack.c.b16 %v5865, %v5864
        %6122 = vst [vmem:[%s434] sm:$0xff] %v5866
        %6123 = vst [vmem:[%s434 + $0x8] sm:$0xff] %v5867
        %6124 = vst [vmem:[%s434 + $0x10] sm:$0xff] %v5868
        %6125 = vst [vmem:[%s434 + $0x18] sm:$0xff] %v5869
        %6126 = vst [vmem:[%s434 + $0x20] sm:$0xff] %v5870
        %6127 = vst [vmem:[%s434 + $0x28] sm:$0xff] %v5871
        %6128 = vst [vmem:[%s434 + $0x30] sm:$0xff] %v5872
        %6129 = vst [vmem:[%s434 + $0x38] sm:$0xff] %v5873
        %6130 = vst [vmem:[%s434 + $0x40] sm:$0xff] %v5874
        %6131 = vst [vmem:[%s434 + $0x48] sm:$0xff] %v5875
        %6132 = vst [vmem:[%s434 + $0x50] sm:$0xff] %v5876
        %6133 = vst [vmem:[%s434 + $0x58] sm:$0xff] %v5877
        %6134 = vst [vmem:[%s434 + $0x60] sm:$0xff] %v5878
        %6135 = vst [vmem:[%s434 + $0x68] sm:$0xff] %v5879
        %6136 = vst [vmem:[%s434 + $0x70] sm:$0xff] %v5880
        %6137 = vst [vmem:[%s434 + $0x78] sm:$0xff] %v5881
        %6138 = vst [vmem:[%s434 + $0x80] sm:$0xff] %v5882
        %6139 = vst [vmem:[%s434 + $0x88] sm:$0xff] %v5883
        %6140 = vst [vmem:[%s434 + $0x90] sm:$0xff] %v5884
        %6141 = vst [vmem:[%s434 + $0x98] sm:$0xff] %v5885
        %6142 = vst [vmem:[%s434 + $0xa0] sm:$0xff] %v5886
        %6143 = vst [vmem:[%s434 + $0xa8] sm:$0xff] %v5887
        %6144 = vst [vmem:[%s434 + $0xb0] sm:$0xff] %v5888
        %6145 = vst [vmem:[%s434 + $0xb8] sm:$0xff] %v5889
        %6146 = vst [vmem:[%s434 + $0xc0] sm:$0xff] %v5890
        %6147 = vst [vmem:[%s434 + $0xc8] sm:$0xff] %v5891
        %6148 = vst [vmem:[%s434 + $0xd0] sm:$0xff] %v5892
        %6149 = vst [vmem:[%s434 + $0xd8] sm:$0xff] %v5893
        %6150 = vst [vmem:[%s434 + $0xe0] sm:$0xff] %v5894
        %6151 = vst [vmem:[%s434 + $0xe8] sm:$0xff] %v5895
        %6152 = vst [vmem:[%s434 + $0xf0] sm:$0xff] %v5896
        %6153 = vst [vmem:[%s434 + $0xf8] sm:$0xff] %v5897
        %6154 = vst [vmem:[%s434 + $0x100] sm:$0xff] %v5898
        %6155 = vst [vmem:[%s434 + $0x108] sm:$0xff] %v5899
        %6156 = vst [vmem:[%s434 + $0x110] sm:$0xff] %v5900
        %6157 = vst [vmem:[%s434 + $0x118] sm:$0xff] %v5901
        %6158 = vst [vmem:[%s434 + $0x120] sm:$0xff] %v5902
        %6159 = vst [vmem:[%s434 + $0x128] sm:$0xff] %v5903
        %6160 = vst [vmem:[%s434 + $0x130] sm:$0xff] %v5904
        %6161 = vst [vmem:[%s434 + $0x138] sm:$0xff] %v5905
        %6162 = vst [vmem:[%s434 + $0x140] sm:$0xff] %v5906
        %6163 = vst [vmem:[%s434 + $0x148] sm:$0xff] %v5907
        %6164 = vst [vmem:[%s434 + $0x150] sm:$0xff] %v5908
        %6165 = vst [vmem:[%s434 + $0x158] sm:$0xff] %v5909
        %6166 = vst [vmem:[%s434 + $0x160] sm:$0xff] %v5910
        %6167 = vst [vmem:[%s434 + $0x168] sm:$0xff] %v5911
        %6168 = vst [vmem:[%s434 + $0x170] sm:$0xff] %v5912
        %6169 = vst [vmem:[%s434 + $0x178] sm:$0xff] %v5913
        %6170 = vst [vmem:[%s434 + $0x180] sm:$0xff] %v5914
        %6171 = vst [vmem:[%s434 + $0x188] sm:$0xff] %v5915
        %6172 = vst [vmem:[%s434 + $0x190] sm:$0xff] %v5916
        %6173 = vst [vmem:[%s434 + $0x198] sm:$0xff] %v5917
        %6174 = vst [vmem:[%s434 + $0x1a0] sm:$0xff] %v5918
        %6175 = vst [vmem:[%s434 + $0x1a8] sm:$0xff] %v5919
        %6176 = vst [vmem:[%s434 + $0x1b0] sm:$0xff] %v5920
        %6177 = vst [vmem:[%s434 + $0x1b8] sm:$0xff] %v5921
        %6178 = vst [vmem:[%s434 + $0x1c0] sm:$0xff] %v5922
        %6179 = vst [vmem:[%s434 + $0x1c8] sm:$0xff] %v5923
        %6180 = vst [vmem:[%s434 + $0x1d0] sm:$0xff] %v5924
        %6181 = vst [vmem:[%s434 + $0x1d8] sm:$0xff] %v5925
        %6182 = vst [vmem:[%s434 + $0x1e0] sm:$0xff] %v5926
        %6183 = vst [vmem:[%s434 + $0x1e8] sm:$0xff] %v5927
        %6184 = vst [vmem:[%s434 + $0x1f0] sm:$0xff] %v5928
        %6185 = vst [vmem:[%s434 + $0x1f8] sm:$0xff] %v5929
        %6186 = vst [vmem:[%s434 + $0x200] sm:$0xff] %v5930
        %6187 = vst [vmem:[%s434 + $0x208] sm:$0xff] %v5931
        %6188 = vst [vmem:[%s434 + $0x210] sm:$0xff] %v5932
        %6189 = vst [vmem:[%s434 + $0x218] sm:$0xff] %v5933
        %6190 = vst [vmem:[%s434 + $0x220] sm:$0xff] %v5934
        %6191 = vst [vmem:[%s434 + $0x228] sm:$0xff] %v5935
        %6192 = vst [vmem:[%s434 + $0x230] sm:$0xff] %v5936
        %6193 = vst [vmem:[%s434 + $0x238] sm:$0xff] %v5937
        %6194 = vst [vmem:[%s434 + $0x240] sm:$0xff] %v5938
        %6195 = vst [vmem:[%s434 + $0x248] sm:$0xff] %v5939
        %6196 = vst [vmem:[%s434 + $0x250] sm:$0xff] %v5940
        %6197 = vst [vmem:[%s434 + $0x258] sm:$0xff] %v5941
        %6198 = vst [vmem:[%s434 + $0x260] sm:$0xff] %v5942
        %6199 = vst [vmem:[%s434 + $0x268] sm:$0xff] %v5943
        %6200 = vst [vmem:[%s434 + $0x270] sm:$0xff] %v5944
        %6201 = vst [vmem:[%s434 + $0x278] sm:$0xff] %v5945
        %6202 = vst [vmem:[%s434 + $0x280] sm:$0xff] %v5946
        %6203 = vst [vmem:[%s434 + $0x288] sm:$0xff] %v5947
        %6204 = vst [vmem:[%s434 + $0x290] sm:$0xff] %v5948
        %6205 = vst [vmem:[%s434 + $0x298] sm:$0xff] %v5949
        %6206 = vst [vmem:[%s434 + $0x2a0] sm:$0xff] %v5950
        %6207 = vst [vmem:[%s434 + $0x2a8] sm:$0xff] %v5951
        %6208 = vst [vmem:[%s434 + $0x2b0] sm:$0xff] %v5952
        %6209 = vst [vmem:[%s434 + $0x2b8] sm:$0xff] %v5953
        %6210 = vst [vmem:[%s434 + $0x2c0] sm:$0xff] %v5954
        %6211 = vst [vmem:[%s434 + $0x2c8] sm:$0xff] %v5955
        %6212 = vst [vmem:[%s434 + $0x2d0] sm:$0xff] %v5956
        %6213 = vst [vmem:[%s434 + $0x2d8] sm:$0xff] %v5957
        %6214 = vst [vmem:[%s434 + $0x2e0] sm:$0xff] %v5958
        %6215 = vst [vmem:[%s434 + $0x2e8] sm:$0xff] %v5959
        %6216 = vst [vmem:[%s434 + $0x2f0] sm:$0xff] %v5960
        %6217 = vst [vmem:[%s434 + $0x2f8] sm:$0xff] %v5961
        %6218 = vst [vmem:[%s434 + $0x300] sm:$0xff] %v5962
        %6219 = vst [vmem:[%s434 + $0x308] sm:$0xff] %v5963
        %6220 = vst [vmem:[%s434 + $0x310] sm:$0xff] %v5964
        %6221 = vst [vmem:[%s434 + $0x318] sm:$0xff] %v5965
        %6222 = vst [vmem:[%s434 + $0x320] sm:$0xff] %v5966
        %6223 = vst [vmem:[%s434 + $0x328] sm:$0xff] %v5967
        %6224 = vst [vmem:[%s434 + $0x330] sm:$0xff] %v5968
        %6225 = vst [vmem:[%s434 + $0x338] sm:$0xff] %v5969
        %6226 = vst [vmem:[%s434 + $0x340] sm:$0xff] %v5970
        %6227 = vst [vmem:[%s434 + $0x348] sm:$0xff] %v5971
        %6228 = vst [vmem:[%s434 + $0x350] sm:$0xff] %v5972
        %6229 = vst [vmem:[%s434 + $0x358] sm:$0xff] %v5973
        %6230 = vst [vmem:[%s434 + $0x360] sm:$0xff] %v5974
        %6231 = vst [vmem:[%s434 + $0x368] sm:$0xff] %v5975
        %6232 = vst [vmem:[%s434 + $0x370] sm:$0xff] %v5976
        %6233 = vst [vmem:[%s434 + $0x378] sm:$0xff] %v5977
        %6234 = vst [vmem:[%s434 + $0x380] sm:$0xff] %v5978
        %6235 = vst [vmem:[%s434 + $0x388] sm:$0xff] %v5979
        %6236 = vst [vmem:[%s434 + $0x390] sm:$0xff] %v5980
        %6237 = vst [vmem:[%s434 + $0x398] sm:$0xff] %v5981
        %6238 = vst [vmem:[%s434 + $0x3a0] sm:$0xff] %v5982
        %6239 = vst [vmem:[%s434 + $0x3a8] sm:$0xff] %v5983
        %6240 = vst [vmem:[%s434 + $0x3b0] sm:$0xff] %v5984
        %6241 = vst [vmem:[%s434 + $0x3b8] sm:$0xff] %v5985
        %6242 = vst [vmem:[%s434 + $0x3c0] sm:$0xff] %v5986
        %6243 = vst [vmem:[%s434 + $0x3c8] sm:$0xff] %v5987
        %6244 = vst [vmem:[%s434 + $0x3d0] sm:$0xff] %v5988
        %6245 = vst [vmem:[%s434 + $0x3d8] sm:$0xff] %v5989
        %6246 = vst [vmem:[%s434 + $0x3e0] sm:$0xff] %v5990
        %6247 = vst [vmem:[%s434 + $0x3e8] sm:$0xff] %v5991
        %6248 = vst [vmem:[%s434 + $0x3f0] sm:$0xff] %v5992
        %6249 = vst [vmem:[%s434 + $0x3f8] sm:$0xff] %v5993
        %s6250 = sand.u32 %s273, 1
        %s6251 = scalar_lea.sflag [#allocation4], %s6250
        %s6252 = sand.u32 %s273, 1
        %s6253 = smul.addr %s6252, 1024
        %s6254 = scalar_lea.vmem [#allocation8], %s6253
        // Predicated region
        $region77: #{autoencoder_forward.1} parent=63 // pred_check
          %p6255 = pneg %p283
        $region78: #{autoencoder_forward.1} parent=63 // pred_check_branch
          %6257 = sbr.rel (%p6255) target = $region80
        $region79: #{autoencoder_forward.1} parent=63 // pred_region
          %s6258 = smul.u32 64, %s29
          %s6260 = ssub.s32 16384, 16384
          %6261 = vsyncadd %s6251, %s6260
          %s6262 = smul.addr %s6258, 4
          %s6263 = smul.addr %s6262, 64
          %s6264 = scalar_lea.hbm %s11, %s6263
          %s6265 = sshll.u32 %s6254, 4
          %s6266 = int_to_ptr.vmem [resolvable:$true] %s6265
          %6271 = dma.vmem_to_hbm [thread:$0]  %s6266, 16384, %s6264, %s6251, 256, 256, 16
        $region80: #{autoencoder_forward.1} parent=63 // pred_fallthru
          _
      $region64: #{autoencoder_forward.1} parent=5 // pred_fallthru
        _
      %p6272 = scmp.le.s32.totalorder 2, %s24
      // Predicated region
      $region81: #{autoencoder_forward.1} parent=5 // pred_check
        %p6273 = pneg %p6272
      $region82: #{autoencoder_forward.1} parent=5 // pred_check_branch
        %6275 = sbr.rel (%p6273) target = $region84
      $region83: #{autoencoder_forward.1} parent=5 // pred_region
        %s6276 = ssub.s32 %s24, 2
        // Predicated region
        $region85: #{autoencoder_forward.1} parent=83 // pred_check
          %p6277 = pneg %p289
        $region86: #{autoencoder_forward.1} parent=83 // pred_check_branch
          %6279 = sbr.rel (%p6277) target = $region88
        $region87: #{autoencoder_forward.1} parent=83 // pred_region
          %s6280 = sand.u32 %s274, 1
          %s6281 = scalar_lea.sflag [#allocation4], %s6280
          %s6282 = sand.u32 %s274, 1
          %s6283 = smul.addr %s6282, 1024
          %s6284 = scalar_lea.vmem [#allocation8], %s6283
          %6285 = dma.done %s6281, 16384
        $region88: #{autoencoder_forward.1} parent=83 // pred_fallthru
          _
      $region84: #{autoencoder_forward.1} parent=5 // pred_fallthru
        _
    $region6: #{autoencoder_forward.1} parent=1 // loop_footer
      %s28 = sadd.s32 1, %s24
    $region7: #{autoencoder_forward.1} parent=1 // loop_footer_branch
      %23 = sbr.rel target = $region3
    $region8: #{autoencoder_forward.1} parent=1 // loop_exit
      _
    %6286 = vsyncpa [#allocation3], 1
    %s6287 = scalar_lea.sflag [#allocation3], 1
    %6288 = vsyncpa %s6287, 1
    %6289 = vsyncpa [#allocation6], 1
    %6290 = vsyncpa [#allocation4], 1
    %s6291 = scalar_lea.sflag [#allocation4], 1
    %6292 = vsyncpa %s6291, 1

</llo_original>
